<compile_context>
chip_gen: v5e
topology: v5e:2x2
jax: 0.10.0
libtpu: 0.0.40
codegen_flags: <defaults>
</compile_context>

<pallas_src>
import functools

import jax
import jax.numpy as jnp
from jax.experimental import pallas as pl
from jax.experimental.pallas import tpu as pltpu

EPS = 1e-5
COMPUTE_DTYPE = jnp.bfloat16


# ----------------------------- in-kernel helpers -----------------------------

def _layernorm(x, g, b):
    mean = jnp.mean(x, axis=-1, keepdims=True)
    var = jnp.mean(jnp.square(x - mean), axis=-1, keepdims=True)
    return (x - mean) * jax.lax.rsqrt(var + EPS) * g + b


def _add_layernorm(x, res, g, b):
    """residual add + LayerNorm, all in f32."""
    return _layernorm(x + res, g, b)


def _softmax_lastdim(s):
    s = s - jnp.max(s, axis=-1, keepdims=True)
    p = jnp.exp(s)
    # EUP reciprocal instead of a VPU divide over the whole (T, S) tile.
    return p * pl.reciprocal(jnp.sum(p, axis=-1, keepdims=True), approx=True)


def _attention_into(buf_ref, q, k, v, nhead):
    """Per-head softmax(q_h k_h^T) v_h written into the lane slices of buf_ref.

    q: (T, D) f32 (1/sqrt(head_dim) already folded into the Q weights),
    k, v: (S, D) f32.  K is transposed ONCE per attention block so each head's
    score matmul reads a sublane slice of kT (no per-head lane-extract + XLU
    transpose).  Heads are stored straight into a (T, D) VMEM scratch, so the
    output projection afterwards is a single K=D MXU matmul and no per-head
    temporaries stay live across loop iterations (low vreg pressure).
    """
    _, D = q.shape
    hd = D // nhead
    qb = q.astype(COMPUTE_DTYPE)
    kT = k.astype(COMPUTE_DTYPE).T            # (D, S): one transpose per block
    vb = v.astype(COMPUTE_DTYPE)
    for h in range(nhead):                    # static unroll
        sl = slice(h * hd, (h + 1) * hd)
        s = jnp.dot(qb[:, sl], kT[sl, :], preferred_element_type=jnp.float32)
        p = _softmax_lastdim(s)
        buf_ref[:, sl] = jnp.dot(p.astype(COMPUTE_DTYPE), vb[:, sl],
                                 preferred_element_type=jnp.float32
                                 ).astype(buf_ref.dtype)


# --------------------------- fused decoder kernel -----------------------------

def _decoder_kernel(
        x_ref, memk_ref, memv_ref,
        wqkv_ref, bqkv_ref, wo_sa_ref, bo_sa_ref,
        wq_ca_ref, bq_ca_ref, wk_ca_ref, bk_ca_ref,
        wv_ca_ref, bv_ca_ref, wo_ca_ref, bo_ca_ref,
        w1_ref, bf1_ref, w2_ref, bf2_ref,
        g1_ref, be1_ref, g2_ref, be2_ref, g3_ref, be3_ref,
        gf_ref, bfin_ref,
        o_ref,
        x_carry, attn_buf,
        *, nhead, apply_final_norm):
    # TODO(synk): exact TransformerDecoderLayer source from pix2pix/models/vit/tran.py
    # was not provided; a DETR-style post-norm layer is assumed (pos added to the
    # cross-attention keys only, dropout == identity in eval, w/h only describe
    # memory's spatial grid and do not enter the math).
    layer = pl.program_id(1)
    n_layers = pl.num_programs(1)
    D = x_ref.shape[2]

    @pl.when(layer == 0)                      # new batch row: load fresh target
    def _():
        x_carry[...] = x_ref[0].astype(jnp.float32)

    x = x_carry[...]                          # (T, D) f32 residual stream
    xb = x.astype(COMPUTE_DTYPE)

    # ---- self-attention (fused QKV projection, scale pre-folded into Wq) ----
    qkv = jnp.dot(xb, wqkv_ref[0], preferred_element_type=jnp.float32) + bqkv_ref[0]
    _attention_into(attn_buf, qkv[:, :D], qkv[:, D:2 * D], qkv[:, 2 * D:], nhead)
    sa = jnp.dot(attn_buf[...], wo_sa_ref[0],
                 preferred_element_type=jnp.float32) + bo_sa_ref[0]
    x1 = _add_layernorm(x, sa, g1_ref[0], be1_ref[0])

    # ---- cross-attention (keys carry the positional encoding) ----
    memk = memk_ref[0]                        # (S, D) bf16 = memory + pos
    memv = memv_ref[0]                        # (S, D) bf16 = memory
    qc = jnp.dot(x1.astype(COMPUTE_DTYPE), wq_ca_ref[0],
                 preferred_element_type=jnp.float32) + bq_ca_ref[0]
    kc = jnp.dot(memk, wk_ca_ref[0],
                 preferred_element_type=jnp.float32) + bk_ca_ref[0]
    vc = jnp.dot(memv, wv_ca_ref[0],
                 preferred_element_type=jnp.float32) + bv_ca_ref[0]
    _attention_into(attn_buf, qc, kc, vc, nhead)
    ca = jnp.dot(attn_buf[...], wo_ca_ref[0],
                 preferred_element_type=jnp.float32) + bo_ca_ref[0]
    x2 = _add_layernorm(x1, ca, g2_ref[0], be2_ref[0])

    # ---- feed-forward (ReLU) ----
    hdn = jnp.maximum(jnp.dot(x2.astype(COMPUTE_DTYPE), w1_ref[0],
                              preferred_element_type=jnp.float32) + bf1_ref[0], 0.0)
    ff = jnp.dot(hdn.astype(COMPUTE_DTYPE), w2_ref[0],
                 preferred_element_type=jnp.float32) + bf2_ref[0]
    x3 = _add_layernorm(x2, ff, g3_ref[0], be3_ref[0])

    x_carry[...] = x3                         # carry f32 residual to next layer
    o_ref[0] = x3.astype(o_ref.dtype)         # only the last layer's write survives

    if apply_final_norm:                      # static flag: fuse the final norm
        @pl.when(layer == n_layers - 1)
        def _():
            o_ref[0] = _layernorm(x3, gf_ref[...], bfin_ref[...]).astype(o_ref.dtype)


_LAYER_WEIGHT_KEYS = (
    'wqkv', 'bqkv', 'wo_sa', 'bo_sa',
    'wq_ca', 'bq_ca', 'wk_ca', 'bk_ca', 'wv_ca', 'bv_ca', 'wo_ca', 'bo_ca',
    'w1', 'bf1', 'w2', 'bf2',
    'g1', 'be1', 'g2', 'be2', 'g3', 'be3')


# ------------------------------ model wrapper ---------------------------------

def transformer_decoder(tgt, memory, pos, w, h, layers_params, final_norm, nhead):
    """tgt: (T, B, D); memory, pos: (S, B, D) with S == w * h.  Returns (T, B, D)."""
    del w, h
    T, B, D = tgt.shape
    S = memory.shape[0]
    L = len(layers_params)

    # bf16 activation streams: memk/memv are the dominant HBM traffic; bf16
    # halves it and the double-buffered VMEM blocks.  LayerNorm/softmax stay f32.
    x = jnp.transpose(tgt, (1, 0, 2)).astype(COMPUTE_DTYPE)             # (B, T, D)
    mem_b = memory.astype(COMPUTE_DTYPE)
    memk = jnp.transpose(mem_b + pos.astype(COMPUTE_DTYPE), (1, 0, 2))  # keys
    memv = jnp.transpose(mem_b, (1, 0, 2))                              # values

    # Stack per-layer weights on a leading layer axis; blocked on the layer grid
    # axis so the pipeline prefetches layer l+1's weights while layer l computes.
    stacked = [jnp.stack([p[k] for p in layers_params]) for k in _LAYER_WEIGHT_KEYS]

    apply_final_norm = final_norm is not None
    if apply_final_norm:
        gf, bfin = final_norm['g'], final_norm['b']
    else:
        gf = jnp.ones((1, D), jnp.float32)
        bfin = jnp.zeros((1, D), jnp.float32)

    def batch_spec(seq):
        # Constant along the layer axis -> fetched once per batch row, VMEM-resident.
        return pl.BlockSpec((1, seq, D), lambda b, l: (b, 0, 0))

    def layer_spec(arr):
        nd = arr.ndim
        return pl.BlockSpec((1,) + arr.shape[1:],
                            lambda b, l, _nd=nd: (l,) + (0,) * (_nd - 1))

    def const_spec(arr):
        nd = arr.ndim
        return pl.BlockSpec(arr.shape, lambda b, l, _nd=nd: (0,) * _nd)

    out = pl.pallas_call(
        functools.partial(_decoder_kernel, nhead=nhead,
                          apply_final_norm=apply_final_norm),
        out_shape=jax.ShapeDtypeStruct((B, T, D), COMPUTE_DTYPE),
        grid=(B, L),
        in_specs=([batch_spec(T), batch_spec(S), batch_spec(S)]
                  + [layer_spec(wt) for wt in stacked]
                  + [const_spec(gf), const_spec(bfin)]),
        out_specs=pl.BlockSpec((1, T, D), lambda b, l: (b, 0, 0)),
        scratch_shapes=[pltpu.VMEM((T, D), jnp.float32),       # f32 residual carry
                        pltpu.VMEM((T, D), COMPUTE_DTYPE)],    # per-head attn assembly
        compiler_params=pltpu.CompilerParams(
            dimension_semantics=("parallel", "arbitrary"),
            # > v5e's 16 MiB default scoped VMEM, < v7x's 64 MiB physical.
            vmem_limit_bytes=48 * 1024 * 1024),
    )(x, memk, memv, *stacked, gf, bfin)
    # TODO(synk): for v7x with B == 1 (or odd B) add a second "parallel" grid axis
    # over query tiles so both TensorCores get work regardless of batch size.
    return jnp.transpose(out, (1, 0, 2)).astype(tgt.dtype)


# -------------------------------- param setup ----------------------------------

def _w(key, shape):
    return jax.random.normal(key, shape, jnp.float32) * 0.02


def init_layer_params(key, D, Dff, nhead):
    """Random layer params.  NOTE for real checkpoints: nn.MultiheadAttention's
    in_proj_weight is (3D, D) applied as x @ W.T — transpose when importing, and
    remember the 1/sqrt(head_dim) scale is folded into the Q weights AND Q bias."""
    ks = jax.random.split(key, 10)
    scale = 1.0 / float(D // nhead) ** 0.5
    zD = jnp.zeros((1, D), jnp.float32)
    oneD = jnp.ones((1, D), jnp.float32)
    wq, wk, wv = (_w(ks[i], (D, D)) for i in range(3))
    bq = jnp.zeros((1, D), jnp.float32)
    return {
        # self-attention: fused QKV projection, Q columns pre-scaled; bf16 for MXU
        'wqkv': jnp.concatenate([wq * scale, wk, wv], axis=1).astype(jnp.bfloat16),
        'bqkv': jnp.concatenate([bq * scale, zD, zD], axis=1),
        'wo_sa': _w(ks[3], (D, D)).astype(jnp.bfloat16), 'bo_sa': zD,
        # cross-attention (q from tgt, k from memory+pos, v from memory)
        'wq_ca': (_w(ks[4], (D, D)) * scale).astype(jnp.bfloat16), 'bq_ca': bq * scale,
        'wk_ca': _w(ks[5], (D, D)).astype(jnp.bfloat16), 'bk_ca': zD,
        'wv_ca': _w(ks[6], (D, D)).astype(jnp.bfloat16), 'bv_ca': zD,
        'wo_ca': _w(ks[7], (D, D)).astype(jnp.bfloat16), 'bo_ca': zD,
        # feed-forward
        'w1': _w(ks[8], (D, Dff)).astype(jnp.bfloat16),
        'bf1': jnp.zeros((1, Dff), jnp.float32),
        'w2': _w(ks[9], (Dff, D)).astype(jnp.bfloat16), 'bf2': zD,
        # LayerNorms (f32)
        'g1': oneD, 'be1': zD, 'g2': oneD, 'be2': zD, 'g3': oneD, 'be3': zD,
    }


# ----------------------------------- main ---------------------------------------

if __name__ == "__main__":
    # NOTE: demo shapes are tiny (padding-dominated); deploy with d_model / Dff
    # as multiples of 128 for lane-dense MXU/VPU utilization.
    T, B, D = 8, 2, 32          # tgt seq, batch, d_model
    nhead = 4
    Dff = 64
    w, h = 4, 4
    S = w * h                   # memory seq
    num_layers = 2

    key = jax.random.PRNGKey(0)
    k_tgt, k_mem, k_pos, k_par = jax.random.split(key, 4)
    tgt = jax.random.normal(k_tgt, (T, B, D), jnp.float32)
    memory = jax.random.normal(k_mem, (S, B, D), jnp.float32)
    pos = jax.random.normal(k_pos, (S, B, D), jnp.float32)

    layer_keys = jax.random.split(k_par, num_layers)
    layers_params = [init_layer_params(layer_keys[i], D, Dff, nhead)
                     for i in range(num_layers)]
    final_norm = {'g': jnp.ones((1, D), jnp.float32),
                  'b': jnp.zeros((1, D), jnp.float32)}

    fwd = jax.jit(transformer_decoder, static_argnums=(3, 4, 7))
    out = fwd(tgt, memory, pos, w, h, layers_params, final_norm, nhead)
    out = jax.block_until_ready(out)
    assert out.shape == (T, B, D)
    print("KERNEL_OK")
</pallas_src>

<mosaic_0001>
module attributes {stable_mosaic.version = 11 : i64} {
  func.func @_decoder_kernel(%arg0: i32, %arg1: i32, %arg2: memref<1x8x32xbf16, #tpu.memory_space<vmem>>, %arg3: memref<1x16x32xbf16, #tpu.memory_space<vmem>>, %arg4: memref<1x16x32xbf16, #tpu.memory_space<vmem>>, %arg5: memref<1x32x96xbf16, #tpu.memory_space<vmem>>, %arg6: memref<1x1x96xf32, #tpu.memory_space<vmem>>, %arg7: memref<1x32x32xbf16, #tpu.memory_space<vmem>>, %arg8: memref<1x1x32xf32, #tpu.memory_space<vmem>>, %arg9: memref<1x32x32xbf16, #tpu.memory_space<vmem>>, %arg10: memref<1x1x32xf32, #tpu.memory_space<vmem>>, %arg11: memref<1x32x32xbf16, #tpu.memory_space<vmem>>, %arg12: memref<1x1x32xf32, #tpu.memory_space<vmem>>, %arg13: memref<1x32x32xbf16, #tpu.memory_space<vmem>>, %arg14: memref<1x1x32xf32, #tpu.memory_space<vmem>>, %arg15: memref<1x32x32xbf16, #tpu.memory_space<vmem>>, %arg16: memref<1x1x32xf32, #tpu.memory_space<vmem>>, %arg17: memref<1x32x64xbf16, #tpu.memory_space<vmem>>, %arg18: memref<1x1x64xf32, #tpu.memory_space<vmem>>, %arg19: memref<1x64x32xbf16, #tpu.memory_space<vmem>>, %arg20: memref<1x1x32xf32, #tpu.memory_space<vmem>>, %arg21: memref<1x1x32xf32, #tpu.memory_space<vmem>>, %arg22: memref<1x1x32xf32, #tpu.memory_space<vmem>>, %arg23: memref<1x1x32xf32, #tpu.memory_space<vmem>>, %arg24: memref<1x1x32xf32, #tpu.memory_space<vmem>>, %arg25: memref<1x1x32xf32, #tpu.memory_space<vmem>>, %arg26: memref<1x1x32xf32, #tpu.memory_space<vmem>>, %arg27: memref<1x32xf32, #tpu.memory_space<vmem>>, %arg28: memref<1x32xf32, #tpu.memory_space<vmem>>, %arg29: memref<1x8x32xbf16, #tpu.memory_space<vmem>>, %arg30: memref<8x32xf32, #tpu.memory_space<vmem>>, %arg31: memref<8x32xbf16, #tpu.memory_space<vmem>>) attributes {dimension_semantics = [#tpu.dimension_semantics<parallel>, #tpu.dimension_semantics<arbitrary>], iteration_bounds = array<i64: 2, 2>, scalar_prefetch = 0 : i64, scratch_operands = 2 : i64, tpu.core_type = #tpu.core_type<tc>, window_params = [{transform_indices = @transform_0, window_bounds = array<i64: 1, 8, 32>}, {transform_indices = @transform_1, window_bounds = array<i64: 1, 16, 32>}, {transform_indices = @transform_2, window_bounds = array<i64: 1, 16, 32>}, {transform_indices = @transform_3, window_bounds = array<i64: 1, 32, 96>}, {transform_indices = @transform_4, window_bounds = array<i64: 1, 1, 96>}, {transform_indices = @transform_5, window_bounds = array<i64: 1, 32, 32>}, {transform_indices = @transform_6, window_bounds = array<i64: 1, 1, 32>}, {transform_indices = @transform_7, window_bounds = array<i64: 1, 32, 32>}, {transform_indices = @transform_8, window_bounds = array<i64: 1, 1, 32>}, {transform_indices = @transform_9, window_bounds = array<i64: 1, 32, 32>}, {transform_indices = @transform_10, window_bounds = array<i64: 1, 1, 32>}, {transform_indices = @transform_11, window_bounds = array<i64: 1, 32, 32>}, {transform_indices = @transform_12, window_bounds = array<i64: 1, 1, 32>}, {transform_indices = @transform_13, window_bounds = array<i64: 1, 32, 32>}, {transform_indices = @transform_14, window_bounds = array<i64: 1, 1, 32>}, {transform_indices = @transform_15, window_bounds = array<i64: 1, 32, 64>}, {transform_indices = @transform_16, window_bounds = array<i64: 1, 1, 64>}, {transform_indices = @transform_17, window_bounds = array<i64: 1, 64, 32>}, {transform_indices = @transform_18, window_bounds = array<i64: 1, 1, 32>}, {transform_indices = @transform_19, window_bounds = array<i64: 1, 1, 32>}, {transform_indices = @transform_20, window_bounds = array<i64: 1, 1, 32>}, {transform_indices = @transform_21, window_bounds = array<i64: 1, 1, 32>}, {transform_indices = @transform_22, window_bounds = array<i64: 1, 1, 32>}, {transform_indices = @transform_23, window_bounds = array<i64: 1, 1, 32>}, {transform_indices = @transform_24, window_bounds = array<i64: 1, 1, 32>}, {pipeline_mode = #tpu.pipeline_mode<synchronous>, transform_indices = @transform_25, window_bounds = array<i64: 1, 32>}, {pipeline_mode = #tpu.pipeline_mode<synchronous>, transform_indices = @transform_26, window_bounds = array<i64: 1, 32>}, {transform_indices = @transform_27, window_bounds = array<i64: 1, 8, 32>}]} {
    %c0_i32 = arith.constant 0 : i32
    %0 = arith.cmpi eq, %arg1, %c0_i32 : i32
    %1 = arith.extui %0 : i1 to i32
    %c0_i32_0 = arith.constant 0 : i32
    %2 = arith.cmpi ne, %1, %c0_i32_0 : i32
    scf.if %2 {
      %c0_152 = arith.constant 0 : index
      %c0_153 = arith.constant 0 : index
      %c0_154 = arith.constant 0 : index
      %316 = vector.load %arg2[%c0_152, %c0_153, %c0_154] : memref<1x8x32xbf16, #tpu.memory_space<vmem>>, vector<1x8x32xbf16>
      %317 = vector.shape_cast %316 : vector<1x8x32xbf16> to vector<8x32xbf16>
      %318 = arith.extf %317 : vector<8x32xbf16> to vector<8x32xf32>
      %c0_155 = arith.constant 0 : index
      %c0_156 = arith.constant 0 : index
      %319 = vector.load %arg30[%c0_155, %c0_156] : memref<8x32xf32, #tpu.memory_space<vmem>>, vector<8x32xf32>
      tpu.vector_store %arg30[%c0_155, %c0_156], %318 {strides = array<i32>} : memref<8x32xf32, #tpu.memory_space<vmem>>, vector<8x32xf32>,
    } else {
    }
    %c0 = arith.constant 0 : index
    %c0_1 = arith.constant 0 : index
    %3 = vector.load %arg30[%c0, %c0_1] : memref<8x32xf32, #tpu.memory_space<vmem>>, vector<8x32xf32>
    %4 = arith.truncf %3 : vector<8x32xf32> to vector<8x32xbf16>
    %c0_2 = arith.constant 0 : index
    %c0_3 = arith.constant 0 : index
    %c0_4 = arith.constant 0 : index
    %5 = vector.load %arg5[%c0_2, %c0_3, %c0_4] : memref<1x32x96xbf16, #tpu.memory_space<vmem>>, vector<1x32x96xbf16>
    %6 = vector.shape_cast %5 : vector<1x32x96xbf16> to vector<32x96xbf16>
    %cst = arith.constant dense<0.000000e+00> : vector<8x96xf32>
    %7 = tpu.matmul %4, %6, %cst {dimension_numbers = #tpu.dot_dimension_numbers<[1], [0], [0], [1], [0, 0, 1, 1], [], []>} : vector<8x32xbf16>, vector<32x96xbf16>, vector<8x96xf32> -> vector<8x96xf32>
    %c0_5 = arith.constant 0 : index
    %c0_6 = arith.constant 0 : index
    %c0_7 = arith.constant 0 : index
    %8 = vector.load %arg6[%c0_5, %c0_6, %c0_7] : memref<1x1x96xf32, #tpu.memory_space<vmem>>, vector<1x1x96xf32>
    %9 = vector.shape_cast %8 : vector<1x1x96xf32> to vector<1x96xf32>
    %10 = vector.broadcast %9 : vector<1x96xf32> to vector<8x96xf32>
    %11 = arith.addf %7, %10 : vector<8x96xf32>
    %12 = vector.extract_strided_slice %11 {offsets = [0, 0], sizes = [8, 32], strides = [1, 1]} : vector<8x96xf32> to vector<8x32xf32>
    %13 = vector.extract_strided_slice %11 {offsets = [0, 32], sizes = [8, 32], strides = [1, 1]} : vector<8x96xf32> to vector<8x32xf32>
    %14 = vector.extract_strided_slice %11 {offsets = [0, 64], sizes = [8, 32], strides = [1, 1]} : vector<8x96xf32> to vector<8x32xf32>
    %15 = arith.truncf %12 : vector<8x32xf32> to vector<8x32xbf16>
    %16 = arith.truncf %13 : vector<8x32xf32> to vector<8x32xbf16>
    %17 = tpu.transpose %16, [1, 0] : vector<8x32xbf16> -> vector<32x8xbf16>
    %18 = arith.truncf %14 : vector<8x32xf32> to vector<8x32xbf16>
    %19 = vector.extract_strided_slice %15 {offsets = [0, 0], sizes = [8, 8], strides = [1, 1]} : vector<8x32xbf16> to vector<8x8xbf16>
    %20 = vector.extract_strided_slice %17 {offsets = [0, 0], sizes = [8, 8], strides = [1, 1]} : vector<32x8xbf16> to vector<8x8xbf16>
    %cst_8 = arith.constant dense<0.000000e+00> : vector<8x8xf32>
    %21 = tpu.matmul %19, %20, %cst_8 {dimension_numbers = #tpu.dot_dimension_numbers<[1], [0], [0], [1], [0, 0, 1, 1], [], []>} : vector<8x8xbf16>, vector<8x8xbf16>, vector<8x8xf32> -> vector<8x8xf32>
    %cst_9 = arith.constant dense<0xFF800000> : vector<8xf32>
    %22 = vector.multi_reduction <maximumf>, %21, %cst_9 [1] : vector<8x8xf32> to vector<8xf32>
    %23 = vector.shape_cast %22 : vector<8xf32> to vector<8x1xf32>
    %24 = vector.broadcast %23 : vector<8x1xf32> to vector<8x8xf32>
    %25 = arith.subf %21, %24 : vector<8x8xf32>
    %26 = math.exp %25 : vector<8x8xf32>
    %cst_10 = arith.constant dense<0.000000e+00> : vector<8xf32>
    %27 = vector.multi_reduction <add>, %26, %cst_10 [1] : vector<8x8xf32> to vector<8xf32>
    %28 = vector.shape_cast %27 : vector<8xf32> to vector<8x1xf32>
    %29 = tpu.reciprocal %28 {approx = true} : vector<8x1xf32> -> vector<8x1xf32>
    %30 = vector.broadcast %29 : vector<8x1xf32> to vector<8x8xf32>
    %31 = arith.mulf %26, %30 : vector<8x8xf32>
    %32 = arith.truncf %31 : vector<8x8xf32> to vector<8x8xbf16>
    %33 = vector.extract_strided_slice %18 {offsets = [0, 0], sizes = [8, 8], strides = [1, 1]} : vector<8x32xbf16> to vector<8x8xbf16>
    %cst_11 = arith.constant dense<0.000000e+00> : vector<8x8xf32>
    %34 = tpu.matmul %32, %33, %cst_11 {dimension_numbers = #tpu.dot_dimension_numbers<[1], [0], [0], [1], [0, 0, 1, 1], [], []>} : vector<8x8xbf16>, vector<8x8xbf16>, vector<8x8xf32> -> vector<8x8xf32>
    %35 = arith.truncf %34 : vector<8x8xf32> to vector<8x8xbf16>
    %c0_12 = arith.constant 0 : index
    %c0_13 = arith.constant 0 : index
    %36 = vector.load %arg31[%c0_12, %c0_13] : memref<8x32xbf16, #tpu.memory_space<vmem>>, vector<8x8xbf16>
    tpu.vector_store %arg31[%c0_12, %c0_13], %35 {strides = array<i32>} : memref<8x32xbf16, #tpu.memory_space<vmem>>, vector<8x8xbf16>,
    %37 = vector.extract_strided_slice %15 {offsets = [0, 8], sizes = [8, 8], strides = [1, 1]} : vector<8x32xbf16> to vector<8x8xbf16>
    %38 = vector.extract_strided_slice %17 {offsets = [8, 0], sizes = [8, 8], strides = [1, 1]} : vector<32x8xbf16> to vector<8x8xbf16>
    %cst_14 = arith.constant dense<0.000000e+00> : vector<8x8xf32>
    %39 = tpu.matmul %37, %38, %cst_14 {dimension_numbers = #tpu.dot_dimension_numbers<[1], [0], [0], [1], [0, 0, 1, 1], [], []>} : vector<8x8xbf16>, vector<8x8xbf16>, vector<8x8xf32> -> vector<8x8xf32>
    %cst_15 = arith.constant dense<0xFF800000> : vector<8xf32>
    %40 = vector.multi_reduction <maximumf>, %39, %cst_15 [1] : vector<8x8xf32> to vector<8xf32>
    %41 = vector.shape_cast %40 : vector<8xf32> to vector<8x1xf32>
    %42 = vector.broadcast %41 : vector<8x1xf32> to vector<8x8xf32>
    %43 = arith.subf %39, %42 : vector<8x8xf32>
    %44 = math.exp %43 : vector<8x8xf32>
    %cst_16 = arith.constant dense<0.000000e+00> : vector<8xf32>
    %45 = vector.multi_reduction <add>, %44, %cst_16 [1] : vector<8x8xf32> to vector<8xf32>
    %46 = vector.shape_cast %45 : vector<8xf32> to vector<8x1xf32>
    %47 = tpu.reciprocal %46 {approx = true} : vector<8x1xf32> -> vector<8x1xf32>
    %48 = vector.broadcast %47 : vector<8x1xf32> to vector<8x8xf32>
    %49 = arith.mulf %44, %48 : vector<8x8xf32>
    %50 = arith.truncf %49 : vector<8x8xf32> to vector<8x8xbf16>
    %51 = vector.extract_strided_slice %18 {offsets = [0, 8], sizes = [8, 8], strides = [1, 1]} : vector<8x32xbf16> to vector<8x8xbf16>
    %cst_17 = arith.constant dense<0.000000e+00> : vector<8x8xf32>
    %52 = tpu.matmul %50, %51, %cst_17 {dimension_numbers = #tpu.dot_dimension_numbers<[1], [0], [0], [1], [0, 0, 1, 1], [], []>} : vector<8x8xbf16>, vector<8x8xbf16>, vector<8x8xf32> -> vector<8x8xf32>
    %53 = arith.truncf %52 : vector<8x8xf32> to vector<8x8xbf16>
    %c0_18 = arith.constant 0 : index
    %c8 = arith.constant 8 : index
    %54 = vector.load %arg31[%c0_18, %c8] : memref<8x32xbf16, #tpu.memory_space<vmem>>, vector<8x8xbf16>
    tpu.vector_store %arg31[%c0_18, %c8], %53 {strides = array<i32>} : memref<8x32xbf16, #tpu.memory_space<vmem>>, vector<8x8xbf16>,
    %55 = vector.extract_strided_slice %15 {offsets = [0, 16], sizes = [8, 8], strides = [1, 1]} : vector<8x32xbf16> to vector<8x8xbf16>
    %56 = vector.extract_strided_slice %17 {offsets = [16, 0], sizes = [8, 8], strides = [1, 1]} : vector<32x8xbf16> to vector<8x8xbf16>
    %cst_19 = arith.constant dense<0.000000e+00> : vector<8x8xf32>
    %57 = tpu.matmul %55, %56, %cst_19 {dimension_numbers = #tpu.dot_dimension_numbers<[1], [0], [0], [1], [0, 0, 1, 1], [], []>} : vector<8x8xbf16>, vector<8x8xbf16>, vector<8x8xf32> -> vector<8x8xf32>
    %cst_20 = arith.constant dense<0xFF800000> : vector<8xf32>
    %58 = vector.multi_reduction <maximumf>, %57, %cst_20 [1] : vector<8x8xf32> to vector<8xf32>
    %59 = vector.shape_cast %58 : vector<8xf32> to vector<8x1xf32>
    %60 = vector.broadcast %59 : vector<8x1xf32> to vector<8x8xf32>
    %61 = arith.subf %57, %60 : vector<8x8xf32>
    %62 = math.exp %61 : vector<8x8xf32>
    %cst_21 = arith.constant dense<0.000000e+00> : vector<8xf32>
    %63 = vector.multi_reduction <add>, %62, %cst_21 [1] : vector<8x8xf32> to vector<8xf32>
    %64 = vector.shape_cast %63 : vector<8xf32> to vector<8x1xf32>
    %65 = tpu.reciprocal %64 {approx = true} : vector<8x1xf32> -> vector<8x1xf32>
    %66 = vector.broadcast %65 : vector<8x1xf32> to vector<8x8xf32>
    %67 = arith.mulf %62, %66 : vector<8x8xf32>
    %68 = arith.truncf %67 : vector<8x8xf32> to vector<8x8xbf16>
    %69 = vector.extract_strided_slice %18 {offsets = [0, 16], sizes = [8, 8], strides = [1, 1]} : vector<8x32xbf16> to vector<8x8xbf16>
    %cst_22 = arith.constant dense<0.000000e+00> : vector<8x8xf32>
    %70 = tpu.matmul %68, %69, %cst_22 {dimension_numbers = #tpu.dot_dimension_numbers<[1], [0], [0], [1], [0, 0, 1, 1], [], []>} : vector<8x8xbf16>, vector<8x8xbf16>, vector<8x8xf32> -> vector<8x8xf32>
    %71 = arith.truncf %70 : vector<8x8xf32> to vector<8x8xbf16>
    %c0_23 = arith.constant 0 : index
    %c16 = arith.constant 16 : index
    %72 = vector.load %arg31[%c0_23, %c16] : memref<8x32xbf16, #tpu.memory_space<vmem>>, vector<8x8xbf16>
    tpu.vector_store %arg31[%c0_23, %c16], %71 {strides = array<i32>} : memref<8x32xbf16, #tpu.memory_space<vmem>>, vector<8x8xbf16>,
    %73 = vector.extract_strided_slice %15 {offsets = [0, 24], sizes = [8, 8], strides = [1, 1]} : vector<8x32xbf16> to vector<8x8xbf16>
    %74 = vector.extract_strided_slice %17 {offsets = [24, 0], sizes = [8, 8], strides = [1, 1]} : vector<32x8xbf16> to vector<8x8xbf16>
    %cst_24 = arith.constant dense<0.000000e+00> : vector<8x8xf32>
    %75 = tpu.matmul %73, %74, %cst_24 {dimension_numbers = #tpu.dot_dimension_numbers<[1], [0], [0], [1], [0, 0, 1, 1], [], []>} : vector<8x8xbf16>, vector<8x8xbf16>, vector<8x8xf32> -> vector<8x8xf32>
    %cst_25 = arith.constant dense<0xFF800000> : vector<8xf32>
    %76 = vector.multi_reduction <maximumf>, %75, %cst_25 [1] : vector<8x8xf32> to vector<8xf32>
    %77 = vector.shape_cast %76 : vector<8xf32> to vector<8x1xf32>
    %78 = vector.broadcast %77 : vector<8x1xf32> to vector<8x8xf32>
    %79 = arith.subf %75, %78 : vector<8x8xf32>
    %80 = math.exp %79 : vector<8x8xf32>
    %cst_26 = arith.constant dense<0.000000e+00> : vector<8xf32>
    %81 = vector.multi_reduction <add>, %80, %cst_26 [1] : vector<8x8xf32> to vector<8xf32>
    %82 = vector.shape_cast %81 : vector<8xf32> to vector<8x1xf32>
    %83 = tpu.reciprocal %82 {approx = true} : vector<8x1xf32> -> vector<8x1xf32>
    %84 = vector.broadcast %83 : vector<8x1xf32> to vector<8x8xf32>
    %85 = arith.mulf %80, %84 : vector<8x8xf32>
    %86 = arith.truncf %85 : vector<8x8xf32> to vector<8x8xbf16>
    %87 = vector.extract_strided_slice %18 {offsets = [0, 24], sizes = [8, 8], strides = [1, 1]} : vector<8x32xbf16> to vector<8x8xbf16>
    %cst_27 = arith.constant dense<0.000000e+00> : vector<8x8xf32>
    %88 = tpu.matmul %86, %87, %cst_27 {dimension_numbers = #tpu.dot_dimension_numbers<[1], [0], [0], [1], [0, 0, 1, 1], [], []>} : vector<8x8xbf16>, vector<8x8xbf16>, vector<8x8xf32> -> vector<8x8xf32>
    %89 = arith.truncf %88 : vector<8x8xf32> to vector<8x8xbf16>
    %c0_28 = arith.constant 0 : index
    %c24 = arith.constant 24 : index
    %90 = vector.load %arg31[%c0_28, %c24] : memref<8x32xbf16, #tpu.memory_space<vmem>>, vector<8x8xbf16>
    tpu.vector_store %arg31[%c0_28, %c24], %89 {strides = array<i32>} : memref<8x32xbf16, #tpu.memory_space<vmem>>, vector<8x8xbf16>,
    %c0_29 = arith.constant 0 : index
    %c0_30 = arith.constant 0 : index
    %91 = vector.load %arg31[%c0_29, %c0_30] : memref<8x32xbf16, #tpu.memory_space<vmem>>, vector<8x32xbf16>
    %c0_31 = arith.constant 0 : index
    %c0_32 = arith.constant 0 : index
    %c0_33 = arith.constant 0 : index
    %92 = vector.load %arg7[%c0_31, %c0_32, %c0_33] : memref<1x32x32xbf16, #tpu.memory_space<vmem>>, vector<1x32x32xbf16>
    %93 = vector.shape_cast %92 : vector<1x32x32xbf16> to vector<32x32xbf16>
    %cst_34 = arith.constant dense<0.000000e+00> : vector<8x32xf32>
    %94 = tpu.matmul %91, %93, %cst_34 {dimension_numbers = #tpu.dot_dimension_numbers<[1], [0], [0], [1], [0, 0, 1, 1], [], []>} : vector<8x32xbf16>, vector<32x32xbf16>, vector<8x32xf32> -> vector<8x32xf32>
    %c0_35 = arith.constant 0 : index
    %c0_36 = arith.constant 0 : index
    %c0_37 = arith.constant 0 : index
    %95 = vector.load %arg8[%c0_35, %c0_36, %c0_37] : memref<1x1x32xf32, #tpu.memory_space<vmem>>, vector<1x1x32xf32>
    %96 = vector.shape_cast %95 : vector<1x1x32xf32> to vector<1x32xf32>
    %97 = vector.broadcast %96 : vector<1x32xf32> to vector<8x32xf32>
    %98 = arith.addf %94, %97 : vector<8x32xf32>
    %c0_38 = arith.constant 0 : index
    %c0_39 = arith.constant 0 : index
    %c0_40 = arith.constant 0 : index
    %99 = vector.load %arg21[%c0_38, %c0_39, %c0_40] : memref<1x1x32xf32, #tpu.memory_space<vmem>>, vector<1x1x32xf32>
    %100 = vector.shape_cast %99 : vector<1x1x32xf32> to vector<1x32xf32>
    %c0_41 = arith.constant 0 : index
    %c0_42 = arith.constant 0 : index
    %c0_43 = arith.constant 0 : index
    %101 = vector.load %arg22[%c0_41, %c0_42, %c0_43] : memref<1x1x32xf32, #tpu.memory_space<vmem>>, vector<1x1x32xf32>
    %102 = vector.shape_cast %101 : vector<1x1x32xf32> to vector<1x32xf32>
    %103 = arith.addf %3, %98 : vector<8x32xf32>
    %cst_44 = arith.constant dense<0.000000e+00> : vector<8xf32>
    %104 = vector.multi_reduction <add>, %103, %cst_44 [1] : vector<8x32xf32> to vector<8xf32>
    %105 = vector.shape_cast %104 : vector<8xf32> to vector<8x1xf32>
    %cst_45 = arith.constant 3.200000e+01 : f32
    %106 = vector.broadcast %cst_45 : f32 to vector<8x1xf32>
    %107 = arith.divf %105, %106 : vector<8x1xf32>
    %108 = vector.broadcast %107 : vector<8x1xf32> to vector<8x32xf32>
    %109 = arith.subf %103, %108 : vector<8x32xf32>
    %110 = arith.mulf %109, %109 : vector<8x32xf32>
    %cst_46 = arith.constant dense<0.000000e+00> : vector<8xf32>
    %111 = vector.multi_reduction <add>, %110, %cst_46 [1] : vector<8x32xf32> to vector<8xf32>
    %112 = vector.shape_cast %111 : vector<8xf32> to vector<8x1xf32>
    %cst_47 = arith.constant 3.200000e+01 : f32
    %113 = vector.broadcast %cst_47 : f32 to vector<8x1xf32>
    %114 = arith.divf %112, %113 : vector<8x1xf32>
    %115 = vector.broadcast %107 : vector<8x1xf32> to vector<8x32xf32>
    %116 = arith.subf %103, %115 : vector<8x32xf32>
    %cst_48 = arith.constant 9.99999974E-6 : f32
    %117 = vector.broadcast %cst_48 : f32 to vector<8x1xf32>
    %118 = arith.addf %114, %117 : vector<8x1xf32>
    %119 = math.rsqrt %118 : vector<8x1xf32>
    %120 = vector.broadcast %119 : vector<8x1xf32> to vector<8x32xf32>
    %121 = arith.mulf %116, %120 : vector<8x32xf32>
    %122 = vector.broadcast %100 : vector<1x32xf32> to vector<8x32xf32>
    %123 = arith.mulf %121, %122 : vector<8x32xf32>
    %124 = vector.broadcast %102 : vector<1x32xf32> to vector<8x32xf32>
    %125 = arith.addf %123, %124 : vector<8x32xf32>
    %c0_49 = arith.constant 0 : index
    %c0_50 = arith.constant 0 : index
    %c0_51 = arith.constant 0 : index
    %126 = vector.load %arg3[%c0_49, %c0_50, %c0_51] : memref<1x16x32xbf16, #tpu.memory_space<vmem>>, vector<1x16x32xbf16>
    %127 = vector.shape_cast %126 : vector<1x16x32xbf16> to vector<16x32xbf16>
    %c0_52 = arith.constant 0 : index
    %c0_53 = arith.constant 0 : index
    %c0_54 = arith.constant 0 : index
    %128 = vector.load %arg4[%c0_52, %c0_53, %c0_54] : memref<1x16x32xbf16, #tpu.memory_space<vmem>>, vector<1x16x32xbf16>
    %129 = vector.shape_cast %128 : vector<1x16x32xbf16> to vector<16x32xbf16>
    %130 = arith.truncf %125 : vector<8x32xf32> to vector<8x32xbf16>
    %c0_55 = arith.constant 0 : index
    %c0_56 = arith.constant 0 : index
    %c0_57 = arith.constant 0 : index
    %131 = vector.load %arg9[%c0_55, %c0_56, %c0_57] : memref<1x32x32xbf16, #tpu.memory_space<vmem>>, vector<1x32x32xbf16>
    %132 = vector.shape_cast %131 : vector<1x32x32xbf16> to vector<32x32xbf16>
    %cst_58 = arith.constant dense<0.000000e+00> : vector<8x32xf32>
    %133 = tpu.matmul %130, %132, %cst_58 {dimension_numbers = #tpu.dot_dimension_numbers<[1], [0], [0], [1], [0, 0, 1, 1], [], []>} : vector<8x32xbf16>, vector<32x32xbf16>, vector<8x32xf32> -> vector<8x32xf32>
    %c0_59 = arith.constant 0 : index
    %c0_60 = arith.constant 0 : index
    %c0_61 = arith.constant 0 : index
    %134 = vector.load %arg10[%c0_59, %c0_60, %c0_61] : memref<1x1x32xf32, #tpu.memory_space<vmem>>, vector<1x1x32xf32>
    %135 = vector.shape_cast %134 : vector<1x1x32xf32> to vector<1x32xf32>
    %136 = vector.broadcast %135 : vector<1x32xf32> to vector<8x32xf32>
    %137 = arith.addf %133, %136 : vector<8x32xf32>
    %c0_62 = arith.constant 0 : index
    %c0_63 = arith.constant 0 : index
    %c0_64 = arith.constant 0 : index
    %138 = vector.load %arg11[%c0_62, %c0_63, %c0_64] : memref<1x32x32xbf16, #tpu.memory_space<vmem>>, vector<1x32x32xbf16>
    %139 = vector.shape_cast %138 : vector<1x32x32xbf16> to vector<32x32xbf16>
    %cst_65 = arith.constant dense<0.000000e+00> : vector<16x32xf32>
    %140 = tpu.matmul %127, %139, %cst_65 {dimension_numbers = #tpu.dot_dimension_numbers<[1], [0], [0], [1], [0, 0, 1, 1], [], []>} : vector<16x32xbf16>, vector<32x32xbf16>, vector<16x32xf32> -> vector<16x32xf32>
    %c0_66 = arith.constant 0 : index
    %c0_67 = arith.constant 0 : index
    %c0_68 = arith.constant 0 : index
    %141 = vector.load %arg12[%c0_66, %c0_67, %c0_68] : memref<1x1x32xf32, #tpu.memory_space<vmem>>, vector<1x1x32xf32>
    %142 = vector.shape_cast %141 : vector<1x1x32xf32> to vector<1x32xf32>
    %143 = vector.broadcast %142 : vector<1x32xf32> to vector<16x32xf32>
    %144 = arith.addf %140, %143 : vector<16x32xf32>
    %c0_69 = arith.constant 0 : index
    %c0_70 = arith.constant 0 : index
    %c0_71 = arith.constant 0 : index
    %145 = vector.load %arg13[%c0_69, %c0_70, %c0_71] : memref<1x32x32xbf16, #tpu.memory_space<vmem>>, vector<1x32x32xbf16>
    %146 = vector.shape_cast %145 : vector<1x32x32xbf16> to vector<32x32xbf16>
    %cst_72 = arith.constant dense<0.000000e+00> : vector<16x32xf32>
    %147 = tpu.matmul %129, %146, %cst_72 {dimension_numbers = #tpu.dot_dimension_numbers<[1], [0], [0], [1], [0, 0, 1, 1], [], []>} : vector<16x32xbf16>, vector<32x32xbf16>, vector<16x32xf32> -> vector<16x32xf32>
    %c0_73 = arith.constant 0 : index
    %c0_74 = arith.constant 0 : index
    %c0_75 = arith.constant 0 : index
    %148 = vector.load %arg14[%c0_73, %c0_74, %c0_75] : memref<1x1x32xf32, #tpu.memory_space<vmem>>, vector<1x1x32xf32>
    %149 = vector.shape_cast %148 : vector<1x1x32xf32> to vector<1x32xf32>
    %150 = vector.broadcast %149 : vector<1x32xf32> to vector<16x32xf32>
    %151 = arith.addf %147, %150 : vector<16x32xf32>
    %152 = arith.truncf %137 : vector<8x32xf32> to vector<8x32xbf16>
    %153 = arith.truncf %144 : vector<16x32xf32> to vector<16x32xbf16>
    %154 = tpu.transpose %153, [1, 0] : vector<16x32xbf16> -> vector<32x16xbf16>
    %155 = arith.truncf %151 : vector<16x32xf32> to vector<16x32xbf16>
    %156 = vector.extract_strided_slice %152 {offsets = [0, 0], sizes = [8, 8], strides = [1, 1]} : vector<8x32xbf16> to vector<8x8xbf16>
    %157 = vector.extract_strided_slice %154 {offsets = [0, 0], sizes = [8, 16], strides = [1, 1]} : vector<32x16xbf16> to vector<8x16xbf16>
    %cst_76 = arith.constant dense<0.000000e+00> : vector<8x16xf32>
    %158 = tpu.matmul %156, %157, %cst_76 {dimension_numbers = #tpu.dot_dimension_numbers<[1], [0], [0], [1], [0, 0, 1, 1], [], []>} : vector<8x8xbf16>, vector<8x16xbf16>, vector<8x16xf32> -> vector<8x16xf32>
    %cst_77 = arith.constant dense<0xFF800000> : vector<8xf32>
    %159 = vector.multi_reduction <maximumf>, %158, %cst_77 [1] : vector<8x16xf32> to vector<8xf32>
    %160 = vector.shape_cast %159 : vector<8xf32> to vector<8x1xf32>
    %161 = vector.broadcast %160 : vector<8x1xf32> to vector<8x16xf32>
    %162 = arith.subf %158, %161 : vector<8x16xf32>
    %163 = math.exp %162 : vector<8x16xf32>
    %cst_78 = arith.constant dense<0.000000e+00> : vector<8xf32>
    %164 = vector.multi_reduction <add>, %163, %cst_78 [1] : vector<8x16xf32> to vector<8xf32>
    %165 = vector.shape_cast %164 : vector<8xf32> to vector<8x1xf32>
    %166 = tpu.reciprocal %165 {approx = true} : vector<8x1xf32> -> vector<8x1xf32>
    %167 = vector.broadcast %166 : vector<8x1xf32> to vector<8x16xf32>
    %168 = arith.mulf %163, %167 : vector<8x16xf32>
    %169 = arith.truncf %168 : vector<8x16xf32> to vector<8x16xbf16>
    %170 = vector.extract_strided_slice %155 {offsets = [0, 0], sizes = [16, 8], strides = [1, 1]} : vector<16x32xbf16> to vector<16x8xbf16>
    %cst_79 = arith.constant dense<0.000000e+00> : vector<8x8xf32>
    %171 = tpu.matmul %169, %170, %cst_79 {dimension_numbers = #tpu.dot_dimension_numbers<[1], [0], [0], [1], [0, 0, 1, 1], [], []>} : vector<8x16xbf16>, vector<16x8xbf16>, vector<8x8xf32> -> vector<8x8xf32>
    %172 = arith.truncf %171 : vector<8x8xf32> to vector<8x8xbf16>
    %c0_80 = arith.constant 0 : index
    %c0_81 = arith.constant 0 : index
    %173 = vector.load %arg31[%c0_80, %c0_81] : memref<8x32xbf16, #tpu.memory_space<vmem>>, vector<8x8xbf16>
    tpu.vector_store %arg31[%c0_80, %c0_81], %172 {strides = array<i32>} : memref<8x32xbf16, #tpu.memory_space<vmem>>, vector<8x8xbf16>,
    %174 = vector.extract_strided_slice %152 {offsets = [0, 8], sizes = [8, 8], strides = [1, 1]} : vector<8x32xbf16> to vector<8x8xbf16>
    %175 = vector.extract_strided_slice %154 {offsets = [8, 0], sizes = [8, 16], strides = [1, 1]} : vector<32x16xbf16> to vector<8x16xbf16>
    %cst_82 = arith.constant dense<0.000000e+00> : vector<8x16xf32>
    %176 = tpu.matmul %174, %175, %cst_82 {dimension_numbers = #tpu.dot_dimension_numbers<[1], [0], [0], [1], [0, 0, 1, 1], [], []>} : vector<8x8xbf16>, vector<8x16xbf16>, vector<8x16xf32> -> vector<8x16xf32>
    %cst_83 = arith.constant dense<0xFF800000> : vector<8xf32>
    %177 = vector.multi_reduction <maximumf>, %176, %cst_83 [1] : vector<8x16xf32> to vector<8xf32>
    %178 = vector.shape_cast %177 : vector<8xf32> to vector<8x1xf32>
    %179 = vector.broadcast %178 : vector<8x1xf32> to vector<8x16xf32>
    %180 = arith.subf %176, %179 : vector<8x16xf32>
    %181 = math.exp %180 : vector<8x16xf32>
    %cst_84 = arith.constant dense<0.000000e+00> : vector<8xf32>
    %182 = vector.multi_reduction <add>, %181, %cst_84 [1] : vector<8x16xf32> to vector<8xf32>
    %183 = vector.shape_cast %182 : vector<8xf32> to vector<8x1xf32>
    %184 = tpu.reciprocal %183 {approx = true} : vector<8x1xf32> -> vector<8x1xf32>
    %185 = vector.broadcast %184 : vector<8x1xf32> to vector<8x16xf32>
    %186 = arith.mulf %181, %185 : vector<8x16xf32>
    %187 = arith.truncf %186 : vector<8x16xf32> to vector<8x16xbf16>
    %188 = vector.extract_strided_slice %155 {offsets = [0, 8], sizes = [16, 8], strides = [1, 1]} : vector<16x32xbf16> to vector<16x8xbf16>
    %cst_85 = arith.constant dense<0.000000e+00> : vector<8x8xf32>
    %189 = tpu.matmul %187, %188, %cst_85 {dimension_numbers = #tpu.dot_dimension_numbers<[1], [0], [0], [1], [0, 0, 1, 1], [], []>} : vector<8x16xbf16>, vector<16x8xbf16>, vector<8x8xf32> -> vector<8x8xf32>
    %190 = arith.truncf %189 : vector<8x8xf32> to vector<8x8xbf16>
    %c0_86 = arith.constant 0 : index
    %c8_87 = arith.constant 8 : index
    %191 = vector.load %arg31[%c0_86, %c8_87] : memref<8x32xbf16, #tpu.memory_space<vmem>>, vector<8x8xbf16>
    tpu.vector_store %arg31[%c0_86, %c8_87], %190 {strides = array<i32>} : memref<8x32xbf16, #tpu.memory_space<vmem>>, vector<8x8xbf16>,
    %192 = vector.extract_strided_slice %152 {offsets = [0, 16], sizes = [8, 8], strides = [1, 1]} : vector<8x32xbf16> to vector<8x8xbf16>
    %193 = vector.extract_strided_slice %154 {offsets = [16, 0], sizes = [8, 16], strides = [1, 1]} : vector<32x16xbf16> to vector<8x16xbf16>
    %cst_88 = arith.constant dense<0.000000e+00> : vector<8x16xf32>
    %194 = tpu.matmul %192, %193, %cst_88 {dimension_numbers = #tpu.dot_dimension_numbers<[1], [0], [0], [1], [0, 0, 1, 1], [], []>} : vector<8x8xbf16>, vector<8x16xbf16>, vector<8x16xf32> -> vector<8x16xf32>
    %cst_89 = arith.constant dense<0xFF800000> : vector<8xf32>
    %195 = vector.multi_reduction <maximumf>, %194, %cst_89 [1] : vector<8x16xf32> to vector<8xf32>
    %196 = vector.shape_cast %195 : vector<8xf32> to vector<8x1xf32>
    %197 = vector.broadcast %196 : vector<8x1xf32> to vector<8x16xf32>
    %198 = arith.subf %194, %197 : vector<8x16xf32>
    %199 = math.exp %198 : vector<8x16xf32>
    %cst_90 = arith.constant dense<0.000000e+00> : vector<8xf32>
    %200 = vector.multi_reduction <add>, %199, %cst_90 [1] : vector<8x16xf32> to vector<8xf32>
    %201 = vector.shape_cast %200 : vector<8xf32> to vector<8x1xf32>
    %202 = tpu.reciprocal %201 {approx = true} : vector<8x1xf32> -> vector<8x1xf32>
    %203 = vector.broadcast %202 : vector<8x1xf32> to vector<8x16xf32>
    %204 = arith.mulf %199, %203 : vector<8x16xf32>
    %205 = arith.truncf %204 : vector<8x16xf32> to vector<8x16xbf16>
    %206 = vector.extract_strided_slice %155 {offsets = [0, 16], sizes = [16, 8], strides = [1, 1]} : vector<16x32xbf16> to vector<16x8xbf16>
    %cst_91 = arith.constant dense<0.000000e+00> : vector<8x8xf32>
    %207 = tpu.matmul %205, %206, %cst_91 {dimension_numbers = #tpu.dot_dimension_numbers<[1], [0], [0], [1], [0, 0, 1, 1], [], []>} : vector<8x16xbf16>, vector<16x8xbf16>, vector<8x8xf32> -> vector<8x8xf32>
    %208 = arith.truncf %207 : vector<8x8xf32> to vector<8x8xbf16>
    %c0_92 = arith.constant 0 : index
    %c16_93 = arith.constant 16 : index
    %209 = vector.load %arg31[%c0_92, %c16_93] : memref<8x32xbf16, #tpu.memory_space<vmem>>, vector<8x8xbf16>
    tpu.vector_store %arg31[%c0_92, %c16_93], %208 {strides = array<i32>} : memref<8x32xbf16, #tpu.memory_space<vmem>>, vector<8x8xbf16>,
    %210 = vector.extract_strided_slice %152 {offsets = [0, 24], sizes = [8, 8], strides = [1, 1]} : vector<8x32xbf16> to vector<8x8xbf16>
    %211 = vector.extract_strided_slice %154 {offsets = [24, 0], sizes = [8, 16], strides = [1, 1]} : vector<32x16xbf16> to vector<8x16xbf16>
    %cst_94 = arith.constant dense<0.000000e+00> : vector<8x16xf32>
    %212 = tpu.matmul %210, %211, %cst_94 {dimension_numbers = #tpu.dot_dimension_numbers<[1], [0], [0], [1], [0, 0, 1, 1], [], []>} : vector<8x8xbf16>, vector<8x16xbf16>, vector<8x16xf32> -> vector<8x16xf32>
    %cst_95 = arith.constant dense<0xFF800000> : vector<8xf32>
    %213 = vector.multi_reduction <maximumf>, %212, %cst_95 [1] : vector<8x16xf32> to vector<8xf32>
    %214 = vector.shape_cast %213 : vector<8xf32> to vector<8x1xf32>
    %215 = vector.broadcast %214 : vector<8x1xf32> to vector<8x16xf32>
    %216 = arith.subf %212, %215 : vector<8x16xf32>
    %217 = math.exp %216 : vector<8x16xf32>
    %cst_96 = arith.constant dense<0.000000e+00> : vector<8xf32>
    %218 = vector.multi_reduction <add>, %217, %cst_96 [1] : vector<8x16xf32> to vector<8xf32>
    %219 = vector.shape_cast %218 : vector<8xf32> to vector<8x1xf32>
    %220 = tpu.reciprocal %219 {approx = true} : vector<8x1xf32> -> vector<8x1xf32>
    %221 = vector.broadcast %220 : vector<8x1xf32> to vector<8x16xf32>
    %222 = arith.mulf %217, %221 : vector<8x16xf32>
    %223 = arith.truncf %222 : vector<8x16xf32> to vector<8x16xbf16>
    %224 = vector.extract_strided_slice %155 {offsets = [0, 24], sizes = [16, 8], strides = [1, 1]} : vector<16x32xbf16> to vector<16x8xbf16>
    %cst_97 = arith.constant dense<0.000000e+00> : vector<8x8xf32>
    %225 = tpu.matmul %223, %224, %cst_97 {dimension_numbers = #tpu.dot_dimension_numbers<[1], [0], [0], [1], [0, 0, 1, 1], [], []>} : vector<8x16xbf16>, vector<16x8xbf16>, vector<8x8xf32> -> vector<8x8xf32>
    %226 = arith.truncf %225 : vector<8x8xf32> to vector<8x8xbf16>
    %c0_98 = arith.constant 0 : index
    %c24_99 = arith.constant 24 : index
    %227 = vector.load %arg31[%c0_98, %c24_99] : memref<8x32xbf16, #tpu.memory_space<vmem>>, vector<8x8xbf16>
    tpu.vector_store %arg31[%c0_98, %c24_99], %226 {strides = array<i32>} : memref<8x32xbf16, #tpu.memory_space<vmem>>, vector<8x8xbf16>,
    %c0_100 = arith.constant 0 : index
    %c0_101 = arith.constant 0 : index
    %228 = vector.load %arg31[%c0_100, %c0_101] : memref<8x32xbf16, #tpu.memory_space<vmem>>, vector<8x32xbf16>
    %c0_102 = arith.constant 0 : index
    %c0_103 = arith.constant 0 : index
    %c0_104 = arith.constant 0 : index
    %229 = vector.load %arg15[%c0_102, %c0_103, %c0_104] : memref<1x32x32xbf16, #tpu.memory_space<vmem>>, vector<1x32x32xbf16>
    %230 = vector.shape_cast %229 : vector<1x32x32xbf16> to vector<32x32xbf16>
    %cst_105 = arith.constant dense<0.000000e+00> : vector<8x32xf32>
    %231 = tpu.matmul %228, %230, %cst_105 {dimension_numbers = #tpu.dot_dimension_numbers<[1], [0], [0], [1], [0, 0, 1, 1], [], []>} : vector<8x32xbf16>, vector<32x32xbf16>, vector<8x32xf32> -> vector<8x32xf32>
    %c0_106 = arith.constant 0 : index
    %c0_107 = arith.constant 0 : index
    %c0_108 = arith.constant 0 : index
    %232 = vector.load %arg16[%c0_106, %c0_107, %c0_108] : memref<1x1x32xf32, #tpu.memory_space<vmem>>, vector<1x1x32xf32>
    %233 = vector.shape_cast %232 : vector<1x1x32xf32> to vector<1x32xf32>
    %234 = vector.broadcast %233 : vector<1x32xf32> to vector<8x32xf32>
    %235 = arith.addf %231, %234 : vector<8x32xf32>
    %c0_109 = arith.constant 0 : index
    %c0_110 = arith.constant 0 : index
    %c0_111 = arith.constant 0 : index
    %236 = vector.load %arg23[%c0_109, %c0_110, %c0_111] : memref<1x1x32xf32, #tpu.memory_space<vmem>>, vector<1x1x32xf32>
    %237 = vector.shape_cast %236 : vector<1x1x32xf32> to vector<1x32xf32>
    %c0_112 = arith.constant 0 : index
    %c0_113 = arith.constant 0 : index
    %c0_114 = arith.constant 0 : index
    %238 = vector.load %arg24[%c0_112, %c0_113, %c0_114] : memref<1x1x32xf32, #tpu.memory_space<vmem>>, vector<1x1x32xf32>
    %239 = vector.shape_cast %238 : vector<1x1x32xf32> to vector<1x32xf32>
    %240 = arith.addf %125, %235 : vector<8x32xf32>
    %cst_115 = arith.constant dense<0.000000e+00> : vector<8xf32>
    %241 = vector.multi_reduction <add>, %240, %cst_115 [1] : vector<8x32xf32> to vector<8xf32>
    %242 = vector.shape_cast %241 : vector<8xf32> to vector<8x1xf32>
    %cst_116 = arith.constant 3.200000e+01 : f32
    %243 = vector.broadcast %cst_116 : f32 to vector<8x1xf32>
    %244 = arith.divf %242, %243 : vector<8x1xf32>
    %245 = vector.broadcast %244 : vector<8x1xf32> to vector<8x32xf32>
    %246 = arith.subf %240, %245 : vector<8x32xf32>
    %247 = arith.mulf %246, %246 : vector<8x32xf32>
    %cst_117 = arith.constant dense<0.000000e+00> : vector<8xf32>
    %248 = vector.multi_reduction <add>, %247, %cst_117 [1] : vector<8x32xf32> to vector<8xf32>
    %249 = vector.shape_cast %248 : vector<8xf32> to vector<8x1xf32>
    %cst_118 = arith.constant 3.200000e+01 : f32
    %250 = vector.broadcast %cst_118 : f32 to vector<8x1xf32>
    %251 = arith.divf %249, %250 : vector<8x1xf32>
    %252 = vector.broadcast %244 : vector<8x1xf32> to vector<8x32xf32>
    %253 = arith.subf %240, %252 : vector<8x32xf32>
    %cst_119 = arith.constant 9.99999974E-6 : f32
    %254 = vector.broadcast %cst_119 : f32 to vector<8x1xf32>
    %255 = arith.addf %251, %254 : vector<8x1xf32>
    %256 = math.rsqrt %255 : vector<8x1xf32>
    %257 = vector.broadcast %256 : vector<8x1xf32> to vector<8x32xf32>
    %258 = arith.mulf %253, %257 : vector<8x32xf32>
    %259 = vector.broadcast %237 : vector<1x32xf32> to vector<8x32xf32>
    %260 = arith.mulf %258, %259 : vector<8x32xf32>
    %261 = vector.broadcast %239 : vector<1x32xf32> to vector<8x32xf32>
    %262 = arith.addf %260, %261 : vector<8x32xf32>
    %263 = arith.truncf %262 : vector<8x32xf32> to vector<8x32xbf16>
    %c0_120 = arith.constant 0 : index
    %c0_121 = arith.constant 0 : index
    %c0_122 = arith.constant 0 : index
    %264 = vector.load %arg17[%c0_120, %c0_121, %c0_122] : memref<1x32x64xbf16, #tpu.memory_space<vmem>>, vector<1x32x64xbf16>
    %265 = vector.shape_cast %264 : vector<1x32x64xbf16> to vector<32x64xbf16>
    %cst_123 = arith.constant dense<0.000000e+00> : vector<8x64xf32>
    %266 = tpu.matmul %263, %265, %cst_123 {dimension_numbers = #tpu.dot_dimension_numbers<[1], [0], [0], [1], [0, 0, 1, 1], [], []>} : vector<8x32xbf16>, vector<32x64xbf16>, vector<8x64xf32> -> vector<8x64xf32>
    %c0_124 = arith.constant 0 : index
    %c0_125 = arith.constant 0 : index
    %c0_126 = arith.constant 0 : index
    %267 = vector.load %arg18[%c0_124, %c0_125, %c0_126] : memref<1x1x64xf32, #tpu.memory_space<vmem>>, vector<1x1x64xf32>
    %268 = vector.shape_cast %267 : vector<1x1x64xf32> to vector<1x64xf32>
    %269 = vector.broadcast %268 : vector<1x64xf32> to vector<8x64xf32>
    %270 = arith.addf %266, %269 : vector<8x64xf32>
    %cst_127 = arith.constant 0.000000e+00 : f32
    %271 = vector.broadcast %cst_127 : f32 to vector<8x64xf32>
    %272 = arith.maximumf %270, %271 : vector<8x64xf32>
    %273 = arith.truncf %272 : vector<8x64xf32> to vector<8x64xbf16>
    %c0_128 = arith.constant 0 : index
    %c0_129 = arith.constant 0 : index
    %c0_130 = arith.constant 0 : index
    %274 = vector.load %arg19[%c0_128, %c0_129, %c0_130] : memref<1x64x32xbf16, #tpu.memory_space<vmem>>, vector<1x64x32xbf16>
    %275 = vector.shape_cast %274 : vector<1x64x32xbf16> to vector<64x32xbf16>
    %cst_131 = arith.constant dense<0.000000e+00> : vector<8x32xf32>
    %276 = tpu.matmul %273, %275, %cst_131 {dimension_numbers = #tpu.dot_dimension_numbers<[1], [0], [0], [1], [0, 0, 1, 1], [], []>} : vector<8x64xbf16>, vector<64x32xbf16>, vector<8x32xf32> -> vector<8x32xf32>
    %c0_132 = arith.constant 0 : index
    %c0_133 = arith.constant 0 : index
    %c0_134 = arith.constant 0 : index
    %277 = vector.load %arg20[%c0_132, %c0_133, %c0_134] : memref<1x1x32xf32, #tpu.memory_space<vmem>>, vector<1x1x32xf32>
    %278 = vector.shape_cast %277 : vector<1x1x32xf32> to vector<1x32xf32>
    %279 = vector.broadcast %278 : vector<1x32xf32> to vector<8x32xf32>
    %280 = arith.addf %276, %279 : vector<8x32xf32>
    %c0_135 = arith.constant 0 : index
    %c0_136 = arith.constant 0 : index
    %c0_137 = arith.constant 0 : index
    %281 = vector.load %arg25[%c0_135, %c0_136, %c0_137] : memref<1x1x32xf32, #tpu.memory_space<vmem>>, vector<1x1x32xf32>
    %282 = vector.shape_cast %281 : vector<1x1x32xf32> to vector<1x32xf32>
    %c0_138 = arith.constant 0 : index
    %c0_139 = arith.constant 0 : index
    %c0_140 = arith.constant 0 : index
    %283 = vector.load %arg26[%c0_138, %c0_139, %c0_140] : memref<1x1x32xf32, #tpu.memory_space<vmem>>, vector<1x1x32xf32>
    %284 = vector.shape_cast %283 : vector<1x1x32xf32> to vector<1x32xf32>
    %285 = arith.addf %262, %280 : vector<8x32xf32>
    %cst_141 = arith.constant dense<0.000000e+00> : vector<8xf32>
    %286 = vector.multi_reduction <add>, %285, %cst_141 [1] : vector<8x32xf32> to vector<8xf32>
    %287 = vector.shape_cast %286 : vector<8xf32> to vector<8x1xf32>
    %cst_142 = arith.constant 3.200000e+01 : f32
    %288 = vector.broadcast %cst_142 : f32 to vector<8x1xf32>
    %289 = arith.divf %287, %288 : vector<8x1xf32>
    %290 = vector.broadcast %289 : vector<8x1xf32> to vector<8x32xf32>
    %291 = arith.subf %285, %290 : vector<8x32xf32>
    %292 = arith.mulf %291, %291 : vector<8x32xf32>
    %cst_143 = arith.constant dense<0.000000e+00> : vector<8xf32>
    %293 = vector.multi_reduction <add>, %292, %cst_143 [1] : vector<8x32xf32> to vector<8xf32>
    %294 = vector.shape_cast %293 : vector<8xf32> to vector<8x1xf32>
    %cst_144 = arith.constant 3.200000e+01 : f32
    %295 = vector.broadcast %cst_144 : f32 to vector<8x1xf32>
    %296 = arith.divf %294, %295 : vector<8x1xf32>
    %297 = vector.broadcast %289 : vector<8x1xf32> to vector<8x32xf32>
    %298 = arith.subf %285, %297 : vector<8x32xf32>
    %cst_145 = arith.constant 9.99999974E-6 : f32
    %299 = vector.broadcast %cst_145 : f32 to vector<8x1xf32>
    %300 = arith.addf %296, %299 : vector<8x1xf32>
    %301 = math.rsqrt %300 : vector<8x1xf32>
    %302 = vector.broadcast %301 : vector<8x1xf32> to vector<8x32xf32>
    %303 = arith.mulf %298, %302 : vector<8x32xf32>
    %304 = vector.broadcast %282 : vector<1x32xf32> to vector<8x32xf32>
    %305 = arith.mulf %303, %304 : vector<8x32xf32>
    %306 = vector.broadcast %284 : vector<1x32xf32> to vector<8x32xf32>
    %307 = arith.addf %305, %306 : vector<8x32xf32>
    %c0_146 = arith.constant 0 : index
    %c0_147 = arith.constant 0 : index
    %308 = vector.load %arg30[%c0_146, %c0_147] : memref<8x32xf32, #tpu.memory_space<vmem>>, vector<8x32xf32>
    tpu.vector_store %arg30[%c0_146, %c0_147], %307 {strides = array<i32>} : memref<8x32xf32, #tpu.memory_space<vmem>>, vector<8x32xf32>,
    %309 = arith.truncf %307 : vector<8x32xf32> to vector<8x32xbf16>
    %c0_148 = arith.constant 0 : index
    %c0_149 = arith.constant 0 : index
    %c0_150 = arith.constant 0 : index
    %310 = vector.load %arg29[%c0_148, %c0_149, %c0_150] : memref<1x8x32xbf16, #tpu.memory_space<vmem>>, vector<1x8x32xbf16>
    %311 = vector.shape_cast %310 : vector<1x8x32xbf16> to vector<8x32xbf16>
    %312 = vector.shape_cast %309 : vector<8x32xbf16> to vector<1x8x32xbf16>
    tpu.vector_store %arg29[%c0_148, %c0_149, %c0_150], %312 {strides = array<i32>} : memref<1x8x32xbf16, #tpu.memory_space<vmem>>, vector<1x8x32xbf16>,
    %c1_i32 = arith.constant 1 : i32
    %313 = arith.cmpi eq, %arg1, %c1_i32 : i32
    %314 = arith.extui %313 : i1 to i32
    %c0_i32_151 = arith.constant 0 : i32
    %315 = arith.cmpi ne, %314, %c0_i32_151 : i32
    scf.if %315 {
      %c0_152 = arith.constant 0 : index
      %c0_153 = arith.constant 0 : index
      %316 = vector.load %arg27[%c0_152, %c0_153] : memref<1x32xf32, #tpu.memory_space<vmem>>, vector<1x32xf32>
      %c0_154 = arith.constant 0 : index
      %c0_155 = arith.constant 0 : index
      %317 = vector.load %arg28[%c0_154, %c0_155] : memref<1x32xf32, #tpu.memory_space<vmem>>, vector<1x32xf32>
      %cst_156 = arith.constant dense<0.000000e+00> : vector<8xf32>
      %318 = vector.multi_reduction <add>, %307, %cst_156 [1] : vector<8x32xf32> to vector<8xf32>
      %319 = vector.shape_cast %318 : vector<8xf32> to vector<8x1xf32>
      %cst_157 = arith.constant 3.200000e+01 : f32
      %320 = vector.broadcast %cst_157 : f32 to vector<8x1xf32>
      %321 = arith.divf %319, %320 : vector<8x1xf32>
      %322 = vector.broadcast %321 : vector<8x1xf32> to vector<8x32xf32>
      %323 = arith.subf %307, %322 : vector<8x32xf32>
      %324 = arith.mulf %323, %323 : vector<8x32xf32>
      %cst_158 = arith.constant dense<0.000000e+00> : vector<8xf32>
      %325 = vector.multi_reduction <add>, %324, %cst_158 [1] : vector<8x32xf32> to vector<8xf32>
      %326 = vector.shape_cast %325 : vector<8xf32> to vector<8x1xf32>
      %cst_159 = arith.constant 3.200000e+01 : f32
      %327 = vector.broadcast %cst_159 : f32 to vector<8x1xf32>
      %328 = arith.divf %326, %327 : vector<8x1xf32>
      %329 = vector.broadcast %321 : vector<8x1xf32> to vector<8x32xf32>
      %330 = arith.subf %307, %329 : vector<8x32xf32>
      %cst_160 = arith.constant 9.99999974E-6 : f32
      %331 = vector.broadcast %cst_160 : f32 to vector<8x1xf32>
      %332 = arith.addf %328, %331 : vector<8x1xf32>
      %333 = math.rsqrt %332 : vector<8x1xf32>
      %334 = vector.broadcast %333 : vector<8x1xf32> to vector<8x32xf32>
      %335 = arith.mulf %330, %334 : vector<8x32xf32>
      %336 = vector.broadcast %316 : vector<1x32xf32> to vector<8x32xf32>
      %337 = arith.mulf %335, %336 : vector<8x32xf32>
      %338 = vector.broadcast %317 : vector<1x32xf32> to vector<8x32xf32>
      %339 = arith.addf %337, %338 : vector<8x32xf32>
      %340 = arith.truncf %339 : vector<8x32xf32> to vector<8x32xbf16>
      %c0_161 = arith.constant 0 : index
      %c0_162 = arith.constant 0 : index
      %c0_163 = arith.constant 0 : index
      %341 = vector.load %arg29[%c0_161, %c0_162, %c0_163] : memref<1x8x32xbf16, #tpu.memory_space<vmem>>, vector<1x8x32xbf16>
      %342 = vector.shape_cast %341 : vector<1x8x32xbf16> to vector<8x32xbf16>
      %343 = vector.shape_cast %340 : vector<8x32xbf16> to vector<1x8x32xbf16>
      tpu.vector_store %arg29[%c0_161, %c0_162, %c0_163], %343 {strides = array<i32>} : memref<1x8x32xbf16, #tpu.memory_space<vmem>>, vector<1x8x32xbf16>,
    } else {
    }
    return
  }
  func.func @transform_0(%arg0: i32, %arg1: i32) -> (i32, i32, i32) {
    %c0_i32 = arith.constant 0 : i32
    %c0_i32_0 = arith.constant 0 : i32
    %c0_i32_1 = arith.constant 0 : i32
    return %arg0, %c0_i32, %c0_i32_0 : i32, i32, i32
  }
  func.func @transform_1(%arg0: i32, %arg1: i32) -> (i32, i32, i32) {
    %c0_i32 = arith.constant 0 : i32
    %c0_i32_0 = arith.constant 0 : i32
    %c0_i32_1 = arith.constant 0 : i32
    return %arg0, %c0_i32, %c0_i32_0 : i32, i32, i32
  }
  func.func @transform_2(%arg0: i32, %arg1: i32) -> (i32, i32, i32) {
    %c0_i32 = arith.constant 0 : i32
    %c0_i32_0 = arith.constant 0 : i32
    %c0_i32_1 = arith.constant 0 : i32
    return %arg0, %c0_i32, %c0_i32_0 : i32, i32, i32
  }
  func.func @transform_3(%arg0: i32, %arg1: i32) -> (i32, i32, i32) {
    %c0_i32 = arith.constant 0 : i32
    %c0_i32_0 = arith.constant 0 : i32
    %c0_i32_1 = arith.constant 0 : i32
    return %arg1, %c0_i32, %c0_i32_0 : i32, i32, i32
  }
  func.func @transform_4(%arg0: i32, %arg1: i32) -> (i32, i32, i32) {
    %c0_i32 = arith.constant 0 : i32
    %c0_i32_0 = arith.constant 0 : i32
    %c0_i32_1 = arith.constant 0 : i32
    return %arg1, %c0_i32, %c0_i32_0 : i32, i32, i32
  }
  func.func @transform_5(%arg0: i32, %arg1: i32) -> (i32, i32, i32) {
    %c0_i32 = arith.constant 0 : i32
    %c0_i32_0 = arith.constant 0 : i32
    %c0_i32_1 = arith.constant 0 : i32
    return %arg1, %c0_i32, %c0_i32_0 : i32, i32, i32
  }
  func.func @transform_6(%arg0: i32, %arg1: i32) -> (i32, i32, i32) {
    %c0_i32 = arith.constant 0 : i32
    %c0_i32_0 = arith.constant 0 : i32
    %c0_i32_1 = arith.constant 0 : i32
    return %arg1, %c0_i32, %c0_i32_0 : i32, i32, i32
  }
  func.func @transform_7(%arg0: i32, %arg1: i32) -> (i32, i32, i32) {
    %c0_i32 = arith.constant 0 : i32
    %c0_i32_0 = arith.constant 0 : i32
    %c0_i32_1 = arith.constant 0 : i32
    return %arg1, %c0_i32, %c0_i32_0 : i32, i32, i32
  }
  func.func @transform_8(%arg0: i32, %arg1: i32) -> (i32, i32, i32) {
    %c0_i32 = arith.constant 0 : i32
    %c0_i32_0 = arith.constant 0 : i32
    %c0_i32_1 = arith.constant 0 : i32
    return %arg1, %c0_i32, %c0_i32_0 : i32, i32, i32
  }
  func.func @transform_9(%arg0: i32, %arg1: i32) -> (i32, i32, i32) {
    %c0_i32 = arith.constant 0 : i32
    %c0_i32_0 = arith.constant 0 : i32
    %c0_i32_1 = arith.constant 0 : i32
    return %arg1, %c0_i32, %c0_i32_0 : i32, i32, i32
  }
  func.func @transform_10(%arg0: i32, %arg1: i32) -> (i32, i32, i32) {
    %c0_i32 = arith.constant 0 : i32
    %c0_i32_0 = arith.constant 0 : i32
    %c0_i32_1 = arith.constant 0 : i32
    return %arg1, %c0_i32, %c0_i32_0 : i32, i32, i32
  }
  func.func @transform_11(%arg0: i32, %arg1: i32) -> (i32, i32, i32) {
    %c0_i32 = arith.constant 0 : i32
    %c0_i32_0 = arith.constant 0 : i32
    %c0_i32_1 = arith.constant 0 : i32
    return %arg1, %c0_i32, %c0_i32_0 : i32, i32, i32
  }
  func.func @transform_12(%arg0: i32, %arg1: i32) -> (i32, i32, i32) {
    %c0_i32 = arith.constant 0 : i32
    %c0_i32_0 = arith.constant 0 : i32
    %c0_i32_1 = arith.constant 0 : i32
    return %arg1, %c0_i32, %c0_i32_0 : i32, i32, i32
  }
  func.func @transform_13(%arg0: i32, %arg1: i32) -> (i32, i32, i32) {
    %c0_i32 = arith.constant 0 : i32
    %c0_i32_0 = arith.constant 0 : i32
    %c0_i32_1 = arith.constant 0 : i32
    return %arg1, %c0_i32, %c0_i32_0 : i32, i32, i32
  }
  func.func @transform_14(%arg0: i32, %arg1: i32) -> (i32, i32, i32) {
    %c0_i32 = arith.constant 0 : i32
    %c0_i32_0 = arith.constant 0 : i32
    %c0_i32_1 = arith.constant 0 : i32
    return %arg1, %c0_i32, %c0_i32_0 : i32, i32, i32
  }
  func.func @transform_15(%arg0: i32, %arg1: i32) -> (i32, i32, i32) {
    %c0_i32 = arith.constant 0 : i32
    %c0_i32_0 = arith.constant 0 : i32
    %c0_i32_1 = arith.constant 0 : i32
    return %arg1, %c0_i32, %c0_i32_0 : i32, i32, i32
  }
  func.func @transform_16(%arg0: i32, %arg1: i32) -> (i32, i32, i32) {
    %c0_i32 = arith.constant 0 : i32
    %c0_i32_0 = arith.constant 0 : i32
    %c0_i32_1 = arith.constant 0 : i32
    return %arg1, %c0_i32, %c0_i32_0 : i32, i32, i32
  }
  func.func @transform_17(%arg0: i32, %arg1: i32) -> (i32, i32, i32) {
    %c0_i32 = arith.constant 0 : i32
    %c0_i32_0 = arith.constant 0 : i32
    %c0_i32_1 = arith.constant 0 : i32
    return %arg1, %c0_i32, %c0_i32_0 : i32, i32, i32
  }
  func.func @transform_18(%arg0: i32, %arg1: i32) -> (i32, i32, i32) {
    %c0_i32 = arith.constant 0 : i32
    %c0_i32_0 = arith.constant 0 : i32
    %c0_i32_1 = arith.constant 0 : i32
    return %arg1, %c0_i32, %c0_i32_0 : i32, i32, i32
  }
  func.func @transform_19(%arg0: i32, %arg1: i32) -> (i32, i32, i32) {
    %c0_i32 = arith.constant 0 : i32
    %c0_i32_0 = arith.constant 0 : i32
    %c0_i32_1 = arith.constant 0 : i32
    return %arg1, %c0_i32, %c0_i32_0 : i32, i32, i32
  }
  func.func @transform_20(%arg0: i32, %arg1: i32) -> (i32, i32, i32) {
    %c0_i32 = arith.constant 0 : i32
    %c0_i32_0 = arith.constant 0 : i32
    %c0_i32_1 = arith.constant 0 : i32
    return %arg1, %c0_i32, %c0_i32_0 : i32, i32, i32
  }
  func.func @transform_21(%arg0: i32, %arg1: i32) -> (i32, i32, i32) {
    %c0_i32 = arith.constant 0 : i32
    %c0_i32_0 = arith.constant 0 : i32
    %c0_i32_1 = arith.constant 0 : i32
    return %arg1, %c0_i32, %c0_i32_0 : i32, i32, i32
  }
  func.func @transform_22(%arg0: i32, %arg1: i32) -> (i32, i32, i32) {
    %c0_i32 = arith.constant 0 : i32
    %c0_i32_0 = arith.constant 0 : i32
    %c0_i32_1 = arith.constant 0 : i32
    return %arg1, %c0_i32, %c0_i32_0 : i32, i32, i32
  }
  func.func @transform_23(%arg0: i32, %arg1: i32) -> (i32, i32, i32) {
    %c0_i32 = arith.constant 0 : i32
    %c0_i32_0 = arith.constant 0 : i32
    %c0_i32_1 = arith.constant 0 : i32
    return %arg1, %c0_i32, %c0_i32_0 : i32, i32, i32
  }
  func.func @transform_24(%arg0: i32, %arg1: i32) -> (i32, i32, i32) {
    %c0_i32 = arith.constant 0 : i32
    %c0_i32_0 = arith.constant 0 : i32
    %c0_i32_1 = arith.constant 0 : i32
    return %arg1, %c0_i32, %c0_i32_0 : i32, i32, i32
  }
  func.func @transform_25(%arg0: i32, %arg1: i32) -> (i32, i32) {
    %c0_i32 = arith.constant 0 : i32
    %c0_i32_0 = arith.constant 0 : i32
    %c0_i32_1 = arith.constant 0 : i32
    return %c0_i32, %c0_i32_0 : i32, i32
  }
  func.func @transform_26(%arg0: i32, %arg1: i32) -> (i32, i32) {
    %c0_i32 = arith.constant 0 : i32
    %c0_i32_0 = arith.constant 0 : i32
    %c0_i32_1 = arith.constant 0 : i32
    return %c0_i32, %c0_i32_0 : i32, i32
  }
  func.func @transform_27(%arg0: i32, %arg1: i32) -> (i32, i32, i32) {
    %c0_i32 = arith.constant 0 : i32
    %c0_i32_0 = arith.constant 0 : i32
    %c0_i32_1 = arith.constant 0 : i32
    return %arg0, %c0_i32, %c0_i32_0 : i32, i32, i32
  }
}

</mosaic_0001>

<llo_original>
// kernel: transformer_decoder.1
$region0: #{transformer_decoder.1}
  #allocation0 [shape = 'u32[]', space=smem, size = 0x4, offset = 0x4, fixed_abs, tag = 'smem constant byte address 0x4 - core index']
  #allocation1 [shape = 'u32[72,128]{1,0:T(1,128)}', space=vmem, size = 0x9000, scoped, tag = 'internal scratch']
  #allocation2 [shape = 'f32[8,32]{1,0:T(8,128)}', space=vmem, size = 0x1000, scoped, tag = 'scratch operand']
  #allocation3 [shape = 'bf16[8,32]{1,0:T(8,128)(2,1)}', space=vmem, size = 0x800, scoped, tag = 'scratch operand']
  %s0 = inlined_call_operand.vmem [shape: bf16[2,8,32], index: 0, kind: input, shape index: {}]
  %s1 = inlined_call_operand.vmem [shape: bf16[2,16,32], index: 1, kind: input, shape index: {}]
  %s2 = inlined_call_operand.vmem [shape: bf16[2,16,32], index: 2, kind: input, shape index: {}]
  %s3 = inlined_call_operand.vmem [shape: bf16[2,32,96], index: 3, kind: input, shape index: {}]
  %s4 = inlined_call_operand.vmem [shape: f32[2,1,96], index: 4, kind: input, shape index: {}]
  %s5 = inlined_call_operand.vmem [shape: bf16[2,32,32], index: 5, kind: input, shape index: {}]
  %s6 = inlined_call_operand.vmem [shape: f32[2,1,32], index: 6, kind: input, shape index: {}]
  %s7 = inlined_call_operand.vmem [shape: bf16[2,32,32], index: 7, kind: input, shape index: {}]
  %s8 = inlined_call_operand.vmem [shape: f32[2,1,32], index: 8, kind: input, shape index: {}]
  %s9 = inlined_call_operand.vmem [shape: bf16[2,32,32], index: 9, kind: input, shape index: {}]
  %s10 = inlined_call_operand.vmem [shape: f32[2,1,32], index: 10, kind: input, shape index: {}]
  %s11 = inlined_call_operand.vmem [shape: bf16[2,32,32], index: 11, kind: input, shape index: {}]
  %s12 = inlined_call_operand.vmem [shape: f32[2,1,32], index: 12, kind: input, shape index: {}]
  %s13 = inlined_call_operand.vmem [shape: bf16[2,32,32], index: 13, kind: input, shape index: {}]
  %s14 = inlined_call_operand.vmem [shape: f32[2,1,32], index: 14, kind: input, shape index: {}]
  %s15 = inlined_call_operand.vmem [shape: bf16[2,32,64], index: 15, kind: input, shape index: {}]
  %s16 = inlined_call_operand.vmem [shape: f32[2,1,64], index: 16, kind: input, shape index: {}]
  %s17 = inlined_call_operand.vmem [shape: bf16[2,64,32], index: 17, kind: input, shape index: {}]
  %s18 = inlined_call_operand.vmem [shape: f32[2,1,32], index: 18, kind: input, shape index: {}]
  %s19 = inlined_call_operand.vmem [shape: f32[2,1,32], index: 19, kind: input, shape index: {}]
  %s20 = inlined_call_operand.vmem [shape: f32[2,1,32], index: 20, kind: input, shape index: {}]
  %s21 = inlined_call_operand.vmem [shape: f32[2,1,32], index: 21, kind: input, shape index: {}]
  %s22 = inlined_call_operand.vmem [shape: f32[2,1,32], index: 22, kind: input, shape index: {}]
  %s23 = inlined_call_operand.vmem [shape: f32[2,1,32], index: 23, kind: input, shape index: {}]
  %s24 = inlined_call_operand.vmem [shape: f32[2,1,32], index: 24, kind: input, shape index: {}]
  %s25 = inlined_call_operand.vmem [shape: f32[1,32], index: 25, kind: input, shape index: {}]
  %s26 = inlined_call_operand.vmem [shape: f32[1,32], index: 26, kind: input, shape index: {}]
  %s27 = inlined_call_operand.vmem [shape: bf16[2,8,32], index: 27, kind: output, shape index: {}]
  %s28 = sld [smem:[#allocation0]]
  $region149: #{transformer_decoder.1} parent=0
    _
  %s30 = ssub.s32 1, %s28
  %s31 = scalar_select 0, %s30, %s28
  loop: start=0, step=1, limit=6
  $region2: #{transformer_decoder.1} parent=0 // loop_pre_header
    _
  $region3: #{transformer_decoder.1} parent=0 // loop_header
    %s33 = sphi 0, %s37
    %p34 = scmp.ge.s32.totalorder %s33, 6
    %s40 = sphi 0, %s52
    %s41 = sphi 0, %s48
    %s42 = sphi 0, %s40
    %s43 = sphi 0, %s41
    %s44 = sphi 0, %s42
    %s45 = sphi 0, %s43
    %s55 = sphi 0, %s57
    %s58 = sphi 0, %s55
    %s59 = sphi 0, %s58
    %s75 = sphi 0, %s59
    %s81 = sphi 0, %s83
    %s84 = sphi 0, %s81
    %s85 = sphi 0, %s84
    %s101 = sphi 0, %s85
    %s107 = sphi 0, %s109
    %s110 = sphi 0, %s107
    %s111 = sphi 0, %s110
    %s127 = sphi 0, %s111
    %s133 = sphi 0, %s135
    %s136 = sphi 0, %s133
    %s137 = sphi 0, %s136
    %s153 = sphi 0, %s137
    %s159 = sphi 0, %s161
    %s162 = sphi 0, %s159
    %s163 = sphi 0, %s162
    %s179 = sphi 0, %s163
    %s185 = sphi 0, %s187
    %s188 = sphi 0, %s185
    %s189 = sphi 0, %s188
    %s205 = sphi 0, %s189
    %s211 = sphi 0, %s213
    %s214 = sphi 0, %s211
    %s215 = sphi 0, %s214
    %s231 = sphi 0, %s215
    %s237 = sphi 0, %s239
    %s240 = sphi 0, %s237
    %s241 = sphi 0, %s240
    %s257 = sphi 0, %s241
    %s263 = sphi 0, %s265
    %s266 = sphi 0, %s263
    %s267 = sphi 0, %s266
    %s283 = sphi 0, %s267
    %s289 = sphi 0, %s291
    %s292 = sphi 0, %s289
    %s293 = sphi 0, %s292
    %s309 = sphi 0, %s293
    %s315 = sphi 0, %s317
    %s318 = sphi 0, %s315
    %s319 = sphi 0, %s318
    %s335 = sphi 0, %s319
    %s341 = sphi 0, %s343
    %s344 = sphi 0, %s341
    %s345 = sphi 0, %s344
    %s361 = sphi 0, %s345
    %s367 = sphi 0, %s369
    %s370 = sphi 0, %s367
    %s371 = sphi 0, %s370
    %s387 = sphi 0, %s371
    %s393 = sphi 0, %s395
    %s396 = sphi 0, %s393
    %s397 = sphi 0, %s396
    %s413 = sphi 0, %s397
    %s419 = sphi 0, %s421
    %s422 = sphi 0, %s419
    %s423 = sphi 0, %s422
    %s439 = sphi 0, %s423
    %s445 = sphi 0, %s447
    %s448 = sphi 0, %s445
    %s449 = sphi 0, %s448
    %s465 = sphi 0, %s449
    %s471 = sphi 0, %s473
    %s474 = sphi 0, %s471
    %s475 = sphi 0, %s474
    %s491 = sphi 0, %s475
    %s497 = sphi 0, %s499
    %s500 = sphi 0, %s497
    %s501 = sphi 0, %s500
    %s517 = sphi 0, %s501
    %s523 = sphi 0, %s525
    %s526 = sphi 0, %s523
    %s527 = sphi 0, %s526
    %s543 = sphi 0, %s527
    %s549 = sphi 0, %s551
    %s552 = sphi 0, %s549
    %s553 = sphi 0, %s552
    %s569 = sphi 0, %s553
    %s575 = sphi 0, %s577
    %s578 = sphi 0, %s575
    %s579 = sphi 0, %s578
    %s595 = sphi 0, %s579
    %s601 = sphi 0, %s603
    %s604 = sphi 0, %s601
    %s605 = sphi 0, %s604
    %s621 = sphi 0, %s605
    %s627 = sphi 0, %s629
    %s630 = sphi 0, %s627
    %s631 = sphi 0, %s630
    %s647 = sphi 0, %s631
    %s653 = sphi 0, %s655
    %s656 = sphi 0, %s653
    %s657 = sphi 0, %s656
    %s673 = sphi 0, %s657
    %s679 = sphi 0, %s681
    %s682 = sphi 0, %s679
    %s683 = sphi 0, %s682
    %s699 = sphi 0, %s683
    %s703 = sphi 0, %s703
    %s705 = sphi 0, %s703
    %s706 = sphi 0, %s705
    %s720 = sphi 0, %s706
    %s724 = sphi 0, %s724
    %s726 = sphi 0, %s724
    %s727 = sphi 0, %s726
    %s741 = sphi 0, %s727
    %s747 = sphi 0, %s749
    %s750 = sphi 0, %s747
    %s751 = sphi 0, %s750
    %s767 = sphi 0, %s751
  $region4: #{transformer_decoder.1} parent=0 // loop_header_branch
    %36 = sbr.rel (%p34) target = $region8
  $region5: #{transformer_decoder.1} parent=0 // loop_body
    %s38 = ssub.s32 %s33, 1
    %s39 = ssub.s32 %s33, 2
    %s46 = sadd.s32 1, %s41
    %p47 = scmp.ge.s32.totalorder %s46, 2
    %s48 = scalar_select %p47, 0, %s46
    %s49 = sadd.s32 1, %s40
    %s50 = scalar_select %p47, %s49, %s40
    %p51 = scmp.ge.s32.totalorder %s50, 2
    %s52 = scalar_select %p51, 0, %s50
    %s53 = ssub.s32 %s40, %s52
    %p54 = scmp.eq.s32.totalorder %s53, 0
    %s56 = sadd.s32 %s55, 1
    %s57 = scalar_select %p54, %s55, %s56
    %p60 = pneg %p54
    %p61 = scmp.eq.s32.totalorder %s33, 3
    %p62 = por %p60, %p61
    %p63 = scmp.ne.s32.totalorder %s55, %s58
    %p64 = scmp.eq.s32.totalorder %s33, 0
    %p65 = por %p63, %p64
    %p66 = scmp.ne.s32.totalorder %s55, %s58
    %p67 = scmp.eq.s32.totalorder %s38, 3
    %p68 = por %p66, %p67
    %p69 = scmp.ne.s32.totalorder %s58, %s59
    %p70 = scmp.eq.s32.totalorder %s38, 0
    %p71 = por %p69, %p70
    %p72 = scmp.ne.s32.totalorder %s58, %s59
    %p73 = scmp.eq.s32.totalorder %s39, 3
    %p74 = por %p72, %p73
    %p76 = scmp.ne.s32.totalorder %s59, %s75
    %p77 = scmp.eq.s32.totalorder %s39, 0
    %p78 = por %p76, %p77
    %s79 = ssub.s32 %s40, %s52
    %p80 = scmp.eq.s32.totalorder %s79, 0
    %s82 = sadd.s32 %s81, 1
    %s83 = scalar_select %p80, %s81, %s82
    %p86 = pneg %p80
    %p87 = scmp.eq.s32.totalorder %s33, 3
    %p88 = por %p86, %p87
    %p89 = scmp.ne.s32.totalorder %s81, %s84
    %p90 = scmp.eq.s32.totalorder %s33, 0
    %p91 = por %p89, %p90
    %p92 = scmp.ne.s32.totalorder %s81, %s84
    %p93 = scmp.eq.s32.totalorder %s38, 3
    %p94 = por %p92, %p93
    %p95 = scmp.ne.s32.totalorder %s84, %s85
    %p96 = scmp.eq.s32.totalorder %s38, 0
    %p97 = por %p95, %p96
    %p98 = scmp.ne.s32.totalorder %s84, %s85
    %p99 = scmp.eq.s32.totalorder %s39, 3
    %p100 = por %p98, %p99
    %p102 = scmp.ne.s32.totalorder %s85, %s101
    %p103 = scmp.eq.s32.totalorder %s39, 0
    %p104 = por %p102, %p103
    %s105 = ssub.s32 %s40, %s52
    %p106 = scmp.eq.s32.totalorder %s105, 0
    %s108 = sadd.s32 %s107, 1
    %s109 = scalar_select %p106, %s107, %s108
    %p112 = pneg %p106
    %p113 = scmp.eq.s32.totalorder %s33, 3
    %p114 = por %p112, %p113
    %p115 = scmp.ne.s32.totalorder %s107, %s110
    %p116 = scmp.eq.s32.totalorder %s33, 0
    %p117 = por %p115, %p116
    %p118 = scmp.ne.s32.totalorder %s107, %s110
    %p119 = scmp.eq.s32.totalorder %s38, 3
    %p120 = por %p118, %p119
    %p121 = scmp.ne.s32.totalorder %s110, %s111
    %p122 = scmp.eq.s32.totalorder %s38, 0
    %p123 = por %p121, %p122
    %p124 = scmp.ne.s32.totalorder %s110, %s111
    %p125 = scmp.eq.s32.totalorder %s39, 3
    %p126 = por %p124, %p125
    %p128 = scmp.ne.s32.totalorder %s111, %s127
    %p129 = scmp.eq.s32.totalorder %s39, 0
    %p130 = por %p128, %p129
    %s131 = ssub.s32 %s41, %s48
    %p132 = scmp.eq.s32.totalorder %s131, 0
    %s134 = sadd.s32 %s133, 1
    %s135 = scalar_select %p132, %s133, %s134
    %p138 = pneg %p132
    %p139 = scmp.eq.s32.totalorder %s33, 3
    %p140 = por %p138, %p139
    %p141 = scmp.ne.s32.totalorder %s133, %s136
    %p142 = scmp.eq.s32.totalorder %s33, 0
    %p143 = por %p141, %p142
    %p144 = scmp.ne.s32.totalorder %s133, %s136
    %p145 = scmp.eq.s32.totalorder %s38, 3
    %p146 = por %p144, %p145
    %p147 = scmp.ne.s32.totalorder %s136, %s137
    %p148 = scmp.eq.s32.totalorder %s38, 0
    %p149 = por %p147, %p148
    %p150 = scmp.ne.s32.totalorder %s136, %s137
    %p151 = scmp.eq.s32.totalorder %s39, 3
    %p152 = por %p150, %p151
    %p154 = scmp.ne.s32.totalorder %s137, %s153
    %p155 = scmp.eq.s32.totalorder %s39, 0
    %p156 = por %p154, %p155
    %s157 = ssub.s32 %s41, %s48
    %p158 = scmp.eq.s32.totalorder %s157, 0
    %s160 = sadd.s32 %s159, 1
    %s161 = scalar_select %p158, %s159, %s160
    %p164 = pneg %p158
    %p165 = scmp.eq.s32.totalorder %s33, 3
    %p166 = por %p164, %p165
    %p167 = scmp.ne.s32.totalorder %s159, %s162
    %p168 = scmp.eq.s32.totalorder %s33, 0
    %p169 = por %p167, %p168
    %p170 = scmp.ne.s32.totalorder %s159, %s162
    %p171 = scmp.eq.s32.totalorder %s38, 3
    %p172 = por %p170, %p171
    %p173 = scmp.ne.s32.totalorder %s162, %s163
    %p174 = scmp.eq.s32.totalorder %s38, 0
    %p175 = por %p173, %p174
    %p176 = scmp.ne.s32.totalorder %s162, %s163
    %p177 = scmp.eq.s32.totalorder %s39, 3
    %p178 = por %p176, %p177
    %p180 = scmp.ne.s32.totalorder %s163, %s179
    %p181 = scmp.eq.s32.totalorder %s39, 0
    %p182 = por %p180, %p181
    %s183 = ssub.s32 %s41, %s48
    %p184 = scmp.eq.s32.totalorder %s183, 0
    %s186 = sadd.s32 %s185, 1
    %s187 = scalar_select %p184, %s185, %s186
    %p190 = pneg %p184
    %p191 = scmp.eq.s32.totalorder %s33, 3
    %p192 = por %p190, %p191
    %p193 = scmp.ne.s32.totalorder %s185, %s188
    %p194 = scmp.eq.s32.totalorder %s33, 0
    %p195 = por %p193, %p194
    %p196 = scmp.ne.s32.totalorder %s185, %s188
    %p197 = scmp.eq.s32.totalorder %s38, 3
    %p198 = por %p196, %p197
    %p199 = scmp.ne.s32.totalorder %s188, %s189
    %p200 = scmp.eq.s32.totalorder %s38, 0
    %p201 = por %p199, %p200
    %p202 = scmp.ne.s32.totalorder %s188, %s189
    %p203 = scmp.eq.s32.totalorder %s39, 3
    %p204 = por %p202, %p203
    %p206 = scmp.ne.s32.totalorder %s189, %s205
    %p207 = scmp.eq.s32.totalorder %s39, 0
    %p208 = por %p206, %p207
    %s209 = ssub.s32 %s41, %s48
    %p210 = scmp.eq.s32.totalorder %s209, 0
    %s212 = sadd.s32 %s211, 1
    %s213 = scalar_select %p210, %s211, %s212
    %p216 = pneg %p210
    %p217 = scmp.eq.s32.totalorder %s33, 3
    %p218 = por %p216, %p217
    %p219 = scmp.ne.s32.totalorder %s211, %s214
    %p220 = scmp.eq.s32.totalorder %s33, 0
    %p221 = por %p219, %p220
    %p222 = scmp.ne.s32.totalorder %s211, %s214
    %p223 = scmp.eq.s32.totalorder %s38, 3
    %p224 = por %p222, %p223
    %p225 = scmp.ne.s32.totalorder %s214, %s215
    %p226 = scmp.eq.s32.totalorder %s38, 0
    %p227 = por %p225, %p226
    %p228 = scmp.ne.s32.totalorder %s214, %s215
    %p229 = scmp.eq.s32.totalorder %s39, 3
    %p230 = por %p228, %p229
    %p232 = scmp.ne.s32.totalorder %s215, %s231
    %p233 = scmp.eq.s32.totalorder %s39, 0
    %p234 = por %p232, %p233
    %s235 = ssub.s32 %s41, %s48
    %p236 = scmp.eq.s32.totalorder %s235, 0
    %s238 = sadd.s32 %s237, 1
    %s239 = scalar_select %p236, %s237, %s238
    %p242 = pneg %p236
    %p243 = scmp.eq.s32.totalorder %s33, 3
    %p244 = por %p242, %p243
    %p245 = scmp.ne.s32.totalorder %s237, %s240
    %p246 = scmp.eq.s32.totalorder %s33, 0
    %p247 = por %p245, %p246
    %p248 = scmp.ne.s32.totalorder %s237, %s240
    %p249 = scmp.eq.s32.totalorder %s38, 3
    %p250 = por %p248, %p249
    %p251 = scmp.ne.s32.totalorder %s240, %s241
    %p252 = scmp.eq.s32.totalorder %s38, 0
    %p253 = por %p251, %p252
    %p254 = scmp.ne.s32.totalorder %s240, %s241
    %p255 = scmp.eq.s32.totalorder %s39, 3
    %p256 = por %p254, %p255
    %p258 = scmp.ne.s32.totalorder %s241, %s257
    %p259 = scmp.eq.s32.totalorder %s39, 0
    %p260 = por %p258, %p259
    %s261 = ssub.s32 %s41, %s48
    %p262 = scmp.eq.s32.totalorder %s261, 0
    %s264 = sadd.s32 %s263, 1
    %s265 = scalar_select %p262, %s263, %s264
    %p268 = pneg %p262
    %p269 = scmp.eq.s32.totalorder %s33, 3
    %p270 = por %p268, %p269
    %p271 = scmp.ne.s32.totalorder %s263, %s266
    %p272 = scmp.eq.s32.totalorder %s33, 0
    %p273 = por %p271, %p272
    %p274 = scmp.ne.s32.totalorder %s263, %s266
    %p275 = scmp.eq.s32.totalorder %s38, 3
    %p276 = por %p274, %p275
    %p277 = scmp.ne.s32.totalorder %s266, %s267
    %p278 = scmp.eq.s32.totalorder %s38, 0
    %p279 = por %p277, %p278
    %p280 = scmp.ne.s32.totalorder %s266, %s267
    %p281 = scmp.eq.s32.totalorder %s39, 3
    %p282 = por %p280, %p281
    %p284 = scmp.ne.s32.totalorder %s267, %s283
    %p285 = scmp.eq.s32.totalorder %s39, 0
    %p286 = por %p284, %p285
    %s287 = ssub.s32 %s41, %s48
    %p288 = scmp.eq.s32.totalorder %s287, 0
    %s290 = sadd.s32 %s289, 1
    %s291 = scalar_select %p288, %s289, %s290
    %p294 = pneg %p288
    %p295 = scmp.eq.s32.totalorder %s33, 3
    %p296 = por %p294, %p295
    %p297 = scmp.ne.s32.totalorder %s289, %s292
    %p298 = scmp.eq.s32.totalorder %s33, 0
    %p299 = por %p297, %p298
    %p300 = scmp.ne.s32.totalorder %s289, %s292
    %p301 = scmp.eq.s32.totalorder %s38, 3
    %p302 = por %p300, %p301
    %p303 = scmp.ne.s32.totalorder %s292, %s293
    %p304 = scmp.eq.s32.totalorder %s38, 0
    %p305 = por %p303, %p304
    %p306 = scmp.ne.s32.totalorder %s292, %s293
    %p307 = scmp.eq.s32.totalorder %s39, 3
    %p308 = por %p306, %p307
    %p310 = scmp.ne.s32.totalorder %s293, %s309
    %p311 = scmp.eq.s32.totalorder %s39, 0
    %p312 = por %p310, %p311
    %s313 = ssub.s32 %s41, %s48
    %p314 = scmp.eq.s32.totalorder %s313, 0
    %s316 = sadd.s32 %s315, 1
    %s317 = scalar_select %p314, %s315, %s316
    %p320 = pneg %p314
    %p321 = scmp.eq.s32.totalorder %s33, 3
    %p322 = por %p320, %p321
    %p323 = scmp.ne.s32.totalorder %s315, %s318
    %p324 = scmp.eq.s32.totalorder %s33, 0
    %p325 = por %p323, %p324
    %p326 = scmp.ne.s32.totalorder %s315, %s318
    %p327 = scmp.eq.s32.totalorder %s38, 3
    %p328 = por %p326, %p327
    %p329 = scmp.ne.s32.totalorder %s318, %s319
    %p330 = scmp.eq.s32.totalorder %s38, 0
    %p331 = por %p329, %p330
    %p332 = scmp.ne.s32.totalorder %s318, %s319
    %p333 = scmp.eq.s32.totalorder %s39, 3
    %p334 = por %p332, %p333
    %p336 = scmp.ne.s32.totalorder %s319, %s335
    %p337 = scmp.eq.s32.totalorder %s39, 0
    %p338 = por %p336, %p337
    %s339 = ssub.s32 %s41, %s48
    %p340 = scmp.eq.s32.totalorder %s339, 0
    %s342 = sadd.s32 %s341, 1
    %s343 = scalar_select %p340, %s341, %s342
    %p346 = pneg %p340
    %p347 = scmp.eq.s32.totalorder %s33, 3
    %p348 = por %p346, %p347
    %p349 = scmp.ne.s32.totalorder %s341, %s344
    %p350 = scmp.eq.s32.totalorder %s33, 0
    %p351 = por %p349, %p350
    %p352 = scmp.ne.s32.totalorder %s341, %s344
    %p353 = scmp.eq.s32.totalorder %s38, 3
    %p354 = por %p352, %p353
    %p355 = scmp.ne.s32.totalorder %s344, %s345
    %p356 = scmp.eq.s32.totalorder %s38, 0
    %p357 = por %p355, %p356
    %p358 = scmp.ne.s32.totalorder %s344, %s345
    %p359 = scmp.eq.s32.totalorder %s39, 3
    %p360 = por %p358, %p359
    %p362 = scmp.ne.s32.totalorder %s345, %s361
    %p363 = scmp.eq.s32.totalorder %s39, 0
    %p364 = por %p362, %p363
    %s365 = ssub.s32 %s41, %s48
    %p366 = scmp.eq.s32.totalorder %s365, 0
    %s368 = sadd.s32 %s367, 1
    %s369 = scalar_select %p366, %s367, %s368
    %p372 = pneg %p366
    %p373 = scmp.eq.s32.totalorder %s33, 3
    %p374 = por %p372, %p373
    %p375 = scmp.ne.s32.totalorder %s367, %s370
    %p376 = scmp.eq.s32.totalorder %s33, 0
    %p377 = por %p375, %p376
    %p378 = scmp.ne.s32.totalorder %s367, %s370
    %p379 = scmp.eq.s32.totalorder %s38, 3
    %p380 = por %p378, %p379
    %p381 = scmp.ne.s32.totalorder %s370, %s371
    %p382 = scmp.eq.s32.totalorder %s38, 0
    %p383 = por %p381, %p382
    %p384 = scmp.ne.s32.totalorder %s370, %s371
    %p385 = scmp.eq.s32.totalorder %s39, 3
    %p386 = por %p384, %p385
    %p388 = scmp.ne.s32.totalorder %s371, %s387
    %p389 = scmp.eq.s32.totalorder %s39, 0
    %p390 = por %p388, %p389
    %s391 = ssub.s32 %s41, %s48
    %p392 = scmp.eq.s32.totalorder %s391, 0
    %s394 = sadd.s32 %s393, 1
    %s395 = scalar_select %p392, %s393, %s394
    %p398 = pneg %p392
    %p399 = scmp.eq.s32.totalorder %s33, 3
    %p400 = por %p398, %p399
    %p401 = scmp.ne.s32.totalorder %s393, %s396
    %p402 = scmp.eq.s32.totalorder %s33, 0
    %p403 = por %p401, %p402
    %p404 = scmp.ne.s32.totalorder %s393, %s396
    %p405 = scmp.eq.s32.totalorder %s38, 3
    %p406 = por %p404, %p405
    %p407 = scmp.ne.s32.totalorder %s396, %s397
    %p408 = scmp.eq.s32.totalorder %s38, 0
    %p409 = por %p407, %p408
    %p410 = scmp.ne.s32.totalorder %s396, %s397
    %p411 = scmp.eq.s32.totalorder %s39, 3
    %p412 = por %p410, %p411
    %p414 = scmp.ne.s32.totalorder %s397, %s413
    %p415 = scmp.eq.s32.totalorder %s39, 0
    %p416 = por %p414, %p415
    %s417 = ssub.s32 %s41, %s48
    %p418 = scmp.eq.s32.totalorder %s417, 0
    %s420 = sadd.s32 %s419, 1
    %s421 = scalar_select %p418, %s419, %s420
    %p424 = pneg %p418
    %p425 = scmp.eq.s32.totalorder %s33, 3
    %p426 = por %p424, %p425
    %p427 = scmp.ne.s32.totalorder %s419, %s422
    %p428 = scmp.eq.s32.totalorder %s33, 0
    %p429 = por %p427, %p428
    %p430 = scmp.ne.s32.totalorder %s419, %s422
    %p431 = scmp.eq.s32.totalorder %s38, 3
    %p432 = por %p430, %p431
    %p433 = scmp.ne.s32.totalorder %s422, %s423
    %p434 = scmp.eq.s32.totalorder %s38, 0
    %p435 = por %p433, %p434
    %p436 = scmp.ne.s32.totalorder %s422, %s423
    %p437 = scmp.eq.s32.totalorder %s39, 3
    %p438 = por %p436, %p437
    %p440 = scmp.ne.s32.totalorder %s423, %s439
    %p441 = scmp.eq.s32.totalorder %s39, 0
    %p442 = por %p440, %p441
    %s443 = ssub.s32 %s41, %s48
    %p444 = scmp.eq.s32.totalorder %s443, 0
    %s446 = sadd.s32 %s445, 1
    %s447 = scalar_select %p444, %s445, %s446
    %p450 = pneg %p444
    %p451 = scmp.eq.s32.totalorder %s33, 3
    %p452 = por %p450, %p451
    %p453 = scmp.ne.s32.totalorder %s445, %s448
    %p454 = scmp.eq.s32.totalorder %s33, 0
    %p455 = por %p453, %p454
    %p456 = scmp.ne.s32.totalorder %s445, %s448
    %p457 = scmp.eq.s32.totalorder %s38, 3
    %p458 = por %p456, %p457
    %p459 = scmp.ne.s32.totalorder %s448, %s449
    %p460 = scmp.eq.s32.totalorder %s38, 0
    %p461 = por %p459, %p460
    %p462 = scmp.ne.s32.totalorder %s448, %s449
    %p463 = scmp.eq.s32.totalorder %s39, 3
    %p464 = por %p462, %p463
    %p466 = scmp.ne.s32.totalorder %s449, %s465
    %p467 = scmp.eq.s32.totalorder %s39, 0
    %p468 = por %p466, %p467
    %s469 = ssub.s32 %s41, %s48
    %p470 = scmp.eq.s32.totalorder %s469, 0
    %s472 = sadd.s32 %s471, 1
    %s473 = scalar_select %p470, %s471, %s472
    %p476 = pneg %p470
    %p477 = scmp.eq.s32.totalorder %s33, 3
    %p478 = por %p476, %p477
    %p479 = scmp.ne.s32.totalorder %s471, %s474
    %p480 = scmp.eq.s32.totalorder %s33, 0
    %p481 = por %p479, %p480
    %p482 = scmp.ne.s32.totalorder %s471, %s474
    %p483 = scmp.eq.s32.totalorder %s38, 3
    %p484 = por %p482, %p483
    %p485 = scmp.ne.s32.totalorder %s474, %s475
    %p486 = scmp.eq.s32.totalorder %s38, 0
    %p487 = por %p485, %p486
    %p488 = scmp.ne.s32.totalorder %s474, %s475
    %p489 = scmp.eq.s32.totalorder %s39, 3
    %p490 = por %p488, %p489
    %p492 = scmp.ne.s32.totalorder %s475, %s491
    %p493 = scmp.eq.s32.totalorder %s39, 0
    %p494 = por %p492, %p493
    %s495 = ssub.s32 %s41, %s48
    %p496 = scmp.eq.s32.totalorder %s495, 0
    %s498 = sadd.s32 %s497, 1
    %s499 = scalar_select %p496, %s497, %s498
    %p502 = pneg %p496
    %p503 = scmp.eq.s32.totalorder %s33, 3
    %p504 = por %p502, %p503
    %p505 = scmp.ne.s32.totalorder %s497, %s500
    %p506 = scmp.eq.s32.totalorder %s33, 0
    %p507 = por %p505, %p506
    %p508 = scmp.ne.s32.totalorder %s497, %s500
    %p509 = scmp.eq.s32.totalorder %s38, 3
    %p510 = por %p508, %p509
    %p511 = scmp.ne.s32.totalorder %s500, %s501
    %p512 = scmp.eq.s32.totalorder %s38, 0
    %p513 = por %p511, %p512
    %p514 = scmp.ne.s32.totalorder %s500, %s501
    %p515 = scmp.eq.s32.totalorder %s39, 3
    %p516 = por %p514, %p515
    %p518 = scmp.ne.s32.totalorder %s501, %s517
    %p519 = scmp.eq.s32.totalorder %s39, 0
    %p520 = por %p518, %p519
    %s521 = ssub.s32 %s41, %s48
    %p522 = scmp.eq.s32.totalorder %s521, 0
    %s524 = sadd.s32 %s523, 1
    %s525 = scalar_select %p522, %s523, %s524
    %p528 = pneg %p522
    %p529 = scmp.eq.s32.totalorder %s33, 3
    %p530 = por %p528, %p529
    %p531 = scmp.ne.s32.totalorder %s523, %s526
    %p532 = scmp.eq.s32.totalorder %s33, 0
    %p533 = por %p531, %p532
    %p534 = scmp.ne.s32.totalorder %s523, %s526
    %p535 = scmp.eq.s32.totalorder %s38, 3
    %p536 = por %p534, %p535
    %p537 = scmp.ne.s32.totalorder %s526, %s527
    %p538 = scmp.eq.s32.totalorder %s38, 0
    %p539 = por %p537, %p538
    %p540 = scmp.ne.s32.totalorder %s526, %s527
    %p541 = scmp.eq.s32.totalorder %s39, 3
    %p542 = por %p540, %p541
    %p544 = scmp.ne.s32.totalorder %s527, %s543
    %p545 = scmp.eq.s32.totalorder %s39, 0
    %p546 = por %p544, %p545
    %s547 = ssub.s32 %s41, %s48
    %p548 = scmp.eq.s32.totalorder %s547, 0
    %s550 = sadd.s32 %s549, 1
    %s551 = scalar_select %p548, %s549, %s550
    %p554 = pneg %p548
    %p555 = scmp.eq.s32.totalorder %s33, 3
    %p556 = por %p554, %p555
    %p557 = scmp.ne.s32.totalorder %s549, %s552
    %p558 = scmp.eq.s32.totalorder %s33, 0
    %p559 = por %p557, %p558
    %p560 = scmp.ne.s32.totalorder %s549, %s552
    %p561 = scmp.eq.s32.totalorder %s38, 3
    %p562 = por %p560, %p561
    %p563 = scmp.ne.s32.totalorder %s552, %s553
    %p564 = scmp.eq.s32.totalorder %s38, 0
    %p565 = por %p563, %p564
    %p566 = scmp.ne.s32.totalorder %s552, %s553
    %p567 = scmp.eq.s32.totalorder %s39, 3
    %p568 = por %p566, %p567
    %p570 = scmp.ne.s32.totalorder %s553, %s569
    %p571 = scmp.eq.s32.totalorder %s39, 0
    %p572 = por %p570, %p571
    %s573 = ssub.s32 %s41, %s48
    %p574 = scmp.eq.s32.totalorder %s573, 0
    %s576 = sadd.s32 %s575, 1
    %s577 = scalar_select %p574, %s575, %s576
    %p580 = pneg %p574
    %p581 = scmp.eq.s32.totalorder %s33, 3
    %p582 = por %p580, %p581
    %p583 = scmp.ne.s32.totalorder %s575, %s578
    %p584 = scmp.eq.s32.totalorder %s33, 0
    %p585 = por %p583, %p584
    %p586 = scmp.ne.s32.totalorder %s575, %s578
    %p587 = scmp.eq.s32.totalorder %s38, 3
    %p588 = por %p586, %p587
    %p589 = scmp.ne.s32.totalorder %s578, %s579
    %p590 = scmp.eq.s32.totalorder %s38, 0
    %p591 = por %p589, %p590
    %p592 = scmp.ne.s32.totalorder %s578, %s579
    %p593 = scmp.eq.s32.totalorder %s39, 3
    %p594 = por %p592, %p593
    %p596 = scmp.ne.s32.totalorder %s579, %s595
    %p597 = scmp.eq.s32.totalorder %s39, 0
    %p598 = por %p596, %p597
    %s599 = ssub.s32 %s41, %s48
    %p600 = scmp.eq.s32.totalorder %s599, 0
    %s602 = sadd.s32 %s601, 1
    %s603 = scalar_select %p600, %s601, %s602
    %p606 = pneg %p600
    %p607 = scmp.eq.s32.totalorder %s33, 3
    %p608 = por %p606, %p607
    %p609 = scmp.ne.s32.totalorder %s601, %s604
    %p610 = scmp.eq.s32.totalorder %s33, 0
    %p611 = por %p609, %p610
    %p612 = scmp.ne.s32.totalorder %s601, %s604
    %p613 = scmp.eq.s32.totalorder %s38, 3
    %p614 = por %p612, %p613
    %p615 = scmp.ne.s32.totalorder %s604, %s605
    %p616 = scmp.eq.s32.totalorder %s38, 0
    %p617 = por %p615, %p616
    %p618 = scmp.ne.s32.totalorder %s604, %s605
    %p619 = scmp.eq.s32.totalorder %s39, 3
    %p620 = por %p618, %p619
    %p622 = scmp.ne.s32.totalorder %s605, %s621
    %p623 = scmp.eq.s32.totalorder %s39, 0
    %p624 = por %p622, %p623
    %s625 = ssub.s32 %s41, %s48
    %p626 = scmp.eq.s32.totalorder %s625, 0
    %s628 = sadd.s32 %s627, 1
    %s629 = scalar_select %p626, %s627, %s628
    %p632 = pneg %p626
    %p633 = scmp.eq.s32.totalorder %s33, 3
    %p634 = por %p632, %p633
    %p635 = scmp.ne.s32.totalorder %s627, %s630
    %p636 = scmp.eq.s32.totalorder %s33, 0
    %p637 = por %p635, %p636
    %p638 = scmp.ne.s32.totalorder %s627, %s630
    %p639 = scmp.eq.s32.totalorder %s38, 3
    %p640 = por %p638, %p639
    %p641 = scmp.ne.s32.totalorder %s630, %s631
    %p642 = scmp.eq.s32.totalorder %s38, 0
    %p643 = por %p641, %p642
    %p644 = scmp.ne.s32.totalorder %s630, %s631
    %p645 = scmp.eq.s32.totalorder %s39, 3
    %p646 = por %p644, %p645
    %p648 = scmp.ne.s32.totalorder %s631, %s647
    %p649 = scmp.eq.s32.totalorder %s39, 0
    %p650 = por %p648, %p649
    %s651 = ssub.s32 %s41, %s48
    %p652 = scmp.eq.s32.totalorder %s651, 0
    %s654 = sadd.s32 %s653, 1
    %s655 = scalar_select %p652, %s653, %s654
    %p658 = pneg %p652
    %p659 = scmp.eq.s32.totalorder %s33, 3
    %p660 = por %p658, %p659
    %p661 = scmp.ne.s32.totalorder %s653, %s656
    %p662 = scmp.eq.s32.totalorder %s33, 0
    %p663 = por %p661, %p662
    %p664 = scmp.ne.s32.totalorder %s653, %s656
    %p665 = scmp.eq.s32.totalorder %s38, 3
    %p666 = por %p664, %p665
    %p667 = scmp.ne.s32.totalorder %s656, %s657
    %p668 = scmp.eq.s32.totalorder %s38, 0
    %p669 = por %p667, %p668
    %p670 = scmp.ne.s32.totalorder %s656, %s657
    %p671 = scmp.eq.s32.totalorder %s39, 3
    %p672 = por %p670, %p671
    %p674 = scmp.ne.s32.totalorder %s657, %s673
    %p675 = scmp.eq.s32.totalorder %s39, 0
    %p676 = por %p674, %p675
    %s677 = ssub.s32 %s41, %s48
    %p678 = scmp.eq.s32.totalorder %s677, 0
    %s680 = sadd.s32 %s679, 1
    %s681 = scalar_select %p678, %s679, %s680
    %p684 = pneg %p678
    %p685 = scmp.eq.s32.totalorder %s33, 3
    %p686 = por %p684, %p685
    %p687 = scmp.ne.s32.totalorder %s679, %s682
    %p688 = scmp.eq.s32.totalorder %s33, 0
    %p689 = por %p687, %p688
    %p690 = scmp.ne.s32.totalorder %s679, %s682
    %p691 = scmp.eq.s32.totalorder %s38, 3
    %p692 = por %p690, %p691
    %p693 = scmp.ne.s32.totalorder %s682, %s683
    %p694 = scmp.eq.s32.totalorder %s38, 0
    %p695 = por %p693, %p694
    %p696 = scmp.ne.s32.totalorder %s682, %s683
    %p697 = scmp.eq.s32.totalorder %s39, 3
    %p698 = por %p696, %p697
    %p700 = scmp.ne.s32.totalorder %s683, %s699
    %p701 = scmp.eq.s32.totalorder %s39, 0
    %p702 = por %p700, %p701
    %s704 = sadd.s32 %s703, 1
    %p707 = scmp.eq.s32.totalorder %s33, 3
    %p708 = scmp.ne.s32.totalorder %s703, %s705
    %p709 = scmp.eq.s32.totalorder %s33, 0
    %p710 = por %p708, %p709
    %p711 = scmp.ne.s32.totalorder %s703, %s705
    %p712 = scmp.eq.s32.totalorder %s38, 3
    %p713 = por %p711, %p712
    %p714 = scmp.ne.s32.totalorder %s705, %s706
    %p715 = scmp.eq.s32.totalorder %s38, 0
    %p716 = por %p714, %p715
    %p717 = scmp.ne.s32.totalorder %s705, %s706
    %p718 = scmp.eq.s32.totalorder %s39, 3
    %p719 = por %p717, %p718
    %p721 = scmp.ne.s32.totalorder %s706, %s720
    %p722 = scmp.eq.s32.totalorder %s39, 0
    %p723 = por %p721, %p722
    %s725 = sadd.s32 %s724, 1
    %p728 = scmp.eq.s32.totalorder %s33, 3
    %p729 = scmp.ne.s32.totalorder %s724, %s726
    %p730 = scmp.eq.s32.totalorder %s33, 0
    %p731 = por %p729, %p730
    %p732 = scmp.ne.s32.totalorder %s724, %s726
    %p733 = scmp.eq.s32.totalorder %s38, 3
    %p734 = por %p732, %p733
    %p735 = scmp.ne.s32.totalorder %s726, %s727
    %p736 = scmp.eq.s32.totalorder %s38, 0
    %p737 = por %p735, %p736
    %p738 = scmp.ne.s32.totalorder %s726, %s727
    %p739 = scmp.eq.s32.totalorder %s39, 3
    %p740 = por %p738, %p739
    %p742 = scmp.ne.s32.totalorder %s727, %s741
    %p743 = scmp.eq.s32.totalorder %s39, 0
    %p744 = por %p742, %p743
    %s745 = ssub.s32 %s40, %s52
    %p746 = scmp.eq.s32.totalorder %s745, 0
    %s748 = sadd.s32 %s747, 1
    %s749 = scalar_select %p746, %s747, %s748
    %p752 = pneg %p746
    %p753 = scmp.eq.s32.totalorder %s33, 3
    %p754 = por %p752, %p753
    %p755 = scmp.ne.s32.totalorder %s747, %s750
    %p756 = scmp.eq.s32.totalorder %s33, 0
    %p757 = por %p755, %p756
    %p758 = scmp.ne.s32.totalorder %s747, %s750
    %p759 = scmp.eq.s32.totalorder %s38, 3
    %p760 = por %p758, %p759
    %p761 = scmp.ne.s32.totalorder %s750, %s751
    %p762 = scmp.eq.s32.totalorder %s38, 0
    %p763 = por %p761, %p762
    %p764 = scmp.ne.s32.totalorder %s750, %s751
    %p765 = scmp.eq.s32.totalorder %s39, 3
    %p766 = por %p764, %p765
    %p768 = scmp.ne.s32.totalorder %s751, %s767
    %p769 = scmp.eq.s32.totalorder %s39, 0
    %p770 = por %p768, %p769
    %p771 = scmp.le.s32.totalorder 1, %s33
    %p772 = scmp.lt.s32.totalorder %s33, 5
    %p773 = pnand %p771, %p772
    %p774 = pneg %p773
    // Predicated region
    $region9: #{transformer_decoder.1} parent=5 // pred_check
      _
    $region10: #{transformer_decoder.1} parent=5 // pred_check_branch
      %776 = sbr.rel (%p773) target = $region12
    $region11: #{transformer_decoder.1} parent=5 // pred_region
      %s777 = ssub.s32 %s33, 1
      // Predicated region
      $region13: #{transformer_decoder.1} parent=11 // pred_check
        %p778 = pneg %p716
      $region14: #{transformer_decoder.1} parent=11 // pred_check_branch
        %780 = sbr.rel (%p778) target = $region16
      $region15: #{transformer_decoder.1} parent=11 // pred_region
        _
      $region16: #{transformer_decoder.1} parent=11 // pred_fallthru
        _
      // Predicated region
      $region17: #{transformer_decoder.1} parent=11 // pred_check
        %p781 = pneg %p737
      $region18: #{transformer_decoder.1} parent=11 // pred_check_branch
        %783 = sbr.rel (%p781) target = $region20
      $region19: #{transformer_decoder.1} parent=11 // pred_region
        _
      $region20: #{transformer_decoder.1} parent=11 // pred_fallthru
        _
    $region12: #{transformer_decoder.1} parent=5 // pred_fallthru
      _
    %p784 = scmp.lt.s32.totalorder %s33, 4
    // Predicated region
    $region21: #{transformer_decoder.1} parent=5 // pred_check
      %p785 = pneg %p784
    $region22: #{transformer_decoder.1} parent=5 // pred_check_branch
      %787 = sbr.rel (%p785) target = $region24
    $region23: #{transformer_decoder.1} parent=5 // pred_region
      // Predicated region
      $region25: #{transformer_decoder.1} parent=23 // pred_check
        %p788 = pneg %p65
      $region26: #{transformer_decoder.1} parent=23 // pred_check_branch
        %790 = sbr.rel (%p788) target = $region28
      $region27: #{transformer_decoder.1} parent=23 // pred_region
        %p791 = scmp.lt.s32.totalorder %s40, 1
        %s792 = scalar_select %p791, %s40, 1
        %s793 = smul.addr %s792, 4
        %s794 = scalar_lea.vmem %s0, %s793
      $region28: #{transformer_decoder.1} parent=23 // pred_fallthru
        _
      // Predicated region
      $region29: #{transformer_decoder.1} parent=23 // pred_check
        %p795 = pneg %p91
      $region30: #{transformer_decoder.1} parent=23 // pred_check_branch
        %797 = sbr.rel (%p795) target = $region32
      $region31: #{transformer_decoder.1} parent=23 // pred_region
        %p798 = scmp.lt.s32.totalorder %s40, 1
        %s799 = scalar_select %p798, %s40, 1
        %s800 = smul.addr %s799, 2
        %s801 = smul.addr %s800, 4
        %s802 = scalar_lea.vmem %s1, %s801
      $region32: #{transformer_decoder.1} parent=23 // pred_fallthru
        _
      // Predicated region
      $region33: #{transformer_decoder.1} parent=23 // pred_check
        %p803 = pneg %p117
      $region34: #{transformer_decoder.1} parent=23 // pred_check_branch
        %805 = sbr.rel (%p803) target = $region36
      $region35: #{transformer_decoder.1} parent=23 // pred_region
        %p806 = scmp.lt.s32.totalorder %s40, 1
        %s807 = scalar_select %p806, %s40, 1
        %s808 = smul.addr %s807, 2
        %s809 = smul.addr %s808, 4
        %s810 = scalar_lea.vmem %s2, %s809
      $region36: #{transformer_decoder.1} parent=23 // pred_fallthru
        _
      // Predicated region
      $region37: #{transformer_decoder.1} parent=23 // pred_check
        %p811 = pneg %p143
      $region38: #{transformer_decoder.1} parent=23 // pred_check_branch
        %813 = sbr.rel (%p811) target = $region40
      $region39: #{transformer_decoder.1} parent=23 // pred_region
        %p814 = scmp.lt.s32.totalorder %s41, 1
        %s815 = scalar_select %p814, %s41, 1
        %s816 = smul.addr %s815, 4
        %s817 = smul.addr %s816, 4
        %s818 = scalar_lea.vmem %s3, %s817
      $region40: #{transformer_decoder.1} parent=23 // pred_fallthru
        _
      // Predicated region
      $region41: #{transformer_decoder.1} parent=23 // pred_check
        %p819 = pneg %p169
      $region42: #{transformer_decoder.1} parent=23 // pred_check_branch
        %821 = sbr.rel (%p819) target = $region44
      $region43: #{transformer_decoder.1} parent=23 // pred_region
        %p822 = scmp.lt.s32.totalorder %s41, 1
        %s823 = scalar_select %p822, %s41, 1
        %s824 = scalar_lea.vmem %s4, %s823
      $region44: #{transformer_decoder.1} parent=23 // pred_fallthru
        _
      // Predicated region
      $region45: #{transformer_decoder.1} parent=23 // pred_check
        %p825 = pneg %p195
      $region46: #{transformer_decoder.1} parent=23 // pred_check_branch
        %827 = sbr.rel (%p825) target = $region48
      $region47: #{transformer_decoder.1} parent=23 // pred_region
        %p828 = scmp.lt.s32.totalorder %s41, 1
        %s829 = scalar_select %p828, %s41, 1
        %s830 = smul.addr %s829, 4
        %s831 = smul.addr %s830, 4
        %s832 = scalar_lea.vmem %s5, %s831
      $region48: #{transformer_decoder.1} parent=23 // pred_fallthru
        _
      // Predicated region
      $region49: #{transformer_decoder.1} parent=23 // pred_check
        %p833 = pneg %p221
      $region50: #{transformer_decoder.1} parent=23 // pred_check_branch
        %835 = sbr.rel (%p833) target = $region52
      $region51: #{transformer_decoder.1} parent=23 // pred_region
        %p836 = scmp.lt.s32.totalorder %s41, 1
        %s837 = scalar_select %p836, %s41, 1
        %s838 = scalar_lea.vmem %s6, %s837
      $region52: #{transformer_decoder.1} parent=23 // pred_fallthru
        _
      // Predicated region
      $region53: #{transformer_decoder.1} parent=23 // pred_check
        %p839 = pneg %p247
      $region54: #{transformer_decoder.1} parent=23 // pred_check_branch
        %841 = sbr.rel (%p839) target = $region56
      $region55: #{transformer_decoder.1} parent=23 // pred_region
        %p842 = scmp.lt.s32.totalorder %s41, 1
        %s843 = scalar_select %p842, %s41, 1
        %s844 = smul.addr %s843, 4
        %s845 = smul.addr %s844, 4
        %s846 = scalar_lea.vmem %s7, %s845
      $region56: #{transformer_decoder.1} parent=23 // pred_fallthru
        _
      // Predicated region
      $region57: #{transformer_decoder.1} parent=23 // pred_check
        %p847 = pneg %p273
      $region58: #{transformer_decoder.1} parent=23 // pred_check_branch
        %849 = sbr.rel (%p847) target = $region60
      $region59: #{transformer_decoder.1} parent=23 // pred_region
        %p850 = scmp.lt.s32.totalorder %s41, 1
        %s851 = scalar_select %p850, %s41, 1
        %s852 = scalar_lea.vmem %s8, %s851
      $region60: #{transformer_decoder.1} parent=23 // pred_fallthru
        _
      // Predicated region
      $region61: #{transformer_decoder.1} parent=23 // pred_check
        %p853 = pneg %p299
      $region62: #{transformer_decoder.1} parent=23 // pred_check_branch
        %855 = sbr.rel (%p853) target = $region64
      $region63: #{transformer_decoder.1} parent=23 // pred_region
        %p856 = scmp.lt.s32.totalorder %s41, 1
        %s857 = scalar_select %p856, %s41, 1
        %s858 = smul.addr %s857, 4
        %s859 = smul.addr %s858, 4
        %s860 = scalar_lea.vmem %s9, %s859
      $region64: #{transformer_decoder.1} parent=23 // pred_fallthru
        _
      // Predicated region
      $region65: #{transformer_decoder.1} parent=23 // pred_check
        %p861 = pneg %p325
      $region66: #{transformer_decoder.1} parent=23 // pred_check_branch
        %863 = sbr.rel (%p861) target = $region68
      $region67: #{transformer_decoder.1} parent=23 // pred_region
        %p864 = scmp.lt.s32.totalorder %s41, 1
        %s865 = scalar_select %p864, %s41, 1
        %s866 = scalar_lea.vmem %s10, %s865
      $region68: #{transformer_decoder.1} parent=23 // pred_fallthru
        _
      // Predicated region
      $region69: #{transformer_decoder.1} parent=23 // pred_check
        %p867 = pneg %p351
      $region70: #{transformer_decoder.1} parent=23 // pred_check_branch
        %869 = sbr.rel (%p867) target = $region72
      $region71: #{transformer_decoder.1} parent=23 // pred_region
        %p870 = scmp.lt.s32.totalorder %s41, 1
        %s871 = scalar_select %p870, %s41, 1
        %s872 = smul.addr %s871, 4
        %s873 = smul.addr %s872, 4
        %s874 = scalar_lea.vmem %s11, %s873
      $region72: #{transformer_decoder.1} parent=23 // pred_fallthru
        _
      // Predicated region
      $region73: #{transformer_decoder.1} parent=23 // pred_check
        %p875 = pneg %p377
      $region74: #{transformer_decoder.1} parent=23 // pred_check_branch
        %877 = sbr.rel (%p875) target = $region76
      $region75: #{transformer_decoder.1} parent=23 // pred_region
        %p878 = scmp.lt.s32.totalorder %s41, 1
        %s879 = scalar_select %p878, %s41, 1
        %s880 = scalar_lea.vmem %s12, %s879
      $region76: #{transformer_decoder.1} parent=23 // pred_fallthru
        _
      // Predicated region
      $region77: #{transformer_decoder.1} parent=23 // pred_check
        %p881 = pneg %p403
      $region78: #{transformer_decoder.1} parent=23 // pred_check_branch
        %883 = sbr.rel (%p881) target = $region80
      $region79: #{transformer_decoder.1} parent=23 // pred_region
        %p884 = scmp.lt.s32.totalorder %s41, 1
        %s885 = scalar_select %p884, %s41, 1
        %s886 = smul.addr %s885, 4
        %s887 = smul.addr %s886, 4
        %s888 = scalar_lea.vmem %s13, %s887
      $region80: #{transformer_decoder.1} parent=23 // pred_fallthru
        _
      // Predicated region
      $region81: #{transformer_decoder.1} parent=23 // pred_check
        %p889 = pneg %p429
      $region82: #{transformer_decoder.1} parent=23 // pred_check_branch
        %891 = sbr.rel (%p889) target = $region84
      $region83: #{transformer_decoder.1} parent=23 // pred_region
        %p892 = scmp.lt.s32.totalorder %s41, 1
        %s893 = scalar_select %p892, %s41, 1
        %s894 = scalar_lea.vmem %s14, %s893
      $region84: #{transformer_decoder.1} parent=23 // pred_fallthru
        _
      // Predicated region
      $region85: #{transformer_decoder.1} parent=23 // pred_check
        %p895 = pneg %p455
      $region86: #{transformer_decoder.1} parent=23 // pred_check_branch
        %897 = sbr.rel (%p895) target = $region88
      $region87: #{transformer_decoder.1} parent=23 // pred_region
        %p898 = scmp.lt.s32.totalorder %s41, 1
        %s899 = scalar_select %p898, %s41, 1
        %s900 = smul.addr %s899, 4
        %s901 = smul.addr %s900, 4
        %s902 = scalar_lea.vmem %s15, %s901
      $region88: #{transformer_decoder.1} parent=23 // pred_fallthru
        _
      // Predicated region
      $region89: #{transformer_decoder.1} parent=23 // pred_check
        %p903 = pneg %p481
      $region90: #{transformer_decoder.1} parent=23 // pred_check_branch
        %905 = sbr.rel (%p903) target = $region92
      $region91: #{transformer_decoder.1} parent=23 // pred_region
        %p906 = scmp.lt.s32.totalorder %s41, 1
        %s907 = scalar_select %p906, %s41, 1
        %s908 = scalar_lea.vmem %s16, %s907
      $region92: #{transformer_decoder.1} parent=23 // pred_fallthru
        _
      // Predicated region
      $region93: #{transformer_decoder.1} parent=23 // pred_check
        %p909 = pneg %p507
      $region94: #{transformer_decoder.1} parent=23 // pred_check_branch
        %911 = sbr.rel (%p909) target = $region96
      $region95: #{transformer_decoder.1} parent=23 // pred_region
        %p912 = scmp.lt.s32.totalorder %s41, 1
        %s913 = scalar_select %p912, %s41, 1
        %s914 = smul.addr %s913, 8
        %s915 = smul.addr %s914, 4
        %s916 = scalar_lea.vmem %s17, %s915
      $region96: #{transformer_decoder.1} parent=23 // pred_fallthru
        _
      // Predicated region
      $region97: #{transformer_decoder.1} parent=23 // pred_check
        %p917 = pneg %p533
      $region98: #{transformer_decoder.1} parent=23 // pred_check_branch
        %919 = sbr.rel (%p917) target = $region100
      $region99: #{transformer_decoder.1} parent=23 // pred_region
        %p920 = scmp.lt.s32.totalorder %s41, 1
        %s921 = scalar_select %p920, %s41, 1
        %s922 = scalar_lea.vmem %s18, %s921
      $region100: #{transformer_decoder.1} parent=23 // pred_fallthru
        _
      // Predicated region
      $region101: #{transformer_decoder.1} parent=23 // pred_check
        %p923 = pneg %p559
      $region102: #{transformer_decoder.1} parent=23 // pred_check_branch
        %925 = sbr.rel (%p923) target = $region104
      $region103: #{transformer_decoder.1} parent=23 // pred_region
        %p926 = scmp.lt.s32.totalorder %s41, 1
        %s927 = scalar_select %p926, %s41, 1
        %s928 = scalar_lea.vmem %s19, %s927
      $region104: #{transformer_decoder.1} parent=23 // pred_fallthru
        _
      // Predicated region
      $region105: #{transformer_decoder.1} parent=23 // pred_check
        %p929 = pneg %p585
      $region106: #{transformer_decoder.1} parent=23 // pred_check_branch
        %931 = sbr.rel (%p929) target = $region108
      $region107: #{transformer_decoder.1} parent=23 // pred_region
        %p932 = scmp.lt.s32.totalorder %s41, 1
        %s933 = scalar_select %p932, %s41, 1
        %s934 = scalar_lea.vmem %s20, %s933
      $region108: #{transformer_decoder.1} parent=23 // pred_fallthru
        _
      // Predicated region
      $region109: #{transformer_decoder.1} parent=23 // pred_check
        %p935 = pneg %p611
      $region110: #{transformer_decoder.1} parent=23 // pred_check_branch
        %937 = sbr.rel (%p935) target = $region112
      $region111: #{transformer_decoder.1} parent=23 // pred_region
        %p938 = scmp.lt.s32.totalorder %s41, 1
        %s939 = scalar_select %p938, %s41, 1
        %s940 = scalar_lea.vmem %s21, %s939
      $region112: #{transformer_decoder.1} parent=23 // pred_fallthru
        _
      // Predicated region
      $region113: #{transformer_decoder.1} parent=23 // pred_check
        %p941 = pneg %p637
      $region114: #{transformer_decoder.1} parent=23 // pred_check_branch
        %943 = sbr.rel (%p941) target = $region116
      $region115: #{transformer_decoder.1} parent=23 // pred_region
        %p944 = scmp.lt.s32.totalorder %s41, 1
        %s945 = scalar_select %p944, %s41, 1
        %s946 = scalar_lea.vmem %s22, %s945
      $region116: #{transformer_decoder.1} parent=23 // pred_fallthru
        _
      // Predicated region
      $region117: #{transformer_decoder.1} parent=23 // pred_check
        %p947 = pneg %p663
      $region118: #{transformer_decoder.1} parent=23 // pred_check_branch
        %949 = sbr.rel (%p947) target = $region120
      $region119: #{transformer_decoder.1} parent=23 // pred_region
        %p950 = scmp.lt.s32.totalorder %s41, 1
        %s951 = scalar_select %p950, %s41, 1
        %s952 = scalar_lea.vmem %s23, %s951
      $region120: #{transformer_decoder.1} parent=23 // pred_fallthru
        _
      // Predicated region
      $region121: #{transformer_decoder.1} parent=23 // pred_check
        %p953 = pneg %p689
      $region122: #{transformer_decoder.1} parent=23 // pred_check_branch
        %955 = sbr.rel (%p953) target = $region124
      $region123: #{transformer_decoder.1} parent=23 // pred_region
        %p956 = scmp.lt.s32.totalorder %s41, 1
        %s957 = scalar_select %p956, %s41, 1
        %s958 = scalar_lea.vmem %s24, %s957
      $region124: #{transformer_decoder.1} parent=23 // pred_fallthru
        _
    $region24: #{transformer_decoder.1} parent=5 // pred_fallthru
      _
    %p959 = scmp.le.s32.totalorder 1, %s33
    %p960 = scmp.lt.s32.totalorder %s33, 5
    %p961 = pnand %p959, %p960
    %p962 = pneg %p961
    // Predicated region
    $region125: #{transformer_decoder.1} parent=5 // pred_check
      _
    $region126: #{transformer_decoder.1} parent=5 // pred_check_branch
      %964 = sbr.rel (%p961) target = $region128
    $region127: #{transformer_decoder.1} parent=5 // pred_region
      %s965 = ssub.s32 %s33, 1
      %p966 = scmp.lt.s32.totalorder %s42, 1
      %s967 = scalar_select %p966, %s42, 1
      %s968 = smul.addr %s967, 4
      %s969 = scalar_lea.vmem %s0, %s968
      %p970 = pneg %p71
      %p971 = pneg %p68
      %p972 = scmp.lt.s32.totalorder %s42, 1
      %s973 = scalar_select %p972, %s42, 1
      %s974 = smul.addr %s973, 2
      %s975 = smul.addr %s974, 4
      %s976 = scalar_lea.vmem %s1, %s975
      %p977 = pneg %p97
      %p978 = pneg %p94
      %p979 = scmp.lt.s32.totalorder %s42, 1
      %s980 = scalar_select %p979, %s42, 1
      %s981 = smul.addr %s980, 2
      %s982 = smul.addr %s981, 4
      %s983 = scalar_lea.vmem %s2, %s982
      %p984 = pneg %p123
      %p985 = pneg %p120
      %p986 = scmp.lt.s32.totalorder %s43, 1
      %s987 = scalar_select %p986, %s43, 1
      %s988 = smul.addr %s987, 4
      %s989 = smul.addr %s988, 4
      %s990 = scalar_lea.vmem %s3, %s989
      %p991 = pneg %p149
      %p992 = pneg %p146
      %p993 = scmp.lt.s32.totalorder %s43, 1
      %s994 = scalar_select %p993, %s43, 1
      %s995 = scalar_lea.vmem %s4, %s994
      %p996 = pneg %p175
      %p997 = pneg %p172
      %p998 = scmp.lt.s32.totalorder %s43, 1
      %s999 = scalar_select %p998, %s43, 1
      %s1000 = smul.addr %s999, 4
      %s1001 = smul.addr %s1000, 4
      %s1002 = scalar_lea.vmem %s5, %s1001
      %p1003 = pneg %p201
      %p1004 = pneg %p198
      %p1005 = scmp.lt.s32.totalorder %s43, 1
      %s1006 = scalar_select %p1005, %s43, 1
      %s1007 = scalar_lea.vmem %s6, %s1006
      %p1008 = pneg %p227
      %p1009 = pneg %p224
      %p1010 = scmp.lt.s32.totalorder %s43, 1
      %s1011 = scalar_select %p1010, %s43, 1
      %s1012 = smul.addr %s1011, 4
      %s1013 = smul.addr %s1012, 4
      %s1014 = scalar_lea.vmem %s7, %s1013
      %p1015 = pneg %p253
      %p1016 = pneg %p250
      %p1017 = scmp.lt.s32.totalorder %s43, 1
      %s1018 = scalar_select %p1017, %s43, 1
      %s1019 = scalar_lea.vmem %s8, %s1018
      %p1020 = pneg %p279
      %p1021 = pneg %p276
      %p1022 = scmp.lt.s32.totalorder %s43, 1
      %s1023 = scalar_select %p1022, %s43, 1
      %s1024 = smul.addr %s1023, 4
      %s1025 = smul.addr %s1024, 4
      %s1026 = scalar_lea.vmem %s9, %s1025
      %p1027 = pneg %p305
      %p1028 = pneg %p302
      %p1029 = scmp.lt.s32.totalorder %s43, 1
      %s1030 = scalar_select %p1029, %s43, 1
      %s1031 = scalar_lea.vmem %s10, %s1030
      %p1032 = pneg %p331
      %p1033 = pneg %p328
      %p1034 = scmp.lt.s32.totalorder %s43, 1
      %s1035 = scalar_select %p1034, %s43, 1
      %s1036 = smul.addr %s1035, 4
      %s1037 = smul.addr %s1036, 4
      %s1038 = scalar_lea.vmem %s11, %s1037
      %p1039 = pneg %p357
      %p1040 = pneg %p354
      %p1041 = scmp.lt.s32.totalorder %s43, 1
      %s1042 = scalar_select %p1041, %s43, 1
      %s1043 = scalar_lea.vmem %s12, %s1042
      %p1044 = pneg %p383
      %p1045 = pneg %p380
      %p1046 = scmp.lt.s32.totalorder %s43, 1
      %s1047 = scalar_select %p1046, %s43, 1
      %s1048 = smul.addr %s1047, 4
      %s1049 = smul.addr %s1048, 4
      %s1050 = scalar_lea.vmem %s13, %s1049
      %p1051 = pneg %p409
      %p1052 = pneg %p406
      %p1053 = scmp.lt.s32.totalorder %s43, 1
      %s1054 = scalar_select %p1053, %s43, 1
      %s1055 = scalar_lea.vmem %s14, %s1054
      %p1056 = pneg %p435
      %p1057 = pneg %p432
      %p1058 = scmp.lt.s32.totalorder %s43, 1
      %s1059 = scalar_select %p1058, %s43, 1
      %s1060 = smul.addr %s1059, 4
      %s1061 = smul.addr %s1060, 4
      %s1062 = scalar_lea.vmem %s15, %s1061
      %p1063 = pneg %p461
      %p1064 = pneg %p458
      %p1065 = scmp.lt.s32.totalorder %s43, 1
      %s1066 = scalar_select %p1065, %s43, 1
      %s1067 = scalar_lea.vmem %s16, %s1066
      %p1068 = pneg %p487
      %p1069 = pneg %p484
      %p1070 = scmp.lt.s32.totalorder %s43, 1
      %s1071 = scalar_select %p1070, %s43, 1
      %s1072 = smul.addr %s1071, 8
      %s1073 = smul.addr %s1072, 4
      %s1074 = scalar_lea.vmem %s17, %s1073
      %p1075 = pneg %p513
      %p1076 = pneg %p510
      %p1077 = scmp.lt.s32.totalorder %s43, 1
      %s1078 = scalar_select %p1077, %s43, 1
      %s1079 = scalar_lea.vmem %s18, %s1078
      %p1080 = pneg %p539
      %p1081 = pneg %p536
      %p1082 = scmp.lt.s32.totalorder %s43, 1
      %s1083 = scalar_select %p1082, %s43, 1
      %s1084 = scalar_lea.vmem %s19, %s1083
      %p1085 = pneg %p565
      %p1086 = pneg %p562
      %p1087 = scmp.lt.s32.totalorder %s43, 1
      %s1088 = scalar_select %p1087, %s43, 1
      %s1089 = scalar_lea.vmem %s20, %s1088
      %p1090 = pneg %p591
      %p1091 = pneg %p588
      %p1092 = scmp.lt.s32.totalorder %s43, 1
      %s1093 = scalar_select %p1092, %s43, 1
      %s1094 = scalar_lea.vmem %s21, %s1093
      %p1095 = pneg %p617
      %p1096 = pneg %p614
      %p1097 = scmp.lt.s32.totalorder %s43, 1
      %s1098 = scalar_select %p1097, %s43, 1
      %s1099 = scalar_lea.vmem %s22, %s1098
      %p1100 = pneg %p643
      %p1101 = pneg %p640
      %p1102 = scmp.lt.s32.totalorder %s43, 1
      %s1103 = scalar_select %p1102, %s43, 1
      %s1104 = scalar_lea.vmem %s23, %s1103
      %p1105 = pneg %p669
      %p1106 = pneg %p666
      %p1107 = scmp.lt.s32.totalorder %s43, 1
      %s1108 = scalar_select %p1107, %s43, 1
      %s1109 = scalar_lea.vmem %s24, %s1108
      %p1110 = pneg %p695
      %p1111 = pneg %p692
      %p1112 = pneg %p716
      %p1113 = pneg %p713
      %p1114 = pneg %p737
      %p1115 = pneg %p734
      %p1116 = pneg %p763
      %p1117 = pneg %p760
      %p1118 = scmp.lt.s32.totalorder %s42, 1
      %s1119 = scalar_select %p1118, %s42, 1
      %s1120 = smul.addr %s1119, 4
      %s1121 = scalar_lea.vmem %s27, %s1120
      %p1122 = scmp.lt.s32.totalorder %s42, 1
      %s1123 = scalar_select %p1122, %s42, 1
      %s1124 = smul.addr %s1123, 4
      %s1125 = scalar_lea.vmem %s0, %s1124
      %p1126 = scmp.lt.s32.totalorder %s42, 1
      %s1127 = scalar_select %p1126, %s42, 1
      %s1128 = smul.addr %s1127, 2
      %s1129 = smul.addr %s1128, 4
      %s1130 = scalar_lea.vmem %s1, %s1129
      %p1131 = scmp.lt.s32.totalorder %s42, 1
      %s1132 = scalar_select %p1131, %s42, 1
      %s1133 = smul.addr %s1132, 2
      %s1134 = smul.addr %s1133, 4
      %s1135 = scalar_lea.vmem %s2, %s1134
      %p1136 = scmp.lt.s32.totalorder %s43, 1
      %s1137 = scalar_select %p1136, %s43, 1
      %s1138 = smul.addr %s1137, 4
      %s1139 = smul.addr %s1138, 4
      %s1140 = scalar_lea.vmem %s3, %s1139
      %p1141 = scmp.lt.s32.totalorder %s43, 1
      %s1142 = scalar_select %p1141, %s43, 1
      %s1143 = scalar_lea.vmem %s4, %s1142
      %p1144 = scmp.lt.s32.totalorder %s43, 1
      %s1145 = scalar_select %p1144, %s43, 1
      %s1146 = smul.addr %s1145, 4
      %s1147 = smul.addr %s1146, 4
      %s1148 = scalar_lea.vmem %s5, %s1147
      %p1149 = scmp.lt.s32.totalorder %s43, 1
      %s1150 = scalar_select %p1149, %s43, 1
      %s1151 = scalar_lea.vmem %s6, %s1150
      %p1152 = scmp.lt.s32.totalorder %s43, 1
      %s1153 = scalar_select %p1152, %s43, 1
      %s1154 = smul.addr %s1153, 4
      %s1155 = smul.addr %s1154, 4
      %s1156 = scalar_lea.vmem %s7, %s1155
      %p1157 = scmp.lt.s32.totalorder %s43, 1
      %s1158 = scalar_select %p1157, %s43, 1
      %s1159 = scalar_lea.vmem %s8, %s1158
      %p1160 = scmp.lt.s32.totalorder %s43, 1
      %s1161 = scalar_select %p1160, %s43, 1
      %s1162 = smul.addr %s1161, 4
      %s1163 = smul.addr %s1162, 4
      %s1164 = scalar_lea.vmem %s9, %s1163
      %p1165 = scmp.lt.s32.totalorder %s43, 1
      %s1166 = scalar_select %p1165, %s43, 1
      %s1167 = scalar_lea.vmem %s10, %s1166
      %p1168 = scmp.lt.s32.totalorder %s43, 1
      %s1169 = scalar_select %p1168, %s43, 1
      %s1170 = smul.addr %s1169, 4
      %s1171 = smul.addr %s1170, 4
      %s1172 = scalar_lea.vmem %s11, %s1171
      %p1173 = scmp.lt.s32.totalorder %s43, 1
      %s1174 = scalar_select %p1173, %s43, 1
      %s1175 = scalar_lea.vmem %s12, %s1174
      %p1176 = scmp.lt.s32.totalorder %s43, 1
      %s1177 = scalar_select %p1176, %s43, 1
      %s1178 = smul.addr %s1177, 4
      %s1179 = smul.addr %s1178, 4
      %s1180 = scalar_lea.vmem %s13, %s1179
      %p1181 = scmp.lt.s32.totalorder %s43, 1
      %s1182 = scalar_select %p1181, %s43, 1
      %s1183 = scalar_lea.vmem %s14, %s1182
      %p1184 = scmp.lt.s32.totalorder %s43, 1
      %s1185 = scalar_select %p1184, %s43, 1
      %s1186 = smul.addr %s1185, 4
      %s1187 = smul.addr %s1186, 4
      %s1188 = scalar_lea.vmem %s15, %s1187
      %p1189 = scmp.lt.s32.totalorder %s43, 1
      %s1190 = scalar_select %p1189, %s43, 1
      %s1191 = scalar_lea.vmem %s16, %s1190
      %p1192 = scmp.lt.s32.totalorder %s43, 1
      %s1193 = scalar_select %p1192, %s43, 1
      %s1194 = smul.addr %s1193, 8
      %s1195 = smul.addr %s1194, 4
      %s1196 = scalar_lea.vmem %s17, %s1195
      %p1197 = scmp.lt.s32.totalorder %s43, 1
      %s1198 = scalar_select %p1197, %s43, 1
      %s1199 = scalar_lea.vmem %s18, %s1198
      %p1200 = scmp.lt.s32.totalorder %s43, 1
      %s1201 = scalar_select %p1200, %s43, 1
      %s1202 = scalar_lea.vmem %s19, %s1201
      %p1203 = scmp.lt.s32.totalorder %s43, 1
      %s1204 = scalar_select %p1203, %s43, 1
      %s1205 = scalar_lea.vmem %s20, %s1204
      %p1206 = scmp.lt.s32.totalorder %s43, 1
      %s1207 = scalar_select %p1206, %s43, 1
      %s1208 = scalar_lea.vmem %s21, %s1207
      %p1209 = scmp.lt.s32.totalorder %s43, 1
      %s1210 = scalar_select %p1209, %s43, 1
      %s1211 = scalar_lea.vmem %s22, %s1210
      %p1212 = scmp.lt.s32.totalorder %s43, 1
      %s1213 = scalar_select %p1212, %s43, 1
      %s1214 = scalar_lea.vmem %s23, %s1213
      %p1215 = scmp.lt.s32.totalorder %s43, 1
      %s1216 = scalar_select %p1215, %s43, 1
      %s1217 = scalar_lea.vmem %s24, %s1216
      %p1218 = scmp.lt.s32.totalorder %s42, 1
      %s1219 = scalar_select %p1218, %s42, 1
      %s1220 = smul.addr %s1219, 4
      %s1221 = scalar_lea.vmem %s27, %s1220
      %p1223 = scmp.eq.s32.totalorder %s43, 0
      // Predicated region
      $region129: #{transformer_decoder.1} parent=127 // pred_check
        %p1224 = pneg %p1223
      $region130: #{transformer_decoder.1} parent=127 // pred_check_branch
        %1226 = sbr.rel (%p1224) target = $region132
      $region131: #{transformer_decoder.1} parent=127 // pred_region
        %v1227 = vld [vmem:[%s1125] sm:$0xf]
        %v1228 = vunpack.c.l.bf16 %v1227
        %vm1229 = vcmask 261120
        %1230 = vst.msk [vmem:[#allocation2] sm:$0xff] %vm1229, %v1228
      $region132: #{transformer_decoder.1} parent=127 // pred_fallthru
        _
      %v1231 = vld [vmem:[#allocation2] sm:$0xff]
      %v1232 = vpack.c.bf16 %v1231, %v1231
      %v1233 = vld [vmem:[%s1140] sm:$0xf]
      %v1234 = vld [vmem:[%s1140 + $0x4] sm:$0xf]
      %v1235 = vld [vmem:[%s1140 + $0x8] sm:$0xf]
      %v1236 = vld [vmem:[%s1140 + $0xc] sm:$0xf]
      %v1237 = vld [vmem:[%s1143] sm:$0x1]
      %v1239 = vperm.slane %v1237, 0
      %v1245 = vunpack.c.l.b16 %v1233
      %v1246 = vunpack.c.l.b16 %v1234
      %v1247 = vunpack.c.l.b16 %v1235
      %v1248 = vunpack.c.l.b16 %v1236
      %v1249 = vpack.c.b16 %v1246, %v1245
      %v1250 = vpack.c.b16 %v1248, %v1247
      %vm1253 = vcmask 261120
      %v1255 = vsel %vm1253, %v1232, 0
      %1257 = vmatpush.bf16.msra.mxu0 0
      %1258 = vmatpush.bf16.msra.mxu0 0
      %1259 = vmatpush.bf16.msra.mxu0 0
      %1260 = vmatpush.bf16.msra.mxu0 0
      %1261 = vmatpush.bf16.msra.mxu0 0
      %1262 = vmatpush.bf16.msra.mxu0 0
      %1263 = vmatpush.bf16.msra.mxu0 %v1250
      %1264 = vmatpush.bf16.msra.mxu0 %v1249
      %1265 = vmatmul.bf16.gmra.mxu0 %v1255
      %v1266 = vpop.f32.mrf.mxu0
      %v1267 = vadd.f32 %v1239, %v1266
      %v1268 = vpop.f32.mrf.mxu0
      %1269 = vdwg.mxu0
      %v1270 = vpack.c.bf16 %v1267, %v1267
      %v1272 = vunpack.c.l.b16 %v1270
      %v1273 = vpack.c.b16 %v1272, %v1272
      %1274 = vrot.lane.b32.xlu0 %v1273, 96
      %v1275 = vpop.permute.xlu0 %1274
      %vm1276 = vcmask 64512
      %v1278 = vsel %vm1276, %v1270, 0
      %v1281 = vsel %vm1276, %v1275, 0
      %1283 = vmatpush.bf16.xpose.msra.mxu0 0
      %1284 = vmatpush.bf16.xpose.msra.mxu0 0
      %1285 = vmatpush.bf16.xpose.msra.mxu0 0
      %1286 = vmatpush.bf16.xpose.msra.mxu0 0
      %1287 = vmatpush.bf16.xpose.msra.mxu0 0
      %1288 = vmatpush.bf16.xpose.msra.mxu0 0
      %1289 = vmatpush.bf16.xpose.msra.mxu0 0
      %1290 = vmatpush.bf16.xpose.msra.mxu0 %v1281
      %1291 = vmatmul.bf16.gmra.mxu0 %v1278
      %v1292 = vpop.f32.mrf.mxu0
      %v1293 = vadd.f32 0.0, %v1292
      %v1294 = vpop.f32.mrf.mxu0
      %1295 = vdwg.mxu0
      %v1296 = vsel %vm1276, %v1293, -inf
      %1297 = vmax.xlane.f32.xlu0 %v1296
      %v1298 = vpop.xlane.xlu0 %1297
      %v1299 = vsub.f32 %v1293, %v1298
      %v1300 = vmul.f32 %v1299, 1.442695
      %v1301 = vpow.pop %v1300
      %v1302 = vsel %vm1276, %v1301, 0.0
      %1303 = vadd.xlane.f32.xlu0 %v1302
      %v1304 = vpop.xlane.xlu0 %1303
      %v1305 = vrcp.pop %v1304
      %v1306 = vmul.f32 %v1301, %v1305
      %v1307 = vpack.c.bf16 %v1306, %v1306
      %1308 = vrot.lane.b32.xlu0 %v1273, 64
      %v1309 = vpop.permute.xlu0 %1308
      %v1311 = vsel %vm1276, %v1307, 0
      %vm1313 = vcmask 1043456
      %v1315 = vsel %vm1313, %v1309, 0
      %1317 = vmatpush.bf16.msra.mxu0 0
      %1318 = vmatpush.bf16.msra.mxu0 0
      %1319 = vmatpush.bf16.msra.mxu0 0
      %1320 = vmatpush.bf16.msra.mxu0 0
      %1321 = vmatpush.bf16.msra.mxu0 0
      %1322 = vmatpush.bf16.msra.mxu0 0
      %1323 = vmatpush.bf16.msra.mxu0 0
      %1324 = vmatpush.bf16.msra.mxu0 %v1315
      %1325 = vmatmul.bf16.gmra.mxu0 %v1311
      %v1326 = vpop.f32.mrf.mxu0
      %v1327 = vadd.f32 0.0, %v1326
      %v1328 = vpop.f32.mrf.mxu0
      %1329 = vdwg.mxu0
      %v1330 = vpack.c.bf16 %v1327, %v1327
      %vm1331 = vcmask 60416
      %1332 = vst.msk [vmem:[#allocation3] sm:$0xf] %vm1331, %v1330
      %1333 = vrot.lane.b32.xlu0 %v1273, 120
      %v1334 = vpop.permute.xlu0 %1333
      %1335 = vrot.lane.b32.xlu0 %v1273, 88
      %v1336 = vpop.permute.xlu0 %1335
      %v1338 = vsel %vm1276, %v1334, 0
      %v1341 = vsel %vm1276, %v1336, 0
      %1343 = vmatpush.bf16.xpose.msra.mxu0 0
      %1344 = vmatpush.bf16.xpose.msra.mxu0 0
      %1345 = vmatpush.bf16.xpose.msra.mxu0 0
      %1346 = vmatpush.bf16.xpose.msra.mxu0 0
      %1347 = vmatpush.bf16.xpose.msra.mxu0 0
      %1348 = vmatpush.bf16.xpose.msra.mxu0 0
      %1349 = vmatpush.bf16.xpose.msra.mxu0 0
      %1350 = vmatpush.bf16.xpose.msra.mxu0 %v1341
      %1351 = vmatmul.bf16.gmra.mxu0 %v1338
      %v1352 = vpop.f32.mrf.mxu0
      %v1353 = vadd.f32 0.0, %v1352
      %v1354 = vpop.f32.mrf.mxu0
      %1355 = vdwg.mxu0
      %v1356 = vsel %vm1276, %v1353, -inf
      %1357 = vmax.xlane.f32.xlu0 %v1356
      %v1358 = vpop.xlane.xlu0 %1357
      %v1359 = vsub.f32 %v1353, %v1358
      %v1360 = vmul.f32 %v1359, 1.442695
      %v1361 = vpow.pop %v1360
      %v1362 = vsel %vm1276, %v1361, 0.0
      %1363 = vadd.xlane.f32.xlu0 %v1362
      %v1364 = vpop.xlane.xlu0 %1363
      %v1365 = vrcp.pop %v1364
      %v1366 = vmul.f32 %v1361, %v1365
      %v1367 = vpack.c.bf16 %v1366, %v1366
      %1368 = vrot.lane.b32.xlu0 %v1273, 56
      %v1369 = vpop.permute.xlu0 %1368
      %v1371 = vsel %vm1276, %v1367, 0
      %v1374 = vsel %vm1313, %v1369, 0
      %1376 = vmatpush.bf16.msra.mxu0 0
      %1377 = vmatpush.bf16.msra.mxu0 0
      %1378 = vmatpush.bf16.msra.mxu0 0
      %1379 = vmatpush.bf16.msra.mxu0 0
      %1380 = vmatpush.bf16.msra.mxu0 0
      %1381 = vmatpush.bf16.msra.mxu0 0
      %1382 = vmatpush.bf16.msra.mxu0 0
      %1383 = vmatpush.bf16.msra.mxu0 %v1374
      %1384 = vmatmul.bf16.gmra.mxu0 %v1371
      %v1385 = vpop.f32.mrf.mxu0
      %v1386 = vadd.f32 0.0, %v1385
      %v1387 = vpop.f32.mrf.mxu0
      %1388 = vdwg.mxu0
      %v1389 = vpack.c.bf16 %v1386, %v1386
      %1391 = vrot.lane.b32.xlu0 %v1389, 8
      %v1392 = vpop.permute.xlu0 %1391
      %vm1394 = vcmask 126016
      %1395 = vst.msk [vmem:[#allocation3] sm:$0xf] %vm1394, %v1392
      %1396 = vrot.lane.b32.xlu0 %v1273, 112
      %v1397 = vpop.permute.xlu0 %1396
      %1398 = vrot.lane.b32.xlu0 %v1273, 80
      %v1399 = vpop.permute.xlu0 %1398
      %v1401 = vsel %vm1276, %v1397, 0
      %v1404 = vsel %vm1276, %v1399, 0
      %1406 = vmatpush.bf16.xpose.msra.mxu0 0
      %1407 = vmatpush.bf16.xpose.msra.mxu0 0
      %1408 = vmatpush.bf16.xpose.msra.mxu0 0
      %1409 = vmatpush.bf16.xpose.msra.mxu0 0
      %1410 = vmatpush.bf16.xpose.msra.mxu0 0
      %1411 = vmatpush.bf16.xpose.msra.mxu0 0
      %1412 = vmatpush.bf16.xpose.msra.mxu0 0
      %1413 = vmatpush.bf16.xpose.msra.mxu0 %v1404
      %1414 = vmatmul.bf16.gmra.mxu0 %v1401
      %v1415 = vpop.f32.mrf.mxu0
      %v1416 = vadd.f32 0.0, %v1415
      %v1417 = vpop.f32.mrf.mxu0
      %1418 = vdwg.mxu0
      %v1419 = vsel %vm1276, %v1416, -inf
      %1420 = vmax.xlane.f32.xlu0 %v1419
      %v1421 = vpop.xlane.xlu0 %1420
      %v1422 = vsub.f32 %v1416, %v1421
      %v1423 = vmul.f32 %v1422, 1.442695
      %v1424 = vpow.pop %v1423
      %v1425 = vsel %vm1276, %v1424, 0.0
      %1426 = vadd.xlane.f32.xlu0 %v1425
      %v1427 = vpop.xlane.xlu0 %1426
      %v1428 = vrcp.pop %v1427
      %v1429 = vmul.f32 %v1424, %v1428
      %v1430 = vpack.c.bf16 %v1429, %v1429
      %1431 = vrot.lane.b32.xlu0 %v1273, 48
      %v1432 = vpop.permute.xlu0 %1431
      %v1434 = vsel %vm1276, %v1430, 0
      %v1437 = vsel %vm1313, %v1432, 0
      %1439 = vmatpush.bf16.msra.mxu0 0
      %1440 = vmatpush.bf16.msra.mxu0 0
      %1441 = vmatpush.bf16.msra.mxu0 0
      %1442 = vmatpush.bf16.msra.mxu0 0
      %1443 = vmatpush.bf16.msra.mxu0 0
      %1444 = vmatpush.bf16.msra.mxu0 0
      %1445 = vmatpush.bf16.msra.mxu0 0
      %1446 = vmatpush.bf16.msra.mxu0 %v1437
      %1447 = vmatmul.bf16.gmra.mxu0 %v1434
      %v1448 = vpop.f32.mrf.mxu0
      %v1449 = vadd.f32 0.0, %v1448
      %v1450 = vpop.f32.mrf.mxu0
      %1451 = vdwg.mxu0
      %v1452 = vpack.c.bf16 %v1449, %v1449
      %1454 = vrot.lane.b32.xlu0 %v1452, 16
      %v1455 = vpop.permute.xlu0 %1454
      %vm1457 = vcmask 191616
      %1458 = vst.msk [vmem:[#allocation3] sm:$0xf] %vm1457, %v1455
      %1459 = vrot.lane.b32.xlu0 %v1273, 104
      %v1460 = vpop.permute.xlu0 %1459
      %1461 = vrot.lane.b32.xlu0 %v1273, 72
      %v1462 = vpop.permute.xlu0 %1461
      %v1464 = vsel %vm1276, %v1460, 0
      %v1467 = vsel %vm1276, %v1462, 0
      %1469 = vmatpush.bf16.xpose.msra.mxu0 0
      %1470 = vmatpush.bf16.xpose.msra.mxu0 0
      %1471 = vmatpush.bf16.xpose.msra.mxu0 0
      %1472 = vmatpush.bf16.xpose.msra.mxu0 0
      %1473 = vmatpush.bf16.xpose.msra.mxu0 0
      %1474 = vmatpush.bf16.xpose.msra.mxu0 0
      %1475 = vmatpush.bf16.xpose.msra.mxu0 0
      %1476 = vmatpush.bf16.xpose.msra.mxu0 %v1467
      %1477 = vmatmul.bf16.gmra.mxu0 %v1464
      %v1478 = vpop.f32.mrf.mxu0
      %v1479 = vadd.f32 0.0, %v1478
      %v1480 = vpop.f32.mrf.mxu0
      %1481 = vdwg.mxu0
      %v1482 = vsel %vm1276, %v1479, -inf
      %1483 = vmax.xlane.f32.xlu0 %v1482
      %v1484 = vpop.xlane.xlu0 %1483
      %v1485 = vsub.f32 %v1479, %v1484
      %v1486 = vmul.f32 %v1485, 1.442695
      %v1487 = vpow.pop %v1486
      %v1488 = vsel %vm1276, %v1487, 0.0
      %1489 = vadd.xlane.f32.xlu0 %v1488
      %v1490 = vpop.xlane.xlu0 %1489
      %v1491 = vrcp.pop %v1490
      %v1492 = vmul.f32 %v1487, %v1491
      %v1493 = vpack.c.bf16 %v1492, %v1492
      %1494 = vrot.lane.b32.xlu0 %v1273, 40
      %v1495 = vpop.permute.xlu0 %1494
      %v1497 = vsel %vm1276, %v1493, 0
      %v1500 = vsel %vm1313, %v1495, 0
      %1502 = vmatpush.bf16.msra.mxu0 0
      %1503 = vmatpush.bf16.msra.mxu0 0
      %1504 = vmatpush.bf16.msra.mxu0 0
      %1505 = vmatpush.bf16.msra.mxu0 0
      %1506 = vmatpush.bf16.msra.mxu0 0
      %1507 = vmatpush.bf16.msra.mxu0 0
      %1508 = vmatpush.bf16.msra.mxu0 0
      %1509 = vmatpush.bf16.msra.mxu0 %v1500
      %1510 = vmatmul.bf16.gmra.mxu0 %v1497
      %v1511 = vpop.f32.mrf.mxu0
      %v1512 = vadd.f32 0.0, %v1511
      %v1513 = vpop.f32.mrf.mxu0
      %1514 = vdwg.mxu0
      %v1515 = vpack.c.bf16 %v1512, %v1512
      %1517 = vrot.lane.b32.xlu0 %v1515, 24
      %v1518 = vpop.permute.xlu0 %1517
      %vm1520 = vcmask 257216
      %1521 = vst.msk [vmem:[#allocation3] sm:$0xf] %vm1520, %v1518
      %v1522 = vld [vmem:[#allocation3] sm:$0xf]
      %v1523 = vld [vmem:[%s1148] sm:$0xf]
      %v1524 = vld [vmem:[%s1148 + $0x4] sm:$0xf]
      %v1525 = vld [vmem:[%s1148 + $0x8] sm:$0xf]
      %v1526 = vld [vmem:[%s1148 + $0xc] sm:$0xf]
      %v1527 = vld [vmem:[%s1151] sm:$0x1]
      %v1529 = vperm.slane %v1527, 0
      %v1535 = vunpack.c.l.b16 %v1523
      %v1536 = vunpack.c.l.b16 %v1524
      %v1537 = vunpack.c.l.b16 %v1525
      %v1538 = vunpack.c.l.b16 %v1526
      %v1539 = vpack.c.b16 %v1536, %v1535
      %v1540 = vpack.c.b16 %v1538, %v1537
      %v1544 = vsel %vm1253, %v1522, 0
      %1546 = vmatpush.bf16.msra.mxu0 0
      %1547 = vmatpush.bf16.msra.mxu0 0
      %1548 = vmatpush.bf16.msra.mxu0 0
      %1549 = vmatpush.bf16.msra.mxu0 0
      %1550 = vmatpush.bf16.msra.mxu0 0
      %1551 = vmatpush.bf16.msra.mxu0 0
      %1552 = vmatpush.bf16.msra.mxu0 %v1540
      %1553 = vmatpush.bf16.msra.mxu0 %v1539
      %1554 = vmatmul.bf16.gmra.mxu0 %v1544
      %v1555 = vpop.f32.mrf.mxu0
      %v1556 = vadd.f32 %v1529, %v1555
      %v1557 = vpop.f32.mrf.mxu0
      %1558 = vdwg.mxu0
      %v1559 = vld [vmem:[%s1202] sm:$0x1]
      %v1560 = vld [vmem:[%s1205] sm:$0x1]
      %v1561 = vadd.f32 %v1231, %v1556
      %v1562 = vsel %vm1253, %v1561, 0.0
      %1563 = vadd.xlane.f32.xlu0 %v1562
      %v1564 = vpop.xlane.xlu0 %1563
      %v1565 = vrcp.pop 32.0
      %v1566 = vmul.f32 32.0, %v1565
      %v1567 = vsub.f32 1.0, %v1566
      %v1568 = vmul.f32 %v1565, %v1567
      %v1569 = vadd.f32 %v1565, %v1568
      %vm1570 = vweird.f32 %v1565
      %v1571 = vsel %vm1570, %v1565, %v1569
      %v1572 = vmul.f32 %v1564, %v1571
      %v1573 = vsub.f32 %v1561, %v1572
      %v1574 = vmul.f32 %v1573, %v1573
      %v1575 = vsel %vm1253, %v1574, 0.0
      %1576 = vadd.xlane.f32.xlu0 %v1575
      %v1577 = vpop.xlane.xlu0 %1576
      %v1578 = vmul.f32 %v1577, %v1571
      %v1579 = vadd.f32 %v1578, 1e-05
      %v1580 = vrsqrt.pop %v1579
      %v1581 = vmul.f32 %v1580, %v1579
      %v1582 = vmul.f32 %v1581, %v1580
      %v1583 = vmul.f32 0.5, %v1582
      %v1584 = vsub.f32 1.5, %v1583
      %v1585 = vmul.f32 %v1580, %v1584
      %vm1586 = vweird.f32 %v1579
      %vm1587 = vweird.f32 %v1580
      %vm1588 = vmor %vm1586, %vm1587
      %v1589 = vsel %vm1588, %v1580, %v1585
      %v1590 = vmul.f32 %v1573, %v1589
      %v1592 = vperm.slane %v1559, 0
      %v1594 = vmul.f32 %v1590, %v1592
      %v1596 = vperm.slane %v1560, 0
      %v1598 = vadd.f32 %v1594, %v1596
      %v1599 = vld [vmem:[%s1130] sm:$0xf]
      %v1600 = vld [vmem:[%s1130 + $0x4] sm:$0xf]
      %v1601 = vld [vmem:[%s1135] sm:$0xf]
      %v1602 = vld [vmem:[%s1135 + $0x4] sm:$0xf]
      %v1603 = vpack.c.bf16 %v1598, %v1598
      %v1604 = vld [vmem:[%s1156] sm:$0xf]
      %v1605 = vld [vmem:[%s1156 + $0x4] sm:$0xf]
      %v1606 = vld [vmem:[%s1156 + $0x8] sm:$0xf]
      %v1607 = vld [vmem:[%s1156 + $0xc] sm:$0xf]
      %v1608 = vld [vmem:[%s1159] sm:$0x1]
      %v1610 = vperm.slane %v1608, 0
      %v1616 = vunpack.c.l.b16 %v1604
      %v1617 = vunpack.c.l.b16 %v1605
      %v1618 = vunpack.c.l.b16 %v1606
      %v1619 = vunpack.c.l.b16 %v1607
      %v1620 = vpack.c.b16 %v1617, %v1616
      %v1621 = vpack.c.b16 %v1619, %v1618
      %v1625 = vsel %vm1253, %v1603, 0
      %1627 = vmatpush.bf16.msra.mxu0 0
      %1628 = vmatpush.bf16.msra.mxu0 0
      %1629 = vmatpush.bf16.msra.mxu0 0
      %1630 = vmatpush.bf16.msra.mxu0 0
      %1631 = vmatpush.bf16.msra.mxu0 0
      %1632 = vmatpush.bf16.msra.mxu0 0
      %1633 = vmatpush.bf16.msra.mxu0 %v1621
      %1634 = vmatpush.bf16.msra.mxu0 %v1620
      %1635 = vmatmul.bf16.gmra.mxu0 %v1625
      %v1636 = vpop.f32.mrf.mxu0
      %v1637 = vadd.f32 %v1610, %v1636
      %v1638 = vpop.f32.mrf.mxu0
      %1639 = vdwg.mxu0
      %v1640 = vld [vmem:[%s1164] sm:$0xf]
      %v1641 = vld [vmem:[%s1164 + $0x4] sm:$0xf]
      %v1642 = vld [vmem:[%s1164 + $0x8] sm:$0xf]
      %v1643 = vld [vmem:[%s1164 + $0xc] sm:$0xf]
      %v1644 = vld [vmem:[%s1167] sm:$0x1]
      %v1646 = vperm.slane %v1644, 0
      %v1650 = vunpack.c.l.b16 %v1599
      %v1651 = vunpack.c.l.b16 %v1600
      %v1652 = vpack.c.b16 %v1651, %v1650
      %v1657 = vunpack.c.l.b16 %v1640
      %v1658 = vunpack.c.l.b16 %v1641
      %v1659 = vunpack.c.l.b16 %v1642
      %v1660 = vunpack.c.l.b16 %v1643
      %v1661 = vpack.c.b16 %v1658, %v1657
      %v1662 = vpack.c.b16 %v1660, %v1659
      %v1666 = vsel %vm1253, %v1652, 0
      %1668 = vmatpush.bf16.msra.mxu0 0
      %1669 = vmatpush.bf16.msra.mxu0 0
      %1670 = vmatpush.bf16.msra.mxu0 0
      %1671 = vmatpush.bf16.msra.mxu0 0
      %1672 = vmatpush.bf16.msra.mxu0 0
      %1673 = vmatpush.bf16.msra.mxu0 0
      %1674 = vmatpush.bf16.msra.mxu0 %v1662
      %1675 = vmatpush.bf16.msra.mxu0 %v1661
      %1676 = vmatmul.bf16.gmra.mxu0 %v1666
      %v1677 = vpop.f32.mrf.mxu0
      %v1678 = vadd.f32 %v1646, %v1677
      %v1679 = vpop.f32.mrf.mxu0
      %v1680 = vadd.f32 %v1646, %v1679
      %1681 = vdwg.mxu0
      %v1682 = vld [vmem:[%s1172] sm:$0xf]
      %v1683 = vld [vmem:[%s1172 + $0x4] sm:$0xf]
      %v1684 = vld [vmem:[%s1172 + $0x8] sm:$0xf]
      %v1685 = vld [vmem:[%s1172 + $0xc] sm:$0xf]
      %v1686 = vld [vmem:[%s1175] sm:$0x1]
      %v1688 = vperm.slane %v1686, 0
      %v1692 = vunpack.c.l.b16 %v1601
      %v1693 = vunpack.c.l.b16 %v1602
      %v1694 = vpack.c.b16 %v1693, %v1692
      %v1699 = vunpack.c.l.b16 %v1682
      %v1700 = vunpack.c.l.b16 %v1683
      %v1701 = vunpack.c.l.b16 %v1684
      %v1702 = vunpack.c.l.b16 %v1685
      %v1703 = vpack.c.b16 %v1700, %v1699
      %v1704 = vpack.c.b16 %v1702, %v1701
      %v1708 = vsel %vm1253, %v1694, 0
      %1710 = vmatpush.bf16.msra.mxu0 0
      %1711 = vmatpush.bf16.msra.mxu0 0
      %1712 = vmatpush.bf16.msra.mxu0 0
      %1713 = vmatpush.bf16.msra.mxu0 0
      %1714 = vmatpush.bf16.msra.mxu0 0
      %1715 = vmatpush.bf16.msra.mxu0 0
      %1716 = vmatpush.bf16.msra.mxu0 %v1704
      %1717 = vmatpush.bf16.msra.mxu0 %v1703
      %1718 = vmatmul.bf16.gmra.mxu0 %v1708
      %v1719 = vpop.f32.mrf.mxu0
      %v1720 = vadd.f32 %v1688, %v1719
      %v1721 = vpop.f32.mrf.mxu0
      %v1722 = vadd.f32 %v1688, %v1721
      %1723 = vdwg.mxu0
      %v1724 = vpack.c.bf16 %v1637, %v1637
      %v1725 = vpack.c.bf16 %v1678, %v1678
      %v1726 = vpack.c.bf16 %v1680, %v1680
      %v1727 = vpack.c.bf16 %v1720, %v1720
      %v1728 = vpack.c.bf16 %v1722, %v1722
      %v1731 = vunpack.c.l.b16 %v1725
      %v1732 = vunpack.c.l.b16 %v1726
      %v1733 = vpack.c.b16 %v1732, %v1731
      %v1735 = vsel %vm1276, %v1724, 0
      %v1738 = vsel %vm1276, %v1733, 0
      %1740 = vmatpush.bf16.xpose.msra.mxu0 0
      %1741 = vmatpush.bf16.xpose.msra.mxu0 0
      %1742 = vmatpush.bf16.xpose.msra.mxu0 0
      %1743 = vmatpush.bf16.xpose.msra.mxu0 0
      %1744 = vmatpush.bf16.xpose.msra.mxu0 0
      %1745 = vmatpush.bf16.xpose.msra.mxu0 0
      %1746 = vmatpush.bf16.xpose.msra.mxu0 0
      %1747 = vmatpush.bf16.xpose.msra.mxu0 %v1738
      %1748 = vmatmul.bf16.gmra.mxu0 %v1735
      %v1749 = vpop.f32.mrf.mxu0
      %v1750 = vadd.f32 0.0, %v1749
      %v1751 = vpop.f32.mrf.mxu0
      %1752 = vdwg.mxu0
      %vm1753 = vcmask 130048
      %v1754 = vsel %vm1753, %v1750, -inf
      %1755 = vmax.xlane.f32.xlu0 %v1754
      %v1756 = vpop.xlane.xlu0 %1755
      %v1757 = vsub.f32 %v1750, %v1756
      %v1758 = vmul.f32 %v1757, 1.442695
      %v1759 = vpow.pop %v1758
      %v1760 = vsel %vm1753, %v1759, 0.0
      %1761 = vadd.xlane.f32.xlu0 %v1760
      %v1762 = vpop.xlane.xlu0 %1761
      %v1763 = vrcp.pop %v1762
      %v1764 = vmul.f32 %v1759, %v1763
      %v1765 = vpack.c.bf16 %v1764, %v1764
      %v1768 = vunpack.c.l.b16 %v1727
      %v1769 = vunpack.c.l.b16 %v1728
      %v1770 = vpack.c.b16 %v1769, %v1768
      %v1773 = vsel %vm1753, %v1765, 0
      %1775 = vmatpush.bf16.msra.mxu0 0
      %1776 = vmatpush.bf16.msra.mxu0 0
      %1777 = vmatpush.bf16.msra.mxu0 0
      %1778 = vmatpush.bf16.msra.mxu0 0
      %1779 = vmatpush.bf16.msra.mxu0 0
      %1780 = vmatpush.bf16.msra.mxu0 0
      %1781 = vmatpush.bf16.msra.mxu0 0
      %1782 = vmatpush.bf16.msra.mxu0 %v1770
      %1783 = vmatmul.bf16.gmra.mxu0 %v1773
      %v1784 = vpop.f32.mrf.mxu0
      %v1785 = vadd.f32 0.0, %v1784
      %v1786 = vpop.f32.mrf.mxu0
      %1787 = vdwg.mxu0
      %v1788 = vpack.c.bf16 %v1785, %v1785
      %1789 = vst.msk [vmem:[#allocation3] sm:$0xf] %vm1331, %v1788
      %v1791 = vunpack.c.l.b16 %v1724
      %v1792 = vpack.c.b16 %v1791, %v1791
      %1793 = vrot.lane.b32.xlu0 %v1792, 120
      %v1794 = vpop.permute.xlu0 %1793
      %1795 = vrot.lane.b32.xlu0 %v1733, 120
      %v1796 = vpop.permute.xlu0 %1795
      %v1798 = vsel %vm1276, %v1794, 0
      %v1801 = vsel %vm1276, %v1796, 0
      %1803 = vmatpush.bf16.xpose.msra.mxu0 0
      %1804 = vmatpush.bf16.xpose.msra.mxu0 0
      %1805 = vmatpush.bf16.xpose.msra.mxu0 0
      %1806 = vmatpush.bf16.xpose.msra.mxu0 0
      %1807 = vmatpush.bf16.xpose.msra.mxu0 0
      %1808 = vmatpush.bf16.xpose.msra.mxu0 0
      %1809 = vmatpush.bf16.xpose.msra.mxu0 0
      %1810 = vmatpush.bf16.xpose.msra.mxu0 %v1801
      %1811 = vmatmul.bf16.gmra.mxu0 %v1798
      %v1812 = vpop.f32.mrf.mxu0
      %v1813 = vadd.f32 0.0, %v1812
      %v1814 = vpop.f32.mrf.mxu0
      %1815 = vdwg.mxu0
      %v1816 = vsel %vm1753, %v1813, -inf
      %1817 = vmax.xlane.f32.xlu0 %v1816
      %v1818 = vpop.xlane.xlu0 %1817
      %v1819 = vsub.f32 %v1813, %v1818
      %v1820 = vmul.f32 %v1819, 1.442695
      %v1821 = vpow.pop %v1820
      %v1822 = vsel %vm1753, %v1821, 0.0
      %1823 = vadd.xlane.f32.xlu0 %v1822
      %v1824 = vpop.xlane.xlu0 %1823
      %v1825 = vrcp.pop %v1824
      %v1826 = vmul.f32 %v1821, %v1825
      %v1827 = vpack.c.bf16 %v1826, %v1826
      %1828 = vrot.lane.b32.xlu0 %v1770, 120
      %v1829 = vpop.permute.xlu0 %1828
      %v1832 = vsel %vm1753, %v1827, 0
      %1834 = vmatpush.bf16.msra.mxu0 0
      %1835 = vmatpush.bf16.msra.mxu0 0
      %1836 = vmatpush.bf16.msra.mxu0 0
      %1837 = vmatpush.bf16.msra.mxu0 0
      %1838 = vmatpush.bf16.msra.mxu0 0
      %1839 = vmatpush.bf16.msra.mxu0 0
      %1840 = vmatpush.bf16.msra.mxu0 0
      %1841 = vmatpush.bf16.msra.mxu0 %v1829
      %1842 = vmatmul.bf16.gmra.mxu0 %v1832
      %v1843 = vpop.f32.mrf.mxu0
      %v1844 = vadd.f32 0.0, %v1843
      %v1845 = vpop.f32.mrf.mxu0
      %1846 = vdwg.mxu0
      %v1847 = vpack.c.bf16 %v1844, %v1844
      %1849 = vrot.lane.b32.xlu0 %v1847, 8
      %v1850 = vpop.permute.xlu0 %1849
      %1852 = vst.msk [vmem:[#allocation3] sm:$0xf] %vm1394, %v1850
      %1853 = vrot.lane.b32.xlu0 %v1792, 112
      %v1854 = vpop.permute.xlu0 %1853
      %1855 = vrot.lane.b32.xlu0 %v1733, 112
      %v1856 = vpop.permute.xlu0 %1855
      %v1858 = vsel %vm1276, %v1854, 0
      %v1861 = vsel %vm1276, %v1856, 0
      %1863 = vmatpush.bf16.xpose.msra.mxu0 0
      %1864 = vmatpush.bf16.xpose.msra.mxu0 0
      %1865 = vmatpush.bf16.xpose.msra.mxu0 0
      %1866 = vmatpush.bf16.xpose.msra.mxu0 0
      %1867 = vmatpush.bf16.xpose.msra.mxu0 0
      %1868 = vmatpush.bf16.xpose.msra.mxu0 0
      %1869 = vmatpush.bf16.xpose.msra.mxu0 0
      %1870 = vmatpush.bf16.xpose.msra.mxu0 %v1861
      %1871 = vmatmul.bf16.gmra.mxu0 %v1858
      %v1872 = vpop.f32.mrf.mxu0
      %v1873 = vadd.f32 0.0, %v1872
      %v1874 = vpop.f32.mrf.mxu0
      %1875 = vdwg.mxu0
      %v1876 = vsel %vm1753, %v1873, -inf
      %1877 = vmax.xlane.f32.xlu0 %v1876
      %v1878 = vpop.xlane.xlu0 %1877
      %v1879 = vsub.f32 %v1873, %v1878
      %v1880 = vmul.f32 %v1879, 1.442695
      %v1881 = vpow.pop %v1880
      %v1882 = vsel %vm1753, %v1881, 0.0
      %1883 = vadd.xlane.f32.xlu0 %v1882
      %v1884 = vpop.xlane.xlu0 %1883
      %v1885 = vrcp.pop %v1884
      %v1886 = vmul.f32 %v1881, %v1885
      %v1887 = vpack.c.bf16 %v1886, %v1886
      %1888 = vrot.lane.b32.xlu0 %v1770, 112
      %v1889 = vpop.permute.xlu0 %1888
      %v1892 = vsel %vm1753, %v1887, 0
      %1894 = vmatpush.bf16.msra.mxu0 0
      %1895 = vmatpush.bf16.msra.mxu0 0
      %1896 = vmatpush.bf16.msra.mxu0 0
      %1897 = vmatpush.bf16.msra.mxu0 0
      %1898 = vmatpush.bf16.msra.mxu0 0
      %1899 = vmatpush.bf16.msra.mxu0 0
      %1900 = vmatpush.bf16.msra.mxu0 0
      %1901 = vmatpush.bf16.msra.mxu0 %v1889
      %1902 = vmatmul.bf16.gmra.mxu0 %v1892
      %v1903 = vpop.f32.mrf.mxu0
      %v1904 = vadd.f32 0.0, %v1903
      %v1905 = vpop.f32.mrf.mxu0
      %1906 = vdwg.mxu0
      %v1907 = vpack.c.bf16 %v1904, %v1904
      %1909 = vrot.lane.b32.xlu0 %v1907, 16
      %v1910 = vpop.permute.xlu0 %1909
      %1912 = vst.msk [vmem:[#allocation3] sm:$0xf] %vm1457, %v1910
      %1913 = vrot.lane.b32.xlu0 %v1792, 104
      %v1914 = vpop.permute.xlu0 %1913
      %1915 = vrot.lane.b32.xlu0 %v1733, 104
      %v1916 = vpop.permute.xlu0 %1915
      %v1918 = vsel %vm1276, %v1914, 0
      %v1921 = vsel %vm1276, %v1916, 0
      %1923 = vmatpush.bf16.xpose.msra.mxu0 0
      %1924 = vmatpush.bf16.xpose.msra.mxu0 0
      %1925 = vmatpush.bf16.xpose.msra.mxu0 0
      %1926 = vmatpush.bf16.xpose.msra.mxu0 0
      %1927 = vmatpush.bf16.xpose.msra.mxu0 0
      %1928 = vmatpush.bf16.xpose.msra.mxu0 0
      %1929 = vmatpush.bf16.xpose.msra.mxu0 0
      %1930 = vmatpush.bf16.xpose.msra.mxu0 %v1921
      %1931 = vmatmul.bf16.gmra.mxu0 %v1918
      %v1932 = vpop.f32.mrf.mxu0
      %v1933 = vadd.f32 0.0, %v1932
      %v1934 = vpop.f32.mrf.mxu0
      %1935 = vdwg.mxu0
      %v1936 = vsel %vm1753, %v1933, -inf
      %1937 = vmax.xlane.f32.xlu0 %v1936
      %v1938 = vpop.xlane.xlu0 %1937
      %v1939 = vsub.f32 %v1933, %v1938
      %v1940 = vmul.f32 %v1939, 1.442695
      %v1941 = vpow.pop %v1940
      %v1942 = vsel %vm1753, %v1941, 0.0
      %1943 = vadd.xlane.f32.xlu0 %v1942
      %v1944 = vpop.xlane.xlu0 %1943
      %v1945 = vrcp.pop %v1944
      %v1946 = vmul.f32 %v1941, %v1945
      %v1947 = vpack.c.bf16 %v1946, %v1946
      %1948 = vrot.lane.b32.xlu0 %v1770, 104
      %v1949 = vpop.permute.xlu0 %1948
      %v1952 = vsel %vm1753, %v1947, 0
      %1954 = vmatpush.bf16.msra.mxu0 0
      %1955 = vmatpush.bf16.msra.mxu0 0
      %1956 = vmatpush.bf16.msra.mxu0 0
      %1957 = vmatpush.bf16.msra.mxu0 0
      %1958 = vmatpush.bf16.msra.mxu0 0
      %1959 = vmatpush.bf16.msra.mxu0 0
      %1960 = vmatpush.bf16.msra.mxu0 0
      %1961 = vmatpush.bf16.msra.mxu0 %v1949
      %1962 = vmatmul.bf16.gmra.mxu0 %v1952
      %v1963 = vpop.f32.mrf.mxu0
      %v1964 = vadd.f32 0.0, %v1963
      %v1965 = vpop.f32.mrf.mxu0
      %1966 = vdwg.mxu0
      %v1967 = vpack.c.bf16 %v1964, %v1964
      %1969 = vrot.lane.b32.xlu0 %v1967, 24
      %v1970 = vpop.permute.xlu0 %1969
      %1972 = vst.msk [vmem:[#allocation3] sm:$0xf] %vm1520, %v1970
      %v1973 = vld [vmem:[#allocation3] sm:$0xf]
      %v1974 = vld [vmem:[%s1180] sm:$0xf]
      %v1975 = vld [vmem:[%s1180 + $0x4] sm:$0xf]
      %v1976 = vld [vmem:[%s1180 + $0x8] sm:$0xf]
      %v1977 = vld [vmem:[%s1180 + $0xc] sm:$0xf]
      %v1978 = vld [vmem:[%s1183] sm:$0x1]
      %v1980 = vperm.slane %v1978, 0
      %v1986 = vunpack.c.l.b16 %v1974
      %v1987 = vunpack.c.l.b16 %v1975
      %v1988 = vunpack.c.l.b16 %v1976
      %v1989 = vunpack.c.l.b16 %v1977
      %v1990 = vpack.c.b16 %v1987, %v1986
      %v1991 = vpack.c.b16 %v1989, %v1988
      %v1995 = vsel %vm1253, %v1973, 0
      %1997 = vmatpush.bf16.msra.mxu0 0
      %1998 = vmatpush.bf16.msra.mxu0 0
      %1999 = vmatpush.bf16.msra.mxu0 0
      %2000 = vmatpush.bf16.msra.mxu0 0
      %2001 = vmatpush.bf16.msra.mxu0 0
      %2002 = vmatpush.bf16.msra.mxu0 0
      %2003 = vmatpush.bf16.msra.mxu0 %v1991
      %2004 = vmatpush.bf16.msra.mxu0 %v1990
      %2005 = vmatmul.bf16.gmra.mxu0 %v1995
      %v2006 = vpop.f32.mrf.mxu0
      %v2007 = vadd.f32 %v1980, %v2006
      %v2008 = vpop.f32.mrf.mxu0
      %2009 = vdwg.mxu0
      %v2010 = vld [vmem:[%s1208] sm:$0x1]
      %v2011 = vld [vmem:[%s1211] sm:$0x1]
      %v2012 = vadd.f32 %v1598, %v2007
      %v2013 = vsel %vm1253, %v2012, 0.0
      %2014 = vadd.xlane.f32.xlu0 %v2013
      %v2015 = vpop.xlane.xlu0 %2014
      %v2016 = vmul.f32 %v2015, %v1571
      %v2017 = vsub.f32 %v2012, %v2016
      %v2018 = vmul.f32 %v2017, %v2017
      %v2019 = vsel %vm1253, %v2018, 0.0
      %2020 = vadd.xlane.f32.xlu0 %v2019
      %v2021 = vpop.xlane.xlu0 %2020
      %v2022 = vmul.f32 %v2021, %v1571
      %v2023 = vadd.f32 %v2022, 1e-05
      %v2024 = vrsqrt.pop %v2023
      %v2025 = vmul.f32 %v2024, %v2023
      %v2026 = vmul.f32 %v2025, %v2024
      %v2027 = vmul.f32 0.5, %v2026
      %v2028 = vsub.f32 1.5, %v2027
      %v2029 = vmul.f32 %v2024, %v2028
      %vm2030 = vweird.f32 %v2023
      %vm2031 = vweird.f32 %v2024
      %vm2032 = vmor %vm2030, %vm2031
      %v2033 = vsel %vm2032, %v2024, %v2029
      %v2034 = vmul.f32 %v2017, %v2033
      %v2036 = vperm.slane %v2010, 0
      %v2038 = vmul.f32 %v2034, %v2036
      %v2040 = vperm.slane %v2011, 0
      %v2042 = vadd.f32 %v2038, %v2040
      %v2043 = vpack.c.bf16 %v2042, %v2042
      %v2044 = vld [vmem:[%s1188] sm:$0xf]
      %v2045 = vld [vmem:[%s1188 + $0x4] sm:$0xf]
      %v2046 = vld [vmem:[%s1188 + $0x8] sm:$0xf]
      %v2047 = vld [vmem:[%s1188 + $0xc] sm:$0xf]
      %v2048 = vld [vmem:[%s1191] sm:$0x1]
      %v2050 = vperm.slane %v2048, 0
      %v2056 = vunpack.c.l.b16 %v2044
      %v2057 = vunpack.c.l.b16 %v2045
      %v2058 = vunpack.c.l.b16 %v2046
      %v2059 = vunpack.c.l.b16 %v2047
      %v2060 = vpack.c.b16 %v2057, %v2056
      %v2061 = vpack.c.b16 %v2059, %v2058
      %v2065 = vsel %vm1253, %v2043, 0
      %2067 = vmatpush.bf16.msra.mxu0 0
      %2068 = vmatpush.bf16.msra.mxu0 0
      %2069 = vmatpush.bf16.msra.mxu0 0
      %2070 = vmatpush.bf16.msra.mxu0 0
      %2071 = vmatpush.bf16.msra.mxu0 0
      %2072 = vmatpush.bf16.msra.mxu0 0
      %2073 = vmatpush.bf16.msra.mxu0 %v2061
      %2074 = vmatpush.bf16.msra.mxu0 %v2060
      %2075 = vmatmul.bf16.gmra.mxu0 %v2065
      %v2076 = vpop.f32.mrf.mxu0
      %v2077 = vadd.f32 %v2050, %v2076
      %v2078 = vpop.f32.mrf.mxu0
      %2079 = vdwg.mxu0
      %v2080 = vmax.f32 %v2077, 0.0
      %v2081 = vpack.c.bf16 %v2080, %v2080
      %v2082 = vld [vmem:[%s1196] sm:$0xf]
      %v2083 = vld [vmem:[%s1196 + $0x4] sm:$0xf]
      %v2084 = vld [vmem:[%s1196 + $0x8] sm:$0xf]
      %v2085 = vld [vmem:[%s1196 + $0xc] sm:$0xf]
      %v2086 = vld [vmem:[%s1196 + $0x10] sm:$0xf]
      %v2087 = vld [vmem:[%s1196 + $0x14] sm:$0xf]
      %v2088 = vld [vmem:[%s1196 + $0x18] sm:$0xf]
      %v2089 = vld [vmem:[%s1196 + $0x1c] sm:$0xf]
      %v2090 = vld [vmem:[%s1199] sm:$0x1]
      %v2092 = vperm.slane %v2090, 0
      %v2102 = vunpack.c.l.b16 %v2082
      %v2103 = vunpack.c.l.b16 %v2083
      %v2104 = vunpack.c.l.b16 %v2084
      %v2105 = vunpack.c.l.b16 %v2085
      %v2106 = vunpack.c.l.b16 %v2086
      %v2107 = vunpack.c.l.b16 %v2087
      %v2108 = vunpack.c.l.b16 %v2088
      %v2109 = vunpack.c.l.b16 %v2089
      %v2110 = vpack.c.b16 %v2103, %v2102
      %v2111 = vpack.c.b16 %v2105, %v2104
      %v2112 = vpack.c.b16 %v2107, %v2106
      %v2113 = vpack.c.b16 %v2109, %v2108
      %vm2118 = vcmask 523264
      %v2120 = vsel %vm2118, %v2081, 0
      %2122 = vmatpush.bf16.msra.mxu0 0
      %2123 = vmatpush.bf16.msra.mxu0 0
      %2124 = vmatpush.bf16.msra.mxu0 0
      %2125 = vmatpush.bf16.msra.mxu0 0
      %2126 = vmatpush.bf16.msra.mxu0 %v2113
      %2127 = vmatpush.bf16.msra.mxu0 %v2112
      %2128 = vmatpush.bf16.msra.mxu0 %v2111
      %2129 = vmatpush.bf16.msra.mxu0 %v2110
      %2130 = vmatmul.bf16.gmra.mxu0 %v2120
      %v2131 = vpop.f32.mrf.mxu0
      %v2132 = vadd.f32 %v2092, %v2131
      %v2133 = vpop.f32.mrf.mxu0
      %2134 = vdwg.mxu0
      %v2135 = vld [vmem:[%s1214] sm:$0x1]
      %v2136 = vld [vmem:[%s1217] sm:$0x1]
      %v2137 = vadd.f32 %v2042, %v2132
      %v2138 = vsel %vm1253, %v2137, 0.0
      %2139 = vadd.xlane.f32.xlu0 %v2138
      %v2140 = vpop.xlane.xlu0 %2139
      %v2141 = vmul.f32 %v2140, %v1571
      %v2142 = vsub.f32 %v2137, %v2141
      %v2143 = vmul.f32 %v2142, %v2142
      %v2144 = vsel %vm1253, %v2143, 0.0
      %2145 = vadd.xlane.f32.xlu0 %v2144
      %v2146 = vpop.xlane.xlu0 %2145
      %v2147 = vmul.f32 %v2146, %v1571
      %v2148 = vadd.f32 %v2147, 1e-05
      %v2149 = vrsqrt.pop %v2148
      %v2150 = vmul.f32 %v2149, %v2148
      %v2151 = vmul.f32 %v2150, %v2149
      %v2152 = vmul.f32 0.5, %v2151
      %v2153 = vsub.f32 1.5, %v2152
      %v2154 = vmul.f32 %v2149, %v2153
      %vm2155 = vweird.f32 %v2148
      %vm2156 = vweird.f32 %v2149
      %vm2157 = vmor %vm2155, %vm2156
      %v2158 = vsel %vm2157, %v2149, %v2154
      %v2159 = vmul.f32 %v2142, %v2158
      %v2161 = vperm.slane %v2135, 0
      %v2163 = vmul.f32 %v2159, %v2161
      %v2165 = vperm.slane %v2136, 0
      %v2167 = vadd.f32 %v2163, %v2165
      %2168 = vst.msk [vmem:[#allocation2] sm:$0xff] %vm1253, %v2167
      %v2169 = vpack.c.bf16 %v2167, %v2167
      %vm2170 = vcmask 257024
      %2171 = vst.msk [vmem:[%s1221] sm:$0xf] %vm2170, %v2169
      %p2172 = scmp.eq.s32.totalorder %s43, 1
      // Predicated region
      $region133: #{transformer_decoder.1} parent=127 // pred_check
        %p2173 = pneg %p2172
      $region134: #{transformer_decoder.1} parent=127 // pred_check_branch
        %2175 = sbr.rel (%p2173) target = $region136
      $region135: #{transformer_decoder.1} parent=127 // pred_region
        %v2176 = vld [vmem:[%s25] sm:$0x1]
        %v2177 = vld [vmem:[%s26] sm:$0x1]
        %v2178 = vsel %vm1253, %v2167, 0.0
        %2179 = vadd.xlane.f32.xlu0 %v2178
        %v2180 = vpop.xlane.xlu0 %2179
        %v2181 = vmul.f32 %v2180, %v1571
        %v2182 = vsub.f32 %v2167, %v2181
        %v2183 = vmul.f32 %v2182, %v2182
        %v2184 = vsel %vm1253, %v2183, 0.0
        %2185 = vadd.xlane.f32.xlu0 %v2184
        %v2186 = vpop.xlane.xlu0 %2185
        %v2187 = vmul.f32 %v2186, %v1571
        %v2188 = vadd.f32 %v2187, 1e-05
        %v2189 = vrsqrt.pop %v2188
        %v2190 = vmul.f32 %v2189, %v2188
        %v2191 = vmul.f32 %v2190, %v2189
        %v2192 = vmul.f32 0.5, %v2191
        %v2193 = vsub.f32 1.5, %v2192
        %v2194 = vmul.f32 %v2189, %v2193
        %vm2195 = vweird.f32 %v2188
        %vm2196 = vweird.f32 %v2189
        %vm2197 = vmor %vm2195, %vm2196
        %v2198 = vsel %vm2197, %v2189, %v2194
        %v2199 = vmul.f32 %v2182, %v2198
        %v2201 = vperm.slane %v2176, 0
        %v2203 = vmul.f32 %v2199, %v2201
        %v2205 = vperm.slane %v2177, 0
        %v2207 = vadd.f32 %v2203, %v2205
        %v2208 = vpack.c.bf16 %v2207, %v2207
        %2209 = vst.msk [vmem:[%s1221] sm:$0xf] %vm2170, %v2208
      $region136: #{transformer_decoder.1} parent=127 // pred_fallthru
        _
      %p2210 = scmp.lt.s32.totalorder %s42, 1
      %s2211 = scalar_select %p2210, %s42, 1
      %s2212 = smul.addr %s2211, 4
      %s2213 = scalar_lea.vmem %s27, %s2212
      // Predicated region
      $region137: #{transformer_decoder.1} parent=127 // pred_check
        %p2214 = pneg %p760
      $region138: #{transformer_decoder.1} parent=127 // pred_check_branch
        %2216 = sbr.rel (%p2214) target = $region140
      $region139: #{transformer_decoder.1} parent=127 // pred_region
        _
      $region140: #{transformer_decoder.1} parent=127 // pred_fallthru
        _
    $region128: #{transformer_decoder.1} parent=5 // pred_fallthru
      _
    %p2217 = scmp.le.s32.totalorder 2, %s33
    // Predicated region
    $region141: #{transformer_decoder.1} parent=5 // pred_check
      %p2218 = pneg %p2217
    $region142: #{transformer_decoder.1} parent=5 // pred_check_branch
      %2220 = sbr.rel (%p2218) target = $region144
    $region143: #{transformer_decoder.1} parent=5 // pred_region
      %s2221 = ssub.s32 %s33, 2
      // Predicated region
      $region145: #{transformer_decoder.1} parent=143 // pred_check
        %p2222 = pneg %p766
      $region146: #{transformer_decoder.1} parent=143 // pred_check_branch
        %2224 = sbr.rel (%p2222) target = $region148
      $region147: #{transformer_decoder.1} parent=143 // pred_region
        %p2225 = scmp.lt.s32.totalorder %s44, 1
        %s2226 = scalar_select %p2225, %s44, 1
        %s2227 = smul.addr %s2226, 4
        %s2228 = scalar_lea.vmem %s27, %s2227
      $region148: #{transformer_decoder.1} parent=143 // pred_fallthru
        _
    $region144: #{transformer_decoder.1} parent=5 // pred_fallthru
      _
  $region6: #{transformer_decoder.1} parent=0 // loop_footer
    %s37 = sadd.s32 1, %s33
  $region7: #{transformer_decoder.1} parent=0 // loop_footer_branch
    %32 = sbr.rel target = $region3
  $region8: #{transformer_decoder.1} parent=0 // loop_exit
    _

</llo_original>
